<compile_context>
chip_gen: v7x
topology: tpu7x:2x2x1
jax: 0.10.0
libtpu: 0.0.40
codegen_flags: <defaults>
</compile_context>

<pallas_src>
import math
from functools import partial

import jax
import jax.numpy as jnp
from jax.experimental import pallas as pl
from jax.experimental.pallas import tpu as pltpu


# --------------------------- fused forward kernel ----------------------------
def _perceiver_attn_kernel(
    x_ref,            # (kv_tile, D) image-feature chunk of this batch element
    lat_ref,          # (n2, D)      latent features of this batch element
    g1_ref, b1_ref,   # (1, D)       norm1 affine
    g2_ref, b2_ref,   # (1, D)       norm2 affine
    wq_ref,           # (H, D, dh)   per-head Wq^T, attention scale pre-folded
    wk_ref,           # (H, D, dh)   per-head Wk^T
    wv_ref,           # (H, D, dh)   per-head Wv^T
    wo_ref,           # (H, dh, D)   per-head Wo^T
    o_ref,            # (n2, D)      output (resident across the KV grid axis)
    q_sc,             # (H, n2, dh)  per-head q, written at kv-step 0
    m_sc,             # (H, n2, 1)   running softmax max
    l_sc,             # (H, n2, 1)   running softmax denominator
    acc_sc,           # (H, n2, dh)  running softmax numerator (f32)
    *, n1, eps, compute_dtype, need_mask, approx_recip,
):
    j = pl.program_id(1)
    heads = wq_ref.shape[0]
    dh = wq_ref.shape[2]
    kv_tile = x_ref.shape[0]
    n2 = lat_ref.shape[0]

    def layer_norm(vals, g, b):
        v32 = vals.astype(jnp.float32)
        mu = jnp.mean(v32, axis=-1, keepdims=True)
        var = jnp.mean(jnp.square(v32 - mu), axis=-1, keepdims=True)
        return (v32 - mu) * jax.lax.rsqrt(var + eps) * g.astype(jnp.float32) \
            + b.astype(jnp.float32)

    def online_update(h, k_h, v_h, valid):
        # k_h / v_h: (n, dh) in compute_dtype ; valid: (1, n) bool or None.
        s = jax.lax.dot_general(q_sc[h], k_h, (((1,), (1,)), ((), ())),
                                preferred_element_type=jnp.float32)   # (n2, n)
        if valid is not None:
            s = jnp.where(valid, s, -1e30)
        m_new = jnp.maximum(m_sc[h], jnp.max(s, axis=-1, keepdims=True))
        alpha = jnp.exp(m_sc[h] - m_new)
        p = jnp.exp(s - m_new)
        if valid is not None:
            p = jnp.where(valid, p, 0.0)
        l_sc[h] = alpha * l_sc[h] + jnp.sum(p, axis=-1, keepdims=True)
        acc_sc[h] = alpha * acc_sc[h] + jnp.dot(
            p.astype(compute_dtype), v_h, preferred_element_type=jnp.float32)
        m_sc[h] = m_new

    # ---- kv-step 0: norm latents, project q (latent rows only), and fold the
    #      latent rows in as the first online-softmax KV chunk. --------------
    @pl.when(j == 0)
    def _init():
        ltn = layer_norm(lat_ref[...], g2_ref[...], b2_ref[...]).astype(compute_dtype)
        for h in range(heads):
            q_sc[h] = jnp.dot(ltn, wq_ref[h],
                              preferred_element_type=jnp.float32).astype(compute_dtype)
            m_sc[h] = jnp.full((n2, 1), -1e30, jnp.float32)
            l_sc[h] = jnp.zeros((n2, 1), jnp.float32)
            acc_sc[h] = jnp.zeros((n2, dh), jnp.float32)
            k_h = jnp.dot(ltn, wk_ref[h],
                          preferred_element_type=jnp.float32).astype(compute_dtype)
            v_h = jnp.dot(ltn, wv_ref[h],
                          preferred_element_type=jnp.float32).astype(compute_dtype)
            online_update(h, k_h, v_h, None)

    # ---- every kv step: norm this image chunk and fold it into the state. --
    xn = layer_norm(x_ref[...], g1_ref[...], b1_ref[...]).astype(compute_dtype)
    if need_mask:
        col = jax.lax.broadcasted_iota(jnp.int32, (1, kv_tile), 1)
        valid = (j * kv_tile + col) < n1
    else:
        valid = None
    for h in range(heads):
        k_h = jnp.dot(xn, wk_ref[h],
                      preferred_element_type=jnp.float32).astype(compute_dtype)
        v_h = jnp.dot(xn, wv_ref[h],
                      preferred_element_type=jnp.float32).astype(compute_dtype)
        online_update(h, k_h, v_h, valid)

    # ---- last kv step: normalize and fold Wo per head into the (n2, D) out. -
    @pl.when(j == pl.num_programs(1) - 1)
    def _finalize():
        d_model = o_ref.shape[-1]
        out = jnp.zeros((n2, d_model), jnp.float32)
        for h in range(heads):
            inv_l = pl.reciprocal(l_sc[h], approx=approx_recip)      # (n2, 1)
            o_h = (acc_sc[h] * inv_l).astype(compute_dtype)          # (n2, dh)
            out = out + jnp.dot(o_h, wo_ref[h],
                                preferred_element_type=jnp.float32)
        o_ref[...] = out.astype(o_ref.dtype)


# --------------------------- module forward (glue) ----------------------------
def perceiver_attention(x, latents, params, *, heads, dim_head,
                        kv_tile=512, compute_dtype=jnp.bfloat16):
    """x: (b, n1, D) image features; latents: (b, n2, D) latent features."""
    b, n1, D = x.shape
    _, n2, _ = latents.shape
    inner = heads * dim_head

    # ---- KV (image-token) tiling: bounds the per-step working set. ----------
    if n1 <= kv_tile:
        kv_tile = n1                                  # single chunk, no padding
    else:
        kv_tile = max(8, (kv_tile // 8) * 8)          # sublane-aligned tiles
    n_kv = -(-n1 // kv_tile)
    n1_pad = n_kv * kv_tile
    if n1_pad != n1:
        x = jnp.pad(x, ((0, 0), (0, n1_pad - n1), (0, 0)))

    # ---- per-head weight slabs (built once, outside the kernel). ------------
    # (q*s) @ (k*s)^T == (q*s^2) @ k^T  with s = dim_head**-0.25
    scale2 = 1.0 / math.sqrt(dim_head)
    wq = (params["Wq"].T * scale2).reshape(D, heads, dim_head).transpose(1, 0, 2)
    wkv_t = params["Wkv"].T                                    # (D, 2*inner)
    wk = wkv_t[:, :inner].reshape(D, heads, dim_head).transpose(1, 0, 2)
    wv = wkv_t[:, inner:].reshape(D, heads, dim_head).transpose(1, 0, 2)
    wo = params["Wo"].T.reshape(heads, dim_head, D)
    wq = wq.astype(compute_dtype)
    wk = wk.astype(compute_dtype)
    wv = wv.astype(compute_dtype)
    wo = wo.astype(compute_dtype)

    g1 = params["g1"].reshape(1, D).astype(jnp.float32)
    b1 = params["b1"].reshape(1, D).astype(jnp.float32)
    g2 = params["g2"].reshape(1, D).astype(jnp.float32)
    b2 = params["b2"].reshape(1, D).astype(jnp.float32)

    kernel = partial(_perceiver_attn_kernel, n1=n1, eps=1e-5,
                     compute_dtype=compute_dtype,
                     need_mask=(n1_pad != n1),
                     approx_recip=(compute_dtype != jnp.float32))

    const2 = lambda i, j: (0, 0)
    const3 = lambda i, j: (0, 0, 0)

    return pl.pallas_call(
        kernel,
        out_shape=jax.ShapeDtypeStruct((b, n2, D), latents.dtype),
        grid_spec=pltpu.PrefetchScalarGridSpec(
            num_scalar_prefetch=0,
            grid=(b, n_kv),
            in_specs=[
                pl.BlockSpec((None, kv_tile, D), lambda i, j: (i, j, 0)),  # x chunk
                pl.BlockSpec((None, n2, D), lambda i, j: (i, 0, 0)),       # latents
                pl.BlockSpec((1, D), const2),                              # g1
                pl.BlockSpec((1, D), const2),                              # b1
                pl.BlockSpec((1, D), const2),                              # g2
                pl.BlockSpec((1, D), const2),                              # b2
                pl.BlockSpec((heads, D, dim_head), const3),                # Wq (scaled)
                pl.BlockSpec((heads, D, dim_head), const3),                # Wk
                pl.BlockSpec((heads, D, dim_head), const3),                # Wv
                pl.BlockSpec((heads, dim_head, D), const3),                # Wo
            ],
            out_specs=pl.BlockSpec((None, n2, D), lambda i, j: (i, 0, 0)),
            scratch_shapes=[
                pltpu.VMEM((heads, n2, dim_head), compute_dtype),   # q
                pltpu.VMEM((heads, n2, 1), jnp.float32),            # m
                pltpu.VMEM((heads, n2, 1), jnp.float32),            # l
                pltpu.VMEM((heads, n2, dim_head), jnp.float32),     # acc
            ]),
        compiler_params=pltpu.CompilerParams(
            dimension_semantics=("parallel", "arbitrary"),
            vmem_limit_bytes=64 * 1024 * 1024),
    )(x, latents, g1, b1, g2, b2, wq, wk, wv, wo)


# ------------------------------ pure-JAX reference ----------------------------
def perceiver_attention_ref(x, latents, params, *, heads, dim_head):
    def ln_ref(t, g, be):
        m = jnp.mean(t, axis=-1, keepdims=True)
        v = jnp.mean((t - m) ** 2, axis=-1, keepdims=True)
        return (t - m) * jax.lax.rsqrt(v + 1e-5) * g + be

    b, n1, D = x.shape
    _, n2, _ = latents.shape
    inner = heads * dim_head
    with jax.default_matmul_precision("highest"):
        xn = ln_ref(x, params["g1"], params["b1"])
        lnl = ln_ref(latents, params["g2"], params["b2"])
        q = lnl @ params["Wq"].T
        kv = jnp.concatenate([xn, lnl], axis=1) @ params["Wkv"].T
        k, v = kv[..., :inner], kv[..., inner:]
        qh = q.reshape(b, n2, heads, dim_head).transpose(0, 2, 1, 3)
        kh = k.reshape(b, n1 + n2, heads, dim_head).transpose(0, 2, 1, 3)
        vh = v.reshape(b, n1 + n2, heads, dim_head).transpose(0, 2, 1, 3)
        s = 1.0 / math.sqrt(math.sqrt(dim_head))
        w = (qh * s) @ jnp.swapaxes(kh * s, -2, -1)
        w = jax.nn.softmax(w.astype(jnp.float32), axis=-1)
        out = w @ vh
        out = out.transpose(0, 2, 1, 3).reshape(b, n2, inner)
        return out @ params["Wo"].T


# ----------------------------------- main ------------------------------------
if __name__ == "__main__":
    # small shapes consistent with the module
    b, n1, n2 = 2, 16, 8
    dim, dim_head, heads = 32, 16, 4
    inner = dim_head * heads

    key = jax.random.PRNGKey(0)
    k0, k1, k2, k3, k4 = jax.random.split(key, 5)

    x = jax.random.normal(k0, (b, n1, dim), dtype=jnp.float32)
    latents = jax.random.normal(k1, (b, n2, dim), dtype=jnp.float32)

    params = {
        # LayerNorm default init (ones / zeros), as in nn.LayerNorm
        "g1": jnp.ones((dim,), jnp.float32),
        "b1": jnp.zeros((dim,), jnp.float32),
        "g2": jnp.ones((dim,), jnp.float32),
        "b2": jnp.zeros((dim,), jnp.float32),
        # nn.Linear weights, shape (out_features, in_features)
        "Wq": jax.random.normal(k2, (inner, dim), jnp.float32) * 0.05,
        "Wkv": jax.random.normal(k3, (2 * inner, dim), jnp.float32) * 0.05,
        "Wo": jax.random.normal(k4, (dim, inner), jnp.float32) * 0.05,
    }

    ref = perceiver_attention_ref(x, latents, params, heads=heads, dim_head=dim_head)

    # 1) f32 compute path — tight numerical check against the f32 reference.
    out_f32 = jax.block_until_ready(
        perceiver_attention(x, latents, params, heads=heads, dim_head=dim_head,
                            compute_dtype=jnp.float32))
    assert out_f32.shape == (b, n2, dim)
    assert jnp.allclose(out_f32, ref, atol=5e-4, rtol=5e-4), "f32 kernel mismatch"

    # 2) bf16-operand MXU path (production default) — looser tolerance.
    out_bf16 = jax.block_until_ready(
        perceiver_attention(x, latents, params, heads=heads, dim_head=dim_head,
                            compute_dtype=jnp.bfloat16))
    assert jnp.allclose(out_bf16, ref, atol=3e-2, rtol=3e-2), "bf16 kernel mismatch"

    # 3) multi-chunk KV path with tail masking (n1 not a multiple of kv_tile).
    x2 = jax.random.normal(jax.random.PRNGKey(1), (b, 20, dim), dtype=jnp.float32)
    ref2 = perceiver_attention_ref(x2, latents, params, heads=heads, dim_head=dim_head)
    out2 = jax.block_until_ready(
        perceiver_attention(x2, latents, params, heads=heads, dim_head=dim_head,
                            kv_tile=8, compute_dtype=jnp.float32))
    assert jnp.allclose(out2, ref2, atol=5e-4, rtol=5e-4), "tiled-KV kernel mismatch"

    print("KERNEL_OK")
</pallas_src>

<mosaic_0001>
module attributes {stable_mosaic.version = 11 : i64} {
  func.func @_perceiver_attn_kernel(%arg0: i32, %arg1: i32, %arg2: memref<1x16x32xf32, #tpu.memory_space<vmem>>, %arg3: memref<1x8x32xf32, #tpu.memory_space<vmem>>, %arg4: memref<1x32xf32, #tpu.memory_space<vmem>>, %arg5: memref<1x32xf32, #tpu.memory_space<vmem>>, %arg6: memref<1x32xf32, #tpu.memory_space<vmem>>, %arg7: memref<1x32xf32, #tpu.memory_space<vmem>>, %arg8: memref<4x32x16xf32, #tpu.memory_space<vmem>>, %arg9: memref<4x32x16xf32, #tpu.memory_space<vmem>>, %arg10: memref<4x32x16xf32, #tpu.memory_space<vmem>>, %arg11: memref<4x16x32xf32, #tpu.memory_space<vmem>>, %arg12: memref<1x8x32xf32, #tpu.memory_space<vmem>>, %arg13: memref<4x8x16xf32, #tpu.memory_space<vmem>>, %arg14: memref<4x8x1xf32, #tpu.memory_space<vmem>>, %arg15: memref<4x8x1xf32, #tpu.memory_space<vmem>>, %arg16: memref<4x8x16xf32, #tpu.memory_space<vmem>>) attributes {dimension_semantics = [#tpu.dimension_semantics<parallel>, #tpu.dimension_semantics<arbitrary>], iteration_bounds = array<i64: 2, 1>, scalar_prefetch = 0 : i64, scratch_operands = 4 : i64, tpu.core_type = #tpu.core_type<tc>, window_params = [{transform_indices = @transform_0, window_bounds = array<i64: 1, 16, 32>}, {transform_indices = @transform_1, window_bounds = array<i64: 1, 8, 32>}, {pipeline_mode = #tpu.pipeline_mode<synchronous>, transform_indices = @transform_2, window_bounds = array<i64: 1, 32>}, {pipeline_mode = #tpu.pipeline_mode<synchronous>, transform_indices = @transform_3, window_bounds = array<i64: 1, 32>}, {pipeline_mode = #tpu.pipeline_mode<synchronous>, transform_indices = @transform_4, window_bounds = array<i64: 1, 32>}, {pipeline_mode = #tpu.pipeline_mode<synchronous>, transform_indices = @transform_5, window_bounds = array<i64: 1, 32>}, {pipeline_mode = #tpu.pipeline_mode<synchronous>, transform_indices = @transform_6, window_bounds = array<i64: 4, 32, 16>}, {pipeline_mode = #tpu.pipeline_mode<synchronous>, transform_indices = @transform_7, window_bounds = array<i64: 4, 32, 16>}, {pipeline_mode = #tpu.pipeline_mode<synchronous>, transform_indices = @transform_8, window_bounds = array<i64: 4, 32, 16>}, {pipeline_mode = #tpu.pipeline_mode<synchronous>, transform_indices = @transform_9, window_bounds = array<i64: 4, 16, 32>}, {transform_indices = @transform_10, window_bounds = array<i64: 1, 8, 32>}]} {
    %c0_i32 = arith.constant 0 : i32
    %0 = arith.cmpi eq, %arg1, %c0_i32 : i32
    %1 = arith.extui %0 : i1 to i32
    %c0_i32_0 = arith.constant 0 : i32
    %2 = arith.cmpi ne, %1, %c0_i32_0 : i32
    scf.if %2 {
      %c0_154 = arith.constant 0 : index
      %c0_155 = arith.constant 0 : index
      %c0_156 = arith.constant 0 : index
      %200 = vector.load %arg3[%c0_154, %c0_155, %c0_156] : memref<1x8x32xf32, #tpu.memory_space<vmem>>, vector<1x8x32xf32>
      %201 = vector.shape_cast %200 : vector<1x8x32xf32> to vector<8x32xf32>
      %c0_157 = arith.constant 0 : index
      %c0_158 = arith.constant 0 : index
      %202 = vector.load %arg6[%c0_157, %c0_158] : memref<1x32xf32, #tpu.memory_space<vmem>>, vector<1x32xf32>
      %c0_159 = arith.constant 0 : index
      %c0_160 = arith.constant 0 : index
      %203 = vector.load %arg7[%c0_159, %c0_160] : memref<1x32xf32, #tpu.memory_space<vmem>>, vector<1x32xf32>
      %cst_161 = arith.constant dense<0.000000e+00> : vector<8xf32>
      %204 = vector.multi_reduction <add>, %201, %cst_161 [1] : vector<8x32xf32> to vector<8xf32>
      %205 = vector.shape_cast %204 : vector<8xf32> to vector<8x1xf32>
      %cst_162 = arith.constant 3.200000e+01 : f32
      %206 = vector.broadcast %cst_162 : f32 to vector<8x1xf32>
      %207 = arith.divf %205, %206 : vector<8x1xf32>
      %208 = vector.broadcast %207 : vector<8x1xf32> to vector<8x32xf32>
      %209 = arith.subf %201, %208 : vector<8x32xf32>
      %210 = arith.mulf %209, %209 : vector<8x32xf32>
      %cst_163 = arith.constant dense<0.000000e+00> : vector<8xf32>
      %211 = vector.multi_reduction <add>, %210, %cst_163 [1] : vector<8x32xf32> to vector<8xf32>
      %212 = vector.shape_cast %211 : vector<8xf32> to vector<8x1xf32>
      %cst_164 = arith.constant 3.200000e+01 : f32
      %213 = vector.broadcast %cst_164 : f32 to vector<8x1xf32>
      %214 = arith.divf %212, %213 : vector<8x1xf32>
      %215 = vector.broadcast %207 : vector<8x1xf32> to vector<8x32xf32>
      %216 = arith.subf %201, %215 : vector<8x32xf32>
      %cst_165 = arith.constant 9.99999974E-6 : f32
      %217 = vector.broadcast %cst_165 : f32 to vector<8x1xf32>
      %218 = arith.addf %214, %217 : vector<8x1xf32>
      %219 = math.rsqrt %218 : vector<8x1xf32>
      %220 = vector.broadcast %219 : vector<8x1xf32> to vector<8x32xf32>
      %221 = arith.mulf %216, %220 : vector<8x32xf32>
      %222 = vector.broadcast %202 : vector<1x32xf32> to vector<8x32xf32>
      %223 = arith.mulf %221, %222 : vector<8x32xf32>
      %224 = vector.broadcast %203 : vector<1x32xf32> to vector<8x32xf32>
      %225 = arith.addf %223, %224 : vector<8x32xf32>
      %c0_166 = arith.constant 0 : index
      %c0_167 = arith.constant 0 : index
      %c0_168 = arith.constant 0 : index
      %226 = vector.load %arg8[%c0_166, %c0_167, %c0_168] : memref<4x32x16xf32, #tpu.memory_space<vmem>>, vector<1x32x16xf32>
      %227 = vector.shape_cast %226 : vector<1x32x16xf32> to vector<32x16xf32>
      %cst_169 = arith.constant dense<0.000000e+00> : vector<8x16xf32>
      %228 = tpu.matmul %225, %227, %cst_169 {dimension_numbers = #tpu.dot_dimension_numbers<[1], [0], [0], [1], [0, 0, 1, 1], [], []>} : vector<8x32xf32>, vector<32x16xf32>, vector<8x16xf32> -> vector<8x16xf32>
      %c0_170 = arith.constant 0 : index
      %c0_171 = arith.constant 0 : index
      %c0_172 = arith.constant 0 : index
      %229 = vector.load %arg13[%c0_170, %c0_171, %c0_172] : memref<4x8x16xf32, #tpu.memory_space<vmem>>, vector<1x8x16xf32>
      %230 = vector.shape_cast %229 : vector<1x8x16xf32> to vector<8x16xf32>
      %231 = vector.shape_cast %228 : vector<8x16xf32> to vector<1x8x16xf32>
      tpu.vector_store %arg13[%c0_170, %c0_171, %c0_172], %231 {strides = array<i32>} : memref<4x8x16xf32, #tpu.memory_space<vmem>>, vector<1x8x16xf32>,
      %cst_173 = arith.constant -1.000000e+30 : f32
      %232 = vector.broadcast %cst_173 : f32 to vector<8x1xf32>
      %c0_174 = arith.constant 0 : index
      %c0_175 = arith.constant 0 : index
      %c0_176 = arith.constant 0 : index
      %233 = vector.load %arg14[%c0_174, %c0_175, %c0_176] : memref<4x8x1xf32, #tpu.memory_space<vmem>>, vector<1x8x1xf32>
      %234 = vector.shape_cast %233 : vector<1x8x1xf32> to vector<8x1xf32>
      %235 = vector.shape_cast %232 : vector<8x1xf32> to vector<1x8x1xf32>
      tpu.vector_store %arg14[%c0_174, %c0_175, %c0_176], %235 {strides = array<i32>} : memref<4x8x1xf32, #tpu.memory_space<vmem>>, vector<1x8x1xf32>,
      %cst_177 = arith.constant 0.000000e+00 : f32
      %236 = vector.broadcast %cst_177 : f32 to vector<8x1xf32>
      %c0_178 = arith.constant 0 : index
      %c0_179 = arith.constant 0 : index
      %c0_180 = arith.constant 0 : index
      %237 = vector.load %arg15[%c0_178, %c0_179, %c0_180] : memref<4x8x1xf32, #tpu.memory_space<vmem>>, vector<1x8x1xf32>
      %238 = vector.shape_cast %237 : vector<1x8x1xf32> to vector<8x1xf32>
      %239 = vector.shape_cast %236 : vector<8x1xf32> to vector<1x8x1xf32>
      tpu.vector_store %arg15[%c0_178, %c0_179, %c0_180], %239 {strides = array<i32>} : memref<4x8x1xf32, #tpu.memory_space<vmem>>, vector<1x8x1xf32>,
      %cst_181 = arith.constant 0.000000e+00 : f32
      %240 = vector.broadcast %cst_181 : f32 to vector<8x16xf32>
      %c0_182 = arith.constant 0 : index
      %c0_183 = arith.constant 0 : index
      %c0_184 = arith.constant 0 : index
      %241 = vector.load %arg16[%c0_182, %c0_183, %c0_184] : memref<4x8x16xf32, #tpu.memory_space<vmem>>, vector<1x8x16xf32>
      %242 = vector.shape_cast %241 : vector<1x8x16xf32> to vector<8x16xf32>
      %243 = vector.shape_cast %240 : vector<8x16xf32> to vector<1x8x16xf32>
      tpu.vector_store %arg16[%c0_182, %c0_183, %c0_184], %243 {strides = array<i32>} : memref<4x8x16xf32, #tpu.memory_space<vmem>>, vector<1x8x16xf32>,
      %c0_185 = arith.constant 0 : index
      %c0_186 = arith.constant 0 : index
      %c0_187 = arith.constant 0 : index
      %244 = vector.load %arg9[%c0_185, %c0_186, %c0_187] : memref<4x32x16xf32, #tpu.memory_space<vmem>>, vector<1x32x16xf32>
      %245 = vector.shape_cast %244 : vector<1x32x16xf32> to vector<32x16xf32>
      %cst_188 = arith.constant dense<0.000000e+00> : vector<8x16xf32>
      %246 = tpu.matmul %225, %245, %cst_188 {dimension_numbers = #tpu.dot_dimension_numbers<[1], [0], [0], [1], [0, 0, 1, 1], [], []>} : vector<8x32xf32>, vector<32x16xf32>, vector<8x16xf32> -> vector<8x16xf32>
      %c0_189 = arith.constant 0 : index
      %c0_190 = arith.constant 0 : index
      %c0_191 = arith.constant 0 : index
      %247 = vector.load %arg10[%c0_189, %c0_190, %c0_191] : memref<4x32x16xf32, #tpu.memory_space<vmem>>, vector<1x32x16xf32>
      %248 = vector.shape_cast %247 : vector<1x32x16xf32> to vector<32x16xf32>
      %cst_192 = arith.constant dense<0.000000e+00> : vector<8x16xf32>
      %249 = tpu.matmul %225, %248, %cst_192 {dimension_numbers = #tpu.dot_dimension_numbers<[1], [0], [0], [1], [0, 0, 1, 1], [], []>} : vector<8x32xf32>, vector<32x16xf32>, vector<8x16xf32> -> vector<8x16xf32>
      %c0_193 = arith.constant 0 : index
      %c0_194 = arith.constant 0 : index
      %c0_195 = arith.constant 0 : index
      %250 = vector.load %arg13[%c0_193, %c0_194, %c0_195] : memref<4x8x16xf32, #tpu.memory_space<vmem>>, vector<1x8x16xf32>
      %251 = vector.shape_cast %250 : vector<1x8x16xf32> to vector<8x16xf32>
      %cst_196 = arith.constant dense<0.000000e+00> : vector<8x8xf32>
      %252 = tpu.matmul %251, %246, %cst_196 {dimension_numbers = #tpu.dot_dimension_numbers<[1], [1], [0], [0], [0, 0, 1, 0], [], []>} : vector<8x16xf32>, vector<8x16xf32>, vector<8x8xf32> -> vector<8x8xf32>
      %c0_197 = arith.constant 0 : index
      %c0_198 = arith.constant 0 : index
      %c0_199 = arith.constant 0 : index
      %253 = vector.load %arg14[%c0_197, %c0_198, %c0_199] : memref<4x8x1xf32, #tpu.memory_space<vmem>>, vector<1x8x1xf32>
      %254 = vector.shape_cast %253 : vector<1x8x1xf32> to vector<8x1xf32>
      %cst_200 = arith.constant dense<0xFF800000> : vector<8xf32>
      %255 = vector.multi_reduction <maximumf>, %252, %cst_200 [1] : vector<8x8xf32> to vector<8xf32>
      %256 = vector.shape_cast %255 : vector<8xf32> to vector<8x1xf32>
      %257 = arith.maximumf %254, %256 : vector<8x1xf32>
      %c0_201 = arith.constant 0 : index
      %c0_202 = arith.constant 0 : index
      %c0_203 = arith.constant 0 : index
      %258 = vector.load %arg14[%c0_201, %c0_202, %c0_203] : memref<4x8x1xf32, #tpu.memory_space<vmem>>, vector<1x8x1xf32>
      %259 = vector.shape_cast %258 : vector<1x8x1xf32> to vector<8x1xf32>
      %260 = arith.subf %259, %257 : vector<8x1xf32>
      %261 = math.exp %260 : vector<8x1xf32>
      %262 = vector.broadcast %257 : vector<8x1xf32> to vector<8x8xf32>
      %263 = arith.subf %252, %262 : vector<8x8xf32>
      %264 = math.exp %263 : vector<8x8xf32>
      %c0_204 = arith.constant 0 : index
      %c0_205 = arith.constant 0 : index
      %c0_206 = arith.constant 0 : index
      %265 = vector.load %arg15[%c0_204, %c0_205, %c0_206] : memref<4x8x1xf32, #tpu.memory_space<vmem>>, vector<1x8x1xf32>
      %266 = vector.shape_cast %265 : vector<1x8x1xf32> to vector<8x1xf32>
      %267 = arith.mulf %261, %266 : vector<8x1xf32>
      %cst_207 = arith.constant dense<0.000000e+00> : vector<8xf32>
      %268 = vector.multi_reduction <add>, %264, %cst_207 [1] : vector<8x8xf32> to vector<8xf32>
      %269 = vector.shape_cast %268 : vector<8xf32> to vector<8x1xf32>
      %270 = arith.addf %267, %269 : vector<8x1xf32>
      %c0_208 = arith.constant 0 : index
      %c0_209 = arith.constant 0 : index
      %c0_210 = arith.constant 0 : index
      %271 = vector.load %arg15[%c0_208, %c0_209, %c0_210] : memref<4x8x1xf32, #tpu.memory_space<vmem>>, vector<1x8x1xf32>
      %272 = vector.shape_cast %271 : vector<1x8x1xf32> to vector<8x1xf32>
      %273 = vector.shape_cast %270 : vector<8x1xf32> to vector<1x8x1xf32>
      tpu.vector_store %arg15[%c0_208, %c0_209, %c0_210], %273 {strides = array<i32>} : memref<4x8x1xf32, #tpu.memory_space<vmem>>, vector<1x8x1xf32>,
      %c0_211 = arith.constant 0 : index
      %c0_212 = arith.constant 0 : index
      %c0_213 = arith.constant 0 : index
      %274 = vector.load %arg16[%c0_211, %c0_212, %c0_213] : memref<4x8x16xf32, #tpu.memory_space<vmem>>, vector<1x8x16xf32>
      %275 = vector.shape_cast %274 : vector<1x8x16xf32> to vector<8x16xf32>
      %276 = vector.broadcast %261 : vector<8x1xf32> to vector<8x16xf32>
      %277 = arith.mulf %276, %275 : vector<8x16xf32>
      %cst_214 = arith.constant dense<0.000000e+00> : vector<8x16xf32>
      %278 = tpu.matmul %264, %249, %cst_214 {dimension_numbers = #tpu.dot_dimension_numbers<[1], [0], [0], [1], [0, 0, 1, 1], [], []>} : vector<8x8xf32>, vector<8x16xf32>, vector<8x16xf32> -> vector<8x16xf32>
      %279 = arith.addf %277, %278 : vector<8x16xf32>
      %c0_215 = arith.constant 0 : index
      %c0_216 = arith.constant 0 : index
      %c0_217 = arith.constant 0 : index
      %280 = vector.load %arg16[%c0_215, %c0_216, %c0_217] : memref<4x8x16xf32, #tpu.memory_space<vmem>>, vector<1x8x16xf32>
      %281 = vector.shape_cast %280 : vector<1x8x16xf32> to vector<8x16xf32>
      %282 = vector.shape_cast %279 : vector<8x16xf32> to vector<1x8x16xf32>
      tpu.vector_store %arg16[%c0_215, %c0_216, %c0_217], %282 {strides = array<i32>} : memref<4x8x16xf32, #tpu.memory_space<vmem>>, vector<1x8x16xf32>,
      %c0_218 = arith.constant 0 : index
      %c0_219 = arith.constant 0 : index
      %c0_220 = arith.constant 0 : index
      %283 = vector.load %arg14[%c0_218, %c0_219, %c0_220] : memref<4x8x1xf32, #tpu.memory_space<vmem>>, vector<1x8x1xf32>
      %284 = vector.shape_cast %283 : vector<1x8x1xf32> to vector<8x1xf32>
      %285 = vector.shape_cast %257 : vector<8x1xf32> to vector<1x8x1xf32>
      tpu.vector_store %arg14[%c0_218, %c0_219, %c0_220], %285 {strides = array<i32>} : memref<4x8x1xf32, #tpu.memory_space<vmem>>, vector<1x8x1xf32>,
      %c1_221 = arith.constant 1 : index
      %c0_222 = arith.constant 0 : index
      %c0_223 = arith.constant 0 : index
      %286 = vector.load %arg8[%c1_221, %c0_222, %c0_223] : memref<4x32x16xf32, #tpu.memory_space<vmem>>, vector<1x32x16xf32>
      %287 = vector.shape_cast %286 : vector<1x32x16xf32> to vector<32x16xf32>
      %cst_224 = arith.constant dense<0.000000e+00> : vector<8x16xf32>
      %288 = tpu.matmul %225, %287, %cst_224 {dimension_numbers = #tpu.dot_dimension_numbers<[1], [0], [0], [1], [0, 0, 1, 1], [], []>} : vector<8x32xf32>, vector<32x16xf32>, vector<8x16xf32> -> vector<8x16xf32>
      %c1_225 = arith.constant 1 : index
      %c0_226 = arith.constant 0 : index
      %c0_227 = arith.constant 0 : index
      %289 = vector.load %arg13[%c1_225, %c0_226, %c0_227] : memref<4x8x16xf32, #tpu.memory_space<vmem>>, vector<1x8x16xf32>
      %290 = vector.shape_cast %289 : vector<1x8x16xf32> to vector<8x16xf32>
      %291 = vector.shape_cast %288 : vector<8x16xf32> to vector<1x8x16xf32>
      tpu.vector_store %arg13[%c1_225, %c0_226, %c0_227], %291 {strides = array<i32>} : memref<4x8x16xf32, #tpu.memory_space<vmem>>, vector<1x8x16xf32>,
      %cst_228 = arith.constant -1.000000e+30 : f32
      %292 = vector.broadcast %cst_228 : f32 to vector<8x1xf32>
      %c1_229 = arith.constant 1 : index
      %c0_230 = arith.constant 0 : index
      %c0_231 = arith.constant 0 : index
      %293 = vector.load %arg14[%c1_229, %c0_230, %c0_231] : memref<4x8x1xf32, #tpu.memory_space<vmem>>, vector<1x8x1xf32>
      %294 = vector.shape_cast %293 : vector<1x8x1xf32> to vector<8x1xf32>
      %295 = vector.shape_cast %292 : vector<8x1xf32> to vector<1x8x1xf32>
      tpu.vector_store %arg14[%c1_229, %c0_230, %c0_231], %295 {strides = array<i32>} : memref<4x8x1xf32, #tpu.memory_space<vmem>>, vector<1x8x1xf32>,
      %cst_232 = arith.constant 0.000000e+00 : f32
      %296 = vector.broadcast %cst_232 : f32 to vector<8x1xf32>
      %c1_233 = arith.constant 1 : index
      %c0_234 = arith.constant 0 : index
      %c0_235 = arith.constant 0 : index
      %297 = vector.load %arg15[%c1_233, %c0_234, %c0_235] : memref<4x8x1xf32, #tpu.memory_space<vmem>>, vector<1x8x1xf32>
      %298 = vector.shape_cast %297 : vector<1x8x1xf32> to vector<8x1xf32>
      %299 = vector.shape_cast %296 : vector<8x1xf32> to vector<1x8x1xf32>
      tpu.vector_store %arg15[%c1_233, %c0_234, %c0_235], %299 {strides = array<i32>} : memref<4x8x1xf32, #tpu.memory_space<vmem>>, vector<1x8x1xf32>,
      %cst_236 = arith.constant 0.000000e+00 : f32
      %300 = vector.broadcast %cst_236 : f32 to vector<8x16xf32>
      %c1_237 = arith.constant 1 : index
      %c0_238 = arith.constant 0 : index
      %c0_239 = arith.constant 0 : index
      %301 = vector.load %arg16[%c1_237, %c0_238, %c0_239] : memref<4x8x16xf32, #tpu.memory_space<vmem>>, vector<1x8x16xf32>
      %302 = vector.shape_cast %301 : vector<1x8x16xf32> to vector<8x16xf32>
      %303 = vector.shape_cast %300 : vector<8x16xf32> to vector<1x8x16xf32>
      tpu.vector_store %arg16[%c1_237, %c0_238, %c0_239], %303 {strides = array<i32>} : memref<4x8x16xf32, #tpu.memory_space<vmem>>, vector<1x8x16xf32>,
      %c1_240 = arith.constant 1 : index
      %c0_241 = arith.constant 0 : index
      %c0_242 = arith.constant 0 : index
      %304 = vector.load %arg9[%c1_240, %c0_241, %c0_242] : memref<4x32x16xf32, #tpu.memory_space<vmem>>, vector<1x32x16xf32>
      %305 = vector.shape_cast %304 : vector<1x32x16xf32> to vector<32x16xf32>
      %cst_243 = arith.constant dense<0.000000e+00> : vector<8x16xf32>
      %306 = tpu.matmul %225, %305, %cst_243 {dimension_numbers = #tpu.dot_dimension_numbers<[1], [0], [0], [1], [0, 0, 1, 1], [], []>} : vector<8x32xf32>, vector<32x16xf32>, vector<8x16xf32> -> vector<8x16xf32>
      %c1_244 = arith.constant 1 : index
      %c0_245 = arith.constant 0 : index
      %c0_246 = arith.constant 0 : index
      %307 = vector.load %arg10[%c1_244, %c0_245, %c0_246] : memref<4x32x16xf32, #tpu.memory_space<vmem>>, vector<1x32x16xf32>
      %308 = vector.shape_cast %307 : vector<1x32x16xf32> to vector<32x16xf32>
      %cst_247 = arith.constant dense<0.000000e+00> : vector<8x16xf32>
      %309 = tpu.matmul %225, %308, %cst_247 {dimension_numbers = #tpu.dot_dimension_numbers<[1], [0], [0], [1], [0, 0, 1, 1], [], []>} : vector<8x32xf32>, vector<32x16xf32>, vector<8x16xf32> -> vector<8x16xf32>
      %c1_248 = arith.constant 1 : index
      %c0_249 = arith.constant 0 : index
      %c0_250 = arith.constant 0 : index
      %310 = vector.load %arg13[%c1_248, %c0_249, %c0_250] : memref<4x8x16xf32, #tpu.memory_space<vmem>>, vector<1x8x16xf32>
      %311 = vector.shape_cast %310 : vector<1x8x16xf32> to vector<8x16xf32>
      %cst_251 = arith.constant dense<0.000000e+00> : vector<8x8xf32>
      %312 = tpu.matmul %311, %306, %cst_251 {dimension_numbers = #tpu.dot_dimension_numbers<[1], [1], [0], [0], [0, 0, 1, 0], [], []>} : vector<8x16xf32>, vector<8x16xf32>, vector<8x8xf32> -> vector<8x8xf32>
      %c1_252 = arith.constant 1 : index
      %c0_253 = arith.constant 0 : index
      %c0_254 = arith.constant 0 : index
      %313 = vector.load %arg14[%c1_252, %c0_253, %c0_254] : memref<4x8x1xf32, #tpu.memory_space<vmem>>, vector<1x8x1xf32>
      %314 = vector.shape_cast %313 : vector<1x8x1xf32> to vector<8x1xf32>
      %cst_255 = arith.constant dense<0xFF800000> : vector<8xf32>
      %315 = vector.multi_reduction <maximumf>, %312, %cst_255 [1] : vector<8x8xf32> to vector<8xf32>
      %316 = vector.shape_cast %315 : vector<8xf32> to vector<8x1xf32>
      %317 = arith.maximumf %314, %316 : vector<8x1xf32>
      %c1_256 = arith.constant 1 : index
      %c0_257 = arith.constant 0 : index
      %c0_258 = arith.constant 0 : index
      %318 = vector.load %arg14[%c1_256, %c0_257, %c0_258] : memref<4x8x1xf32, #tpu.memory_space<vmem>>, vector<1x8x1xf32>
      %319 = vector.shape_cast %318 : vector<1x8x1xf32> to vector<8x1xf32>
      %320 = arith.subf %319, %317 : vector<8x1xf32>
      %321 = math.exp %320 : vector<8x1xf32>
      %322 = vector.broadcast %317 : vector<8x1xf32> to vector<8x8xf32>
      %323 = arith.subf %312, %322 : vector<8x8xf32>
      %324 = math.exp %323 : vector<8x8xf32>
      %c1_259 = arith.constant 1 : index
      %c0_260 = arith.constant 0 : index
      %c0_261 = arith.constant 0 : index
      %325 = vector.load %arg15[%c1_259, %c0_260, %c0_261] : memref<4x8x1xf32, #tpu.memory_space<vmem>>, vector<1x8x1xf32>
      %326 = vector.shape_cast %325 : vector<1x8x1xf32> to vector<8x1xf32>
      %327 = arith.mulf %321, %326 : vector<8x1xf32>
      %cst_262 = arith.constant dense<0.000000e+00> : vector<8xf32>
      %328 = vector.multi_reduction <add>, %324, %cst_262 [1] : vector<8x8xf32> to vector<8xf32>
      %329 = vector.shape_cast %328 : vector<8xf32> to vector<8x1xf32>
      %330 = arith.addf %327, %329 : vector<8x1xf32>
      %c1_263 = arith.constant 1 : index
      %c0_264 = arith.constant 0 : index
      %c0_265 = arith.constant 0 : index
      %331 = vector.load %arg15[%c1_263, %c0_264, %c0_265] : memref<4x8x1xf32, #tpu.memory_space<vmem>>, vector<1x8x1xf32>
      %332 = vector.shape_cast %331 : vector<1x8x1xf32> to vector<8x1xf32>
      %333 = vector.shape_cast %330 : vector<8x1xf32> to vector<1x8x1xf32>
      tpu.vector_store %arg15[%c1_263, %c0_264, %c0_265], %333 {strides = array<i32>} : memref<4x8x1xf32, #tpu.memory_space<vmem>>, vector<1x8x1xf32>,
      %c1_266 = arith.constant 1 : index
      %c0_267 = arith.constant 0 : index
      %c0_268 = arith.constant 0 : index
      %334 = vector.load %arg16[%c1_266, %c0_267, %c0_268] : memref<4x8x16xf32, #tpu.memory_space<vmem>>, vector<1x8x16xf32>
      %335 = vector.shape_cast %334 : vector<1x8x16xf32> to vector<8x16xf32>
      %336 = vector.broadcast %321 : vector<8x1xf32> to vector<8x16xf32>
      %337 = arith.mulf %336, %335 : vector<8x16xf32>
      %cst_269 = arith.constant dense<0.000000e+00> : vector<8x16xf32>
      %338 = tpu.matmul %324, %309, %cst_269 {dimension_numbers = #tpu.dot_dimension_numbers<[1], [0], [0], [1], [0, 0, 1, 1], [], []>} : vector<8x8xf32>, vector<8x16xf32>, vector<8x16xf32> -> vector<8x16xf32>
      %339 = arith.addf %337, %338 : vector<8x16xf32>
      %c1_270 = arith.constant 1 : index
      %c0_271 = arith.constant 0 : index
      %c0_272 = arith.constant 0 : index
      %340 = vector.load %arg16[%c1_270, %c0_271, %c0_272] : memref<4x8x16xf32, #tpu.memory_space<vmem>>, vector<1x8x16xf32>
      %341 = vector.shape_cast %340 : vector<1x8x16xf32> to vector<8x16xf32>
      %342 = vector.shape_cast %339 : vector<8x16xf32> to vector<1x8x16xf32>
      tpu.vector_store %arg16[%c1_270, %c0_271, %c0_272], %342 {strides = array<i32>} : memref<4x8x16xf32, #tpu.memory_space<vmem>>, vector<1x8x16xf32>,
      %c1_273 = arith.constant 1 : index
      %c0_274 = arith.constant 0 : index
      %c0_275 = arith.constant 0 : index
      %343 = vector.load %arg14[%c1_273, %c0_274, %c0_275] : memref<4x8x1xf32, #tpu.memory_space<vmem>>, vector<1x8x1xf32>
      %344 = vector.shape_cast %343 : vector<1x8x1xf32> to vector<8x1xf32>
      %345 = vector.shape_cast %317 : vector<8x1xf32> to vector<1x8x1xf32>
      tpu.vector_store %arg14[%c1_273, %c0_274, %c0_275], %345 {strides = array<i32>} : memref<4x8x1xf32, #tpu.memory_space<vmem>>, vector<1x8x1xf32>,
      %c2_276 = arith.constant 2 : index
      %c0_277 = arith.constant 0 : index
      %c0_278 = arith.constant 0 : index
      %346 = vector.load %arg8[%c2_276, %c0_277, %c0_278] : memref<4x32x16xf32, #tpu.memory_space<vmem>>, vector<1x32x16xf32>
      %347 = vector.shape_cast %346 : vector<1x32x16xf32> to vector<32x16xf32>
      %cst_279 = arith.constant dense<0.000000e+00> : vector<8x16xf32>
      %348 = tpu.matmul %225, %347, %cst_279 {dimension_numbers = #tpu.dot_dimension_numbers<[1], [0], [0], [1], [0, 0, 1, 1], [], []>} : vector<8x32xf32>, vector<32x16xf32>, vector<8x16xf32> -> vector<8x16xf32>
      %c2_280 = arith.constant 2 : index
      %c0_281 = arith.constant 0 : index
      %c0_282 = arith.constant 0 : index
      %349 = vector.load %arg13[%c2_280, %c0_281, %c0_282] : memref<4x8x16xf32, #tpu.memory_space<vmem>>, vector<1x8x16xf32>
      %350 = vector.shape_cast %349 : vector<1x8x16xf32> to vector<8x16xf32>
      %351 = vector.shape_cast %348 : vector<8x16xf32> to vector<1x8x16xf32>
      tpu.vector_store %arg13[%c2_280, %c0_281, %c0_282], %351 {strides = array<i32>} : memref<4x8x16xf32, #tpu.memory_space<vmem>>, vector<1x8x16xf32>,
      %cst_283 = arith.constant -1.000000e+30 : f32
      %352 = vector.broadcast %cst_283 : f32 to vector<8x1xf32>
      %c2_284 = arith.constant 2 : index
      %c0_285 = arith.constant 0 : index
      %c0_286 = arith.constant 0 : index
      %353 = vector.load %arg14[%c2_284, %c0_285, %c0_286] : memref<4x8x1xf32, #tpu.memory_space<vmem>>, vector<1x8x1xf32>
      %354 = vector.shape_cast %353 : vector<1x8x1xf32> to vector<8x1xf32>
      %355 = vector.shape_cast %352 : vector<8x1xf32> to vector<1x8x1xf32>
      tpu.vector_store %arg14[%c2_284, %c0_285, %c0_286], %355 {strides = array<i32>} : memref<4x8x1xf32, #tpu.memory_space<vmem>>, vector<1x8x1xf32>,
      %cst_287 = arith.constant 0.000000e+00 : f32
      %356 = vector.broadcast %cst_287 : f32 to vector<8x1xf32>
      %c2_288 = arith.constant 2 : index
      %c0_289 = arith.constant 0 : index
      %c0_290 = arith.constant 0 : index
      %357 = vector.load %arg15[%c2_288, %c0_289, %c0_290] : memref<4x8x1xf32, #tpu.memory_space<vmem>>, vector<1x8x1xf32>
      %358 = vector.shape_cast %357 : vector<1x8x1xf32> to vector<8x1xf32>
      %359 = vector.shape_cast %356 : vector<8x1xf32> to vector<1x8x1xf32>
      tpu.vector_store %arg15[%c2_288, %c0_289, %c0_290], %359 {strides = array<i32>} : memref<4x8x1xf32, #tpu.memory_space<vmem>>, vector<1x8x1xf32>,
      %cst_291 = arith.constant 0.000000e+00 : f32
      %360 = vector.broadcast %cst_291 : f32 to vector<8x16xf32>
      %c2_292 = arith.constant 2 : index
      %c0_293 = arith.constant 0 : index
      %c0_294 = arith.constant 0 : index
      %361 = vector.load %arg16[%c2_292, %c0_293, %c0_294] : memref<4x8x16xf32, #tpu.memory_space<vmem>>, vector<1x8x16xf32>
      %362 = vector.shape_cast %361 : vector<1x8x16xf32> to vector<8x16xf32>
      %363 = vector.shape_cast %360 : vector<8x16xf32> to vector<1x8x16xf32>
      tpu.vector_store %arg16[%c2_292, %c0_293, %c0_294], %363 {strides = array<i32>} : memref<4x8x16xf32, #tpu.memory_space<vmem>>, vector<1x8x16xf32>,
      %c2_295 = arith.constant 2 : index
      %c0_296 = arith.constant 0 : index
      %c0_297 = arith.constant 0 : index
      %364 = vector.load %arg9[%c2_295, %c0_296, %c0_297] : memref<4x32x16xf32, #tpu.memory_space<vmem>>, vector<1x32x16xf32>
      %365 = vector.shape_cast %364 : vector<1x32x16xf32> to vector<32x16xf32>
      %cst_298 = arith.constant dense<0.000000e+00> : vector<8x16xf32>
      %366 = tpu.matmul %225, %365, %cst_298 {dimension_numbers = #tpu.dot_dimension_numbers<[1], [0], [0], [1], [0, 0, 1, 1], [], []>} : vector<8x32xf32>, vector<32x16xf32>, vector<8x16xf32> -> vector<8x16xf32>
      %c2_299 = arith.constant 2 : index
      %c0_300 = arith.constant 0 : index
      %c0_301 = arith.constant 0 : index
      %367 = vector.load %arg10[%c2_299, %c0_300, %c0_301] : memref<4x32x16xf32, #tpu.memory_space<vmem>>, vector<1x32x16xf32>
      %368 = vector.shape_cast %367 : vector<1x32x16xf32> to vector<32x16xf32>
      %cst_302 = arith.constant dense<0.000000e+00> : vector<8x16xf32>
      %369 = tpu.matmul %225, %368, %cst_302 {dimension_numbers = #tpu.dot_dimension_numbers<[1], [0], [0], [1], [0, 0, 1, 1], [], []>} : vector<8x32xf32>, vector<32x16xf32>, vector<8x16xf32> -> vector<8x16xf32>
      %c2_303 = arith.constant 2 : index
      %c0_304 = arith.constant 0 : index
      %c0_305 = arith.constant 0 : index
      %370 = vector.load %arg13[%c2_303, %c0_304, %c0_305] : memref<4x8x16xf32, #tpu.memory_space<vmem>>, vector<1x8x16xf32>
      %371 = vector.shape_cast %370 : vector<1x8x16xf32> to vector<8x16xf32>
      %cst_306 = arith.constant dense<0.000000e+00> : vector<8x8xf32>
      %372 = tpu.matmul %371, %366, %cst_306 {dimension_numbers = #tpu.dot_dimension_numbers<[1], [1], [0], [0], [0, 0, 1, 0], [], []>} : vector<8x16xf32>, vector<8x16xf32>, vector<8x8xf32> -> vector<8x8xf32>
      %c2_307 = arith.constant 2 : index
      %c0_308 = arith.constant 0 : index
      %c0_309 = arith.constant 0 : index
      %373 = vector.load %arg14[%c2_307, %c0_308, %c0_309] : memref<4x8x1xf32, #tpu.memory_space<vmem>>, vector<1x8x1xf32>
      %374 = vector.shape_cast %373 : vector<1x8x1xf32> to vector<8x1xf32>
      %cst_310 = arith.constant dense<0xFF800000> : vector<8xf32>
      %375 = vector.multi_reduction <maximumf>, %372, %cst_310 [1] : vector<8x8xf32> to vector<8xf32>
      %376 = vector.shape_cast %375 : vector<8xf32> to vector<8x1xf32>
      %377 = arith.maximumf %374, %376 : vector<8x1xf32>
      %c2_311 = arith.constant 2 : index
      %c0_312 = arith.constant 0 : index
      %c0_313 = arith.constant 0 : index
      %378 = vector.load %arg14[%c2_311, %c0_312, %c0_313] : memref<4x8x1xf32, #tpu.memory_space<vmem>>, vector<1x8x1xf32>
      %379 = vector.shape_cast %378 : vector<1x8x1xf32> to vector<8x1xf32>
      %380 = arith.subf %379, %377 : vector<8x1xf32>
      %381 = math.exp %380 : vector<8x1xf32>
      %382 = vector.broadcast %377 : vector<8x1xf32> to vector<8x8xf32>
      %383 = arith.subf %372, %382 : vector<8x8xf32>
      %384 = math.exp %383 : vector<8x8xf32>
      %c2_314 = arith.constant 2 : index
      %c0_315 = arith.constant 0 : index
      %c0_316 = arith.constant 0 : index
      %385 = vector.load %arg15[%c2_314, %c0_315, %c0_316] : memref<4x8x1xf32, #tpu.memory_space<vmem>>, vector<1x8x1xf32>
      %386 = vector.shape_cast %385 : vector<1x8x1xf32> to vector<8x1xf32>
      %387 = arith.mulf %381, %386 : vector<8x1xf32>
      %cst_317 = arith.constant dense<0.000000e+00> : vector<8xf32>
      %388 = vector.multi_reduction <add>, %384, %cst_317 [1] : vector<8x8xf32> to vector<8xf32>
      %389 = vector.shape_cast %388 : vector<8xf32> to vector<8x1xf32>
      %390 = arith.addf %387, %389 : vector<8x1xf32>
      %c2_318 = arith.constant 2 : index
      %c0_319 = arith.constant 0 : index
      %c0_320 = arith.constant 0 : index
      %391 = vector.load %arg15[%c2_318, %c0_319, %c0_320] : memref<4x8x1xf32, #tpu.memory_space<vmem>>, vector<1x8x1xf32>
      %392 = vector.shape_cast %391 : vector<1x8x1xf32> to vector<8x1xf32>
      %393 = vector.shape_cast %390 : vector<8x1xf32> to vector<1x8x1xf32>
      tpu.vector_store %arg15[%c2_318, %c0_319, %c0_320], %393 {strides = array<i32>} : memref<4x8x1xf32, #tpu.memory_space<vmem>>, vector<1x8x1xf32>,
      %c2_321 = arith.constant 2 : index
      %c0_322 = arith.constant 0 : index
      %c0_323 = arith.constant 0 : index
      %394 = vector.load %arg16[%c2_321, %c0_322, %c0_323] : memref<4x8x16xf32, #tpu.memory_space<vmem>>, vector<1x8x16xf32>
      %395 = vector.shape_cast %394 : vector<1x8x16xf32> to vector<8x16xf32>
      %396 = vector.broadcast %381 : vector<8x1xf32> to vector<8x16xf32>
      %397 = arith.mulf %396, %395 : vector<8x16xf32>
      %cst_324 = arith.constant dense<0.000000e+00> : vector<8x16xf32>
      %398 = tpu.matmul %384, %369, %cst_324 {dimension_numbers = #tpu.dot_dimension_numbers<[1], [0], [0], [1], [0, 0, 1, 1], [], []>} : vector<8x8xf32>, vector<8x16xf32>, vector<8x16xf32> -> vector<8x16xf32>
      %399 = arith.addf %397, %398 : vector<8x16xf32>
      %c2_325 = arith.constant 2 : index
      %c0_326 = arith.constant 0 : index
      %c0_327 = arith.constant 0 : index
      %400 = vector.load %arg16[%c2_325, %c0_326, %c0_327] : memref<4x8x16xf32, #tpu.memory_space<vmem>>, vector<1x8x16xf32>
      %401 = vector.shape_cast %400 : vector<1x8x16xf32> to vector<8x16xf32>
      %402 = vector.shape_cast %399 : vector<8x16xf32> to vector<1x8x16xf32>
      tpu.vector_store %arg16[%c2_325, %c0_326, %c0_327], %402 {strides = array<i32>} : memref<4x8x16xf32, #tpu.memory_space<vmem>>, vector<1x8x16xf32>,
      %c2_328 = arith.constant 2 : index
      %c0_329 = arith.constant 0 : index
      %c0_330 = arith.constant 0 : index
      %403 = vector.load %arg14[%c2_328, %c0_329, %c0_330] : memref<4x8x1xf32, #tpu.memory_space<vmem>>, vector<1x8x1xf32>
      %404 = vector.shape_cast %403 : vector<1x8x1xf32> to vector<8x1xf32>
      %405 = vector.shape_cast %377 : vector<8x1xf32> to vector<1x8x1xf32>
      tpu.vector_store %arg14[%c2_328, %c0_329, %c0_330], %405 {strides = array<i32>} : memref<4x8x1xf32, #tpu.memory_space<vmem>>, vector<1x8x1xf32>,
      %c3_331 = arith.constant 3 : index
      %c0_332 = arith.constant 0 : index
      %c0_333 = arith.constant 0 : index
      %406 = vector.load %arg8[%c3_331, %c0_332, %c0_333] : memref<4x32x16xf32, #tpu.memory_space<vmem>>, vector<1x32x16xf32>
      %407 = vector.shape_cast %406 : vector<1x32x16xf32> to vector<32x16xf32>
      %cst_334 = arith.constant dense<0.000000e+00> : vector<8x16xf32>
      %408 = tpu.matmul %225, %407, %cst_334 {dimension_numbers = #tpu.dot_dimension_numbers<[1], [0], [0], [1], [0, 0, 1, 1], [], []>} : vector<8x32xf32>, vector<32x16xf32>, vector<8x16xf32> -> vector<8x16xf32>
      %c3_335 = arith.constant 3 : index
      %c0_336 = arith.constant 0 : index
      %c0_337 = arith.constant 0 : index
      %409 = vector.load %arg13[%c3_335, %c0_336, %c0_337] : memref<4x8x16xf32, #tpu.memory_space<vmem>>, vector<1x8x16xf32>
      %410 = vector.shape_cast %409 : vector<1x8x16xf32> to vector<8x16xf32>
      %411 = vector.shape_cast %408 : vector<8x16xf32> to vector<1x8x16xf32>
      tpu.vector_store %arg13[%c3_335, %c0_336, %c0_337], %411 {strides = array<i32>} : memref<4x8x16xf32, #tpu.memory_space<vmem>>, vector<1x8x16xf32>,
      %cst_338 = arith.constant -1.000000e+30 : f32
      %412 = vector.broadcast %cst_338 : f32 to vector<8x1xf32>
      %c3_339 = arith.constant 3 : index
      %c0_340 = arith.constant 0 : index
      %c0_341 = arith.constant 0 : index
      %413 = vector.load %arg14[%c3_339, %c0_340, %c0_341] : memref<4x8x1xf32, #tpu.memory_space<vmem>>, vector<1x8x1xf32>
      %414 = vector.shape_cast %413 : vector<1x8x1xf32> to vector<8x1xf32>
      %415 = vector.shape_cast %412 : vector<8x1xf32> to vector<1x8x1xf32>
      tpu.vector_store %arg14[%c3_339, %c0_340, %c0_341], %415 {strides = array<i32>} : memref<4x8x1xf32, #tpu.memory_space<vmem>>, vector<1x8x1xf32>,
      %cst_342 = arith.constant 0.000000e+00 : f32
      %416 = vector.broadcast %cst_342 : f32 to vector<8x1xf32>
      %c3_343 = arith.constant 3 : index
      %c0_344 = arith.constant 0 : index
      %c0_345 = arith.constant 0 : index
      %417 = vector.load %arg15[%c3_343, %c0_344, %c0_345] : memref<4x8x1xf32, #tpu.memory_space<vmem>>, vector<1x8x1xf32>
      %418 = vector.shape_cast %417 : vector<1x8x1xf32> to vector<8x1xf32>
      %419 = vector.shape_cast %416 : vector<8x1xf32> to vector<1x8x1xf32>
      tpu.vector_store %arg15[%c3_343, %c0_344, %c0_345], %419 {strides = array<i32>} : memref<4x8x1xf32, #tpu.memory_space<vmem>>, vector<1x8x1xf32>,
      %cst_346 = arith.constant 0.000000e+00 : f32
      %420 = vector.broadcast %cst_346 : f32 to vector<8x16xf32>
      %c3_347 = arith.constant 3 : index
      %c0_348 = arith.constant 0 : index
      %c0_349 = arith.constant 0 : index
      %421 = vector.load %arg16[%c3_347, %c0_348, %c0_349] : memref<4x8x16xf32, #tpu.memory_space<vmem>>, vector<1x8x16xf32>
      %422 = vector.shape_cast %421 : vector<1x8x16xf32> to vector<8x16xf32>
      %423 = vector.shape_cast %420 : vector<8x16xf32> to vector<1x8x16xf32>
      tpu.vector_store %arg16[%c3_347, %c0_348, %c0_349], %423 {strides = array<i32>} : memref<4x8x16xf32, #tpu.memory_space<vmem>>, vector<1x8x16xf32>,
      %c3_350 = arith.constant 3 : index
      %c0_351 = arith.constant 0 : index
      %c0_352 = arith.constant 0 : index
      %424 = vector.load %arg9[%c3_350, %c0_351, %c0_352] : memref<4x32x16xf32, #tpu.memory_space<vmem>>, vector<1x32x16xf32>
      %425 = vector.shape_cast %424 : vector<1x32x16xf32> to vector<32x16xf32>
      %cst_353 = arith.constant dense<0.000000e+00> : vector<8x16xf32>
      %426 = tpu.matmul %225, %425, %cst_353 {dimension_numbers = #tpu.dot_dimension_numbers<[1], [0], [0], [1], [0, 0, 1, 1], [], []>} : vector<8x32xf32>, vector<32x16xf32>, vector<8x16xf32> -> vector<8x16xf32>
      %c3_354 = arith.constant 3 : index
      %c0_355 = arith.constant 0 : index
      %c0_356 = arith.constant 0 : index
      %427 = vector.load %arg10[%c3_354, %c0_355, %c0_356] : memref<4x32x16xf32, #tpu.memory_space<vmem>>, vector<1x32x16xf32>
      %428 = vector.shape_cast %427 : vector<1x32x16xf32> to vector<32x16xf32>
      %cst_357 = arith.constant dense<0.000000e+00> : vector<8x16xf32>
      %429 = tpu.matmul %225, %428, %cst_357 {dimension_numbers = #tpu.dot_dimension_numbers<[1], [0], [0], [1], [0, 0, 1, 1], [], []>} : vector<8x32xf32>, vector<32x16xf32>, vector<8x16xf32> -> vector<8x16xf32>
      %c3_358 = arith.constant 3 : index
      %c0_359 = arith.constant 0 : index
      %c0_360 = arith.constant 0 : index
      %430 = vector.load %arg13[%c3_358, %c0_359, %c0_360] : memref<4x8x16xf32, #tpu.memory_space<vmem>>, vector<1x8x16xf32>
      %431 = vector.shape_cast %430 : vector<1x8x16xf32> to vector<8x16xf32>
      %cst_361 = arith.constant dense<0.000000e+00> : vector<8x8xf32>
      %432 = tpu.matmul %431, %426, %cst_361 {dimension_numbers = #tpu.dot_dimension_numbers<[1], [1], [0], [0], [0, 0, 1, 0], [], []>} : vector<8x16xf32>, vector<8x16xf32>, vector<8x8xf32> -> vector<8x8xf32>
      %c3_362 = arith.constant 3 : index
      %c0_363 = arith.constant 0 : index
      %c0_364 = arith.constant 0 : index
      %433 = vector.load %arg14[%c3_362, %c0_363, %c0_364] : memref<4x8x1xf32, #tpu.memory_space<vmem>>, vector<1x8x1xf32>
      %434 = vector.shape_cast %433 : vector<1x8x1xf32> to vector<8x1xf32>
      %cst_365 = arith.constant dense<0xFF800000> : vector<8xf32>
      %435 = vector.multi_reduction <maximumf>, %432, %cst_365 [1] : vector<8x8xf32> to vector<8xf32>
      %436 = vector.shape_cast %435 : vector<8xf32> to vector<8x1xf32>
      %437 = arith.maximumf %434, %436 : vector<8x1xf32>
      %c3_366 = arith.constant 3 : index
      %c0_367 = arith.constant 0 : index
      %c0_368 = arith.constant 0 : index
      %438 = vector.load %arg14[%c3_366, %c0_367, %c0_368] : memref<4x8x1xf32, #tpu.memory_space<vmem>>, vector<1x8x1xf32>
      %439 = vector.shape_cast %438 : vector<1x8x1xf32> to vector<8x1xf32>
      %440 = arith.subf %439, %437 : vector<8x1xf32>
      %441 = math.exp %440 : vector<8x1xf32>
      %442 = vector.broadcast %437 : vector<8x1xf32> to vector<8x8xf32>
      %443 = arith.subf %432, %442 : vector<8x8xf32>
      %444 = math.exp %443 : vector<8x8xf32>
      %c3_369 = arith.constant 3 : index
      %c0_370 = arith.constant 0 : index
      %c0_371 = arith.constant 0 : index
      %445 = vector.load %arg15[%c3_369, %c0_370, %c0_371] : memref<4x8x1xf32, #tpu.memory_space<vmem>>, vector<1x8x1xf32>
      %446 = vector.shape_cast %445 : vector<1x8x1xf32> to vector<8x1xf32>
      %447 = arith.mulf %441, %446 : vector<8x1xf32>
      %cst_372 = arith.constant dense<0.000000e+00> : vector<8xf32>
      %448 = vector.multi_reduction <add>, %444, %cst_372 [1] : vector<8x8xf32> to vector<8xf32>
      %449 = vector.shape_cast %448 : vector<8xf32> to vector<8x1xf32>
      %450 = arith.addf %447, %449 : vector<8x1xf32>
      %c3_373 = arith.constant 3 : index
      %c0_374 = arith.constant 0 : index
      %c0_375 = arith.constant 0 : index
      %451 = vector.load %arg15[%c3_373, %c0_374, %c0_375] : memref<4x8x1xf32, #tpu.memory_space<vmem>>, vector<1x8x1xf32>
      %452 = vector.shape_cast %451 : vector<1x8x1xf32> to vector<8x1xf32>
      %453 = vector.shape_cast %450 : vector<8x1xf32> to vector<1x8x1xf32>
      tpu.vector_store %arg15[%c3_373, %c0_374, %c0_375], %453 {strides = array<i32>} : memref<4x8x1xf32, #tpu.memory_space<vmem>>, vector<1x8x1xf32>,
      %c3_376 = arith.constant 3 : index
      %c0_377 = arith.constant 0 : index
      %c0_378 = arith.constant 0 : index
      %454 = vector.load %arg16[%c3_376, %c0_377, %c0_378] : memref<4x8x16xf32, #tpu.memory_space<vmem>>, vector<1x8x16xf32>
      %455 = vector.shape_cast %454 : vector<1x8x16xf32> to vector<8x16xf32>
      %456 = vector.broadcast %441 : vector<8x1xf32> to vector<8x16xf32>
      %457 = arith.mulf %456, %455 : vector<8x16xf32>
      %cst_379 = arith.constant dense<0.000000e+00> : vector<8x16xf32>
      %458 = tpu.matmul %444, %429, %cst_379 {dimension_numbers = #tpu.dot_dimension_numbers<[1], [0], [0], [1], [0, 0, 1, 1], [], []>} : vector<8x8xf32>, vector<8x16xf32>, vector<8x16xf32> -> vector<8x16xf32>
      %459 = arith.addf %457, %458 : vector<8x16xf32>
      %c3_380 = arith.constant 3 : index
      %c0_381 = arith.constant 0 : index
      %c0_382 = arith.constant 0 : index
      %460 = vector.load %arg16[%c3_380, %c0_381, %c0_382] : memref<4x8x16xf32, #tpu.memory_space<vmem>>, vector<1x8x16xf32>
      %461 = vector.shape_cast %460 : vector<1x8x16xf32> to vector<8x16xf32>
      %462 = vector.shape_cast %459 : vector<8x16xf32> to vector<1x8x16xf32>
      tpu.vector_store %arg16[%c3_380, %c0_381, %c0_382], %462 {strides = array<i32>} : memref<4x8x16xf32, #tpu.memory_space<vmem>>, vector<1x8x16xf32>,
      %c3_383 = arith.constant 3 : index
      %c0_384 = arith.constant 0 : index
      %c0_385 = arith.constant 0 : index
      %463 = vector.load %arg14[%c3_383, %c0_384, %c0_385] : memref<4x8x1xf32, #tpu.memory_space<vmem>>, vector<1x8x1xf32>
      %464 = vector.shape_cast %463 : vector<1x8x1xf32> to vector<8x1xf32>
      %465 = vector.shape_cast %437 : vector<8x1xf32> to vector<1x8x1xf32>
      tpu.vector_store %arg14[%c3_383, %c0_384, %c0_385], %465 {strides = array<i32>} : memref<4x8x1xf32, #tpu.memory_space<vmem>>, vector<1x8x1xf32>,
    } else {
    }
    %c0 = arith.constant 0 : index
    %c0_1 = arith.constant 0 : index
    %c0_2 = arith.constant 0 : index
    %3 = vector.load %arg2[%c0, %c0_1, %c0_2] : memref<1x16x32xf32, #tpu.memory_space<vmem>>, vector<1x16x32xf32>
    %4 = vector.shape_cast %3 : vector<1x16x32xf32> to vector<16x32xf32>
    %c0_3 = arith.constant 0 : index
    %c0_4 = arith.constant 0 : index
    %5 = vector.load %arg4[%c0_3, %c0_4] : memref<1x32xf32, #tpu.memory_space<vmem>>, vector<1x32xf32>
    %c0_5 = arith.constant 0 : index
    %c0_6 = arith.constant 0 : index
    %6 = vector.load %arg5[%c0_5, %c0_6] : memref<1x32xf32, #tpu.memory_space<vmem>>, vector<1x32xf32>
    %cst = arith.constant dense<0.000000e+00> : vector<16xf32>
    %7 = vector.multi_reduction <add>, %4, %cst [1] : vector<16x32xf32> to vector<16xf32>
    %8 = vector.shape_cast %7 : vector<16xf32> to vector<16x1xf32>
    %cst_7 = arith.constant 3.200000e+01 : f32
    %9 = vector.broadcast %cst_7 : f32 to vector<16x1xf32>
    %10 = arith.divf %8, %9 : vector<16x1xf32>
    %11 = vector.broadcast %10 : vector<16x1xf32> to vector<16x32xf32>
    %12 = arith.subf %4, %11 : vector<16x32xf32>
    %13 = arith.mulf %12, %12 : vector<16x32xf32>
    %cst_8 = arith.constant dense<0.000000e+00> : vector<16xf32>
    %14 = vector.multi_reduction <add>, %13, %cst_8 [1] : vector<16x32xf32> to vector<16xf32>
    %15 = vector.shape_cast %14 : vector<16xf32> to vector<16x1xf32>
    %cst_9 = arith.constant 3.200000e+01 : f32
    %16 = vector.broadcast %cst_9 : f32 to vector<16x1xf32>
    %17 = arith.divf %15, %16 : vector<16x1xf32>
    %18 = vector.broadcast %10 : vector<16x1xf32> to vector<16x32xf32>
    %19 = arith.subf %4, %18 : vector<16x32xf32>
    %cst_10 = arith.constant 9.99999974E-6 : f32
    %20 = vector.broadcast %cst_10 : f32 to vector<16x1xf32>
    %21 = arith.addf %17, %20 : vector<16x1xf32>
    %22 = math.rsqrt %21 : vector<16x1xf32>
    %23 = vector.broadcast %22 : vector<16x1xf32> to vector<16x32xf32>
    %24 = arith.mulf %19, %23 : vector<16x32xf32>
    %25 = vector.broadcast %5 : vector<1x32xf32> to vector<16x32xf32>
    %26 = arith.mulf %24, %25 : vector<16x32xf32>
    %27 = vector.broadcast %6 : vector<1x32xf32> to vector<16x32xf32>
    %28 = arith.addf %26, %27 : vector<16x32xf32>
    %c0_11 = arith.constant 0 : index
    %c0_12 = arith.constant 0 : index
    %c0_13 = arith.constant 0 : index
    %29 = vector.load %arg9[%c0_11, %c0_12, %c0_13] : memref<4x32x16xf32, #tpu.memory_space<vmem>>, vector<1x32x16xf32>
    %30 = vector.shape_cast %29 : vector<1x32x16xf32> to vector<32x16xf32>
    %cst_14 = arith.constant dense<0.000000e+00> : vector<16x16xf32>
    %31 = tpu.matmul %28, %30, %cst_14 {dimension_numbers = #tpu.dot_dimension_numbers<[1], [0], [0], [1], [0, 0, 1, 1], [], []>} : vector<16x32xf32>, vector<32x16xf32>, vector<16x16xf32> -> vector<16x16xf32>
    %c0_15 = arith.constant 0 : index
    %c0_16 = arith.constant 0 : index
    %c0_17 = arith.constant 0 : index
    %32 = vector.load %arg10[%c0_15, %c0_16, %c0_17] : memref<4x32x16xf32, #tpu.memory_space<vmem>>, vector<1x32x16xf32>
    %33 = vector.shape_cast %32 : vector<1x32x16xf32> to vector<32x16xf32>
    %cst_18 = arith.constant dense<0.000000e+00> : vector<16x16xf32>
    %34 = tpu.matmul %28, %33, %cst_18 {dimension_numbers = #tpu.dot_dimension_numbers<[1], [0], [0], [1], [0, 0, 1, 1], [], []>} : vector<16x32xf32>, vector<32x16xf32>, vector<16x16xf32> -> vector<16x16xf32>
    %c0_19 = arith.constant 0 : index
    %c0_20 = arith.constant 0 : index
    %c0_21 = arith.constant 0 : index
    %35 = vector.load %arg13[%c0_19, %c0_20, %c0_21] : memref<4x8x16xf32, #tpu.memory_space<vmem>>, vector<1x8x16xf32>
    %36 = vector.shape_cast %35 : vector<1x8x16xf32> to vector<8x16xf32>
    %cst_22 = arith.constant dense<0.000000e+00> : vector<8x16xf32>
    %37 = tpu.matmul %36, %31, %cst_22 {dimension_numbers = #tpu.dot_dimension_numbers<[1], [1], [0], [0], [0, 0, 1, 0], [], []>} : vector<8x16xf32>, vector<16x16xf32>, vector<8x16xf32> -> vector<8x16xf32>
    %c0_23 = arith.constant 0 : index
    %c0_24 = arith.constant 0 : index
    %c0_25 = arith.constant 0 : index
    %38 = vector.load %arg14[%c0_23, %c0_24, %c0_25] : memref<4x8x1xf32, #tpu.memory_space<vmem>>, vector<1x8x1xf32>
    %39 = vector.shape_cast %38 : vector<1x8x1xf32> to vector<8x1xf32>
    %cst_26 = arith.constant dense<0xFF800000> : vector<8xf32>
    %40 = vector.multi_reduction <maximumf>, %37, %cst_26 [1] : vector<8x16xf32> to vector<8xf32>
    %41 = vector.shape_cast %40 : vector<8xf32> to vector<8x1xf32>
    %42 = arith.maximumf %39, %41 : vector<8x1xf32>
    %c0_27 = arith.constant 0 : index
    %c0_28 = arith.constant 0 : index
    %c0_29 = arith.constant 0 : index
    %43 = vector.load %arg14[%c0_27, %c0_28, %c0_29] : memref<4x8x1xf32, #tpu.memory_space<vmem>>, vector<1x8x1xf32>
    %44 = vector.shape_cast %43 : vector<1x8x1xf32> to vector<8x1xf32>
    %45 = arith.subf %44, %42 : vector<8x1xf32>
    %46 = math.exp %45 : vector<8x1xf32>
    %47 = vector.broadcast %42 : vector<8x1xf32> to vector<8x16xf32>
    %48 = arith.subf %37, %47 : vector<8x16xf32>
    %49 = math.exp %48 : vector<8x16xf32>
    %c0_30 = arith.constant 0 : index
    %c0_31 = arith.constant 0 : index
    %c0_32 = arith.constant 0 : index
    %50 = vector.load %arg15[%c0_30, %c0_31, %c0_32] : memref<4x8x1xf32, #tpu.memory_space<vmem>>, vector<1x8x1xf32>
    %51 = vector.shape_cast %50 : vector<1x8x1xf32> to vector<8x1xf32>
    %52 = arith.mulf %46, %51 : vector<8x1xf32>
    %cst_33 = arith.constant dense<0.000000e+00> : vector<8xf32>
    %53 = vector.multi_reduction <add>, %49, %cst_33 [1] : vector<8x16xf32> to vector<8xf32>
    %54 = vector.shape_cast %53 : vector<8xf32> to vector<8x1xf32>
    %55 = arith.addf %52, %54 : vector<8x1xf32>
    %c0_34 = arith.constant 0 : index
    %c0_35 = arith.constant 0 : index
    %c0_36 = arith.constant 0 : index
    %56 = vector.load %arg15[%c0_34, %c0_35, %c0_36] : memref<4x8x1xf32, #tpu.memory_space<vmem>>, vector<1x8x1xf32>
    %57 = vector.shape_cast %56 : vector<1x8x1xf32> to vector<8x1xf32>
    %58 = vector.shape_cast %55 : vector<8x1xf32> to vector<1x8x1xf32>
    tpu.vector_store %arg15[%c0_34, %c0_35, %c0_36], %58 {strides = array<i32>} : memref<4x8x1xf32, #tpu.memory_space<vmem>>, vector<1x8x1xf32>,
    %c0_37 = arith.constant 0 : index
    %c0_38 = arith.constant 0 : index
    %c0_39 = arith.constant 0 : index
    %59 = vector.load %arg16[%c0_37, %c0_38, %c0_39] : memref<4x8x16xf32, #tpu.memory_space<vmem>>, vector<1x8x16xf32>
    %60 = vector.shape_cast %59 : vector<1x8x16xf32> to vector<8x16xf32>
    %61 = vector.broadcast %46 : vector<8x1xf32> to vector<8x16xf32>
    %62 = arith.mulf %61, %60 : vector<8x16xf32>
    %cst_40 = arith.constant dense<0.000000e+00> : vector<8x16xf32>
    %63 = tpu.matmul %49, %34, %cst_40 {dimension_numbers = #tpu.dot_dimension_numbers<[1], [0], [0], [1], [0, 0, 1, 1], [], []>} : vector<8x16xf32>, vector<16x16xf32>, vector<8x16xf32> -> vector<8x16xf32>
    %64 = arith.addf %62, %63 : vector<8x16xf32>
    %c0_41 = arith.constant 0 : index
    %c0_42 = arith.constant 0 : index
    %c0_43 = arith.constant 0 : index
    %65 = vector.load %arg16[%c0_41, %c0_42, %c0_43] : memref<4x8x16xf32, #tpu.memory_space<vmem>>, vector<1x8x16xf32>
    %66 = vector.shape_cast %65 : vector<1x8x16xf32> to vector<8x16xf32>
    %67 = vector.shape_cast %64 : vector<8x16xf32> to vector<1x8x16xf32>
    tpu.vector_store %arg16[%c0_41, %c0_42, %c0_43], %67 {strides = array<i32>} : memref<4x8x16xf32, #tpu.memory_space<vmem>>, vector<1x8x16xf32>,
    %c0_44 = arith.constant 0 : index
    %c0_45 = arith.constant 0 : index
    %c0_46 = arith.constant 0 : index
    %68 = vector.load %arg14[%c0_44, %c0_45, %c0_46] : memref<4x8x1xf32, #tpu.memory_space<vmem>>, vector<1x8x1xf32>
    %69 = vector.shape_cast %68 : vector<1x8x1xf32> to vector<8x1xf32>
    %70 = vector.shape_cast %42 : vector<8x1xf32> to vector<1x8x1xf32>
    tpu.vector_store %arg14[%c0_44, %c0_45, %c0_46], %70 {strides = array<i32>} : memref<4x8x1xf32, #tpu.memory_space<vmem>>, vector<1x8x1xf32>,
    %c1 = arith.constant 1 : index
    %c0_47 = arith.constant 0 : index
    %c0_48 = arith.constant 0 : index
    %71 = vector.load %arg9[%c1, %c0_47, %c0_48] : memref<4x32x16xf32, #tpu.memory_space<vmem>>, vector<1x32x16xf32>
    %72 = vector.shape_cast %71 : vector<1x32x16xf32> to vector<32x16xf32>
    %cst_49 = arith.constant dense<0.000000e+00> : vector<16x16xf32>
    %73 = tpu.matmul %28, %72, %cst_49 {dimension_numbers = #tpu.dot_dimension_numbers<[1], [0], [0], [1], [0, 0, 1, 1], [], []>} : vector<16x32xf32>, vector<32x16xf32>, vector<16x16xf32> -> vector<16x16xf32>
    %c1_50 = arith.constant 1 : index
    %c0_51 = arith.constant 0 : index
    %c0_52 = arith.constant 0 : index
    %74 = vector.load %arg10[%c1_50, %c0_51, %c0_52] : memref<4x32x16xf32, #tpu.memory_space<vmem>>, vector<1x32x16xf32>
    %75 = vector.shape_cast %74 : vector<1x32x16xf32> to vector<32x16xf32>
    %cst_53 = arith.constant dense<0.000000e+00> : vector<16x16xf32>
    %76 = tpu.matmul %28, %75, %cst_53 {dimension_numbers = #tpu.dot_dimension_numbers<[1], [0], [0], [1], [0, 0, 1, 1], [], []>} : vector<16x32xf32>, vector<32x16xf32>, vector<16x16xf32> -> vector<16x16xf32>
    %c1_54 = arith.constant 1 : index
    %c0_55 = arith.constant 0 : index
    %c0_56 = arith.constant 0 : index
    %77 = vector.load %arg13[%c1_54, %c0_55, %c0_56] : memref<4x8x16xf32, #tpu.memory_space<vmem>>, vector<1x8x16xf32>
    %78 = vector.shape_cast %77 : vector<1x8x16xf32> to vector<8x16xf32>
    %cst_57 = arith.constant dense<0.000000e+00> : vector<8x16xf32>
    %79 = tpu.matmul %78, %73, %cst_57 {dimension_numbers = #tpu.dot_dimension_numbers<[1], [1], [0], [0], [0, 0, 1, 0], [], []>} : vector<8x16xf32>, vector<16x16xf32>, vector<8x16xf32> -> vector<8x16xf32>
    %c1_58 = arith.constant 1 : index
    %c0_59 = arith.constant 0 : index
    %c0_60 = arith.constant 0 : index
    %80 = vector.load %arg14[%c1_58, %c0_59, %c0_60] : memref<4x8x1xf32, #tpu.memory_space<vmem>>, vector<1x8x1xf32>
    %81 = vector.shape_cast %80 : vector<1x8x1xf32> to vector<8x1xf32>
    %cst_61 = arith.constant dense<0xFF800000> : vector<8xf32>
    %82 = vector.multi_reduction <maximumf>, %79, %cst_61 [1] : vector<8x16xf32> to vector<8xf32>
    %83 = vector.shape_cast %82 : vector<8xf32> to vector<8x1xf32>
    %84 = arith.maximumf %81, %83 : vector<8x1xf32>
    %c1_62 = arith.constant 1 : index
    %c0_63 = arith.constant 0 : index
    %c0_64 = arith.constant 0 : index
    %85 = vector.load %arg14[%c1_62, %c0_63, %c0_64] : memref<4x8x1xf32, #tpu.memory_space<vmem>>, vector<1x8x1xf32>
    %86 = vector.shape_cast %85 : vector<1x8x1xf32> to vector<8x1xf32>
    %87 = arith.subf %86, %84 : vector<8x1xf32>
    %88 = math.exp %87 : vector<8x1xf32>
    %89 = vector.broadcast %84 : vector<8x1xf32> to vector<8x16xf32>
    %90 = arith.subf %79, %89 : vector<8x16xf32>
    %91 = math.exp %90 : vector<8x16xf32>
    %c1_65 = arith.constant 1 : index
    %c0_66 = arith.constant 0 : index
    %c0_67 = arith.constant 0 : index
    %92 = vector.load %arg15[%c1_65, %c0_66, %c0_67] : memref<4x8x1xf32, #tpu.memory_space<vmem>>, vector<1x8x1xf32>
    %93 = vector.shape_cast %92 : vector<1x8x1xf32> to vector<8x1xf32>
    %94 = arith.mulf %88, %93 : vector<8x1xf32>
    %cst_68 = arith.constant dense<0.000000e+00> : vector<8xf32>
    %95 = vector.multi_reduction <add>, %91, %cst_68 [1] : vector<8x16xf32> to vector<8xf32>
    %96 = vector.shape_cast %95 : vector<8xf32> to vector<8x1xf32>
    %97 = arith.addf %94, %96 : vector<8x1xf32>
    %c1_69 = arith.constant 1 : index
    %c0_70 = arith.constant 0 : index
    %c0_71 = arith.constant 0 : index
    %98 = vector.load %arg15[%c1_69, %c0_70, %c0_71] : memref<4x8x1xf32, #tpu.memory_space<vmem>>, vector<1x8x1xf32>
    %99 = vector.shape_cast %98 : vector<1x8x1xf32> to vector<8x1xf32>
    %100 = vector.shape_cast %97 : vector<8x1xf32> to vector<1x8x1xf32>
    tpu.vector_store %arg15[%c1_69, %c0_70, %c0_71], %100 {strides = array<i32>} : memref<4x8x1xf32, #tpu.memory_space<vmem>>, vector<1x8x1xf32>,
    %c1_72 = arith.constant 1 : index
    %c0_73 = arith.constant 0 : index
    %c0_74 = arith.constant 0 : index
    %101 = vector.load %arg16[%c1_72, %c0_73, %c0_74] : memref<4x8x16xf32, #tpu.memory_space<vmem>>, vector<1x8x16xf32>
    %102 = vector.shape_cast %101 : vector<1x8x16xf32> to vector<8x16xf32>
    %103 = vector.broadcast %88 : vector<8x1xf32> to vector<8x16xf32>
    %104 = arith.mulf %103, %102 : vector<8x16xf32>
    %cst_75 = arith.constant dense<0.000000e+00> : vector<8x16xf32>
    %105 = tpu.matmul %91, %76, %cst_75 {dimension_numbers = #tpu.dot_dimension_numbers<[1], [0], [0], [1], [0, 0, 1, 1], [], []>} : vector<8x16xf32>, vector<16x16xf32>, vector<8x16xf32> -> vector<8x16xf32>
    %106 = arith.addf %104, %105 : vector<8x16xf32>
    %c1_76 = arith.constant 1 : index
    %c0_77 = arith.constant 0 : index
    %c0_78 = arith.constant 0 : index
    %107 = vector.load %arg16[%c1_76, %c0_77, %c0_78] : memref<4x8x16xf32, #tpu.memory_space<vmem>>, vector<1x8x16xf32>
    %108 = vector.shape_cast %107 : vector<1x8x16xf32> to vector<8x16xf32>
    %109 = vector.shape_cast %106 : vector<8x16xf32> to vector<1x8x16xf32>
    tpu.vector_store %arg16[%c1_76, %c0_77, %c0_78], %109 {strides = array<i32>} : memref<4x8x16xf32, #tpu.memory_space<vmem>>, vector<1x8x16xf32>,
    %c1_79 = arith.constant 1 : index
    %c0_80 = arith.constant 0 : index
    %c0_81 = arith.constant 0 : index
    %110 = vector.load %arg14[%c1_79, %c0_80, %c0_81] : memref<4x8x1xf32, #tpu.memory_space<vmem>>, vector<1x8x1xf32>
    %111 = vector.shape_cast %110 : vector<1x8x1xf32> to vector<8x1xf32>
    %112 = vector.shape_cast %84 : vector<8x1xf32> to vector<1x8x1xf32>
    tpu.vector_store %arg14[%c1_79, %c0_80, %c0_81], %112 {strides = array<i32>} : memref<4x8x1xf32, #tpu.memory_space<vmem>>, vector<1x8x1xf32>,
    %c2 = arith.constant 2 : index
    %c0_82 = arith.constant 0 : index
    %c0_83 = arith.constant 0 : index
    %113 = vector.load %arg9[%c2, %c0_82, %c0_83] : memref<4x32x16xf32, #tpu.memory_space<vmem>>, vector<1x32x16xf32>
    %114 = vector.shape_cast %113 : vector<1x32x16xf32> to vector<32x16xf32>
    %cst_84 = arith.constant dense<0.000000e+00> : vector<16x16xf32>
    %115 = tpu.matmul %28, %114, %cst_84 {dimension_numbers = #tpu.dot_dimension_numbers<[1], [0], [0], [1], [0, 0, 1, 1], [], []>} : vector<16x32xf32>, vector<32x16xf32>, vector<16x16xf32> -> vector<16x16xf32>
    %c2_85 = arith.constant 2 : index
    %c0_86 = arith.constant 0 : index
    %c0_87 = arith.constant 0 : index
    %116 = vector.load %arg10[%c2_85, %c0_86, %c0_87] : memref<4x32x16xf32, #tpu.memory_space<vmem>>, vector<1x32x16xf32>
    %117 = vector.shape_cast %116 : vector<1x32x16xf32> to vector<32x16xf32>
    %cst_88 = arith.constant dense<0.000000e+00> : vector<16x16xf32>
    %118 = tpu.matmul %28, %117, %cst_88 {dimension_numbers = #tpu.dot_dimension_numbers<[1], [0], [0], [1], [0, 0, 1, 1], [], []>} : vector<16x32xf32>, vector<32x16xf32>, vector<16x16xf32> -> vector<16x16xf32>
    %c2_89 = arith.constant 2 : index
    %c0_90 = arith.constant 0 : index
    %c0_91 = arith.constant 0 : index
    %119 = vector.load %arg13[%c2_89, %c0_90, %c0_91] : memref<4x8x16xf32, #tpu.memory_space<vmem>>, vector<1x8x16xf32>
    %120 = vector.shape_cast %119 : vector<1x8x16xf32> to vector<8x16xf32>
    %cst_92 = arith.constant dense<0.000000e+00> : vector<8x16xf32>
    %121 = tpu.matmul %120, %115, %cst_92 {dimension_numbers = #tpu.dot_dimension_numbers<[1], [1], [0], [0], [0, 0, 1, 0], [], []>} : vector<8x16xf32>, vector<16x16xf32>, vector<8x16xf32> -> vector<8x16xf32>
    %c2_93 = arith.constant 2 : index
    %c0_94 = arith.constant 0 : index
    %c0_95 = arith.constant 0 : index
    %122 = vector.load %arg14[%c2_93, %c0_94, %c0_95] : memref<4x8x1xf32, #tpu.memory_space<vmem>>, vector<1x8x1xf32>
    %123 = vector.shape_cast %122 : vector<1x8x1xf32> to vector<8x1xf32>
    %cst_96 = arith.constant dense<0xFF800000> : vector<8xf32>
    %124 = vector.multi_reduction <maximumf>, %121, %cst_96 [1] : vector<8x16xf32> to vector<8xf32>
    %125 = vector.shape_cast %124 : vector<8xf32> to vector<8x1xf32>
    %126 = arith.maximumf %123, %125 : vector<8x1xf32>
    %c2_97 = arith.constant 2 : index
    %c0_98 = arith.constant 0 : index
    %c0_99 = arith.constant 0 : index
    %127 = vector.load %arg14[%c2_97, %c0_98, %c0_99] : memref<4x8x1xf32, #tpu.memory_space<vmem>>, vector<1x8x1xf32>
    %128 = vector.shape_cast %127 : vector<1x8x1xf32> to vector<8x1xf32>
    %129 = arith.subf %128, %126 : vector<8x1xf32>
    %130 = math.exp %129 : vector<8x1xf32>
    %131 = vector.broadcast %126 : vector<8x1xf32> to vector<8x16xf32>
    %132 = arith.subf %121, %131 : vector<8x16xf32>
    %133 = math.exp %132 : vector<8x16xf32>
    %c2_100 = arith.constant 2 : index
    %c0_101 = arith.constant 0 : index
    %c0_102 = arith.constant 0 : index
    %134 = vector.load %arg15[%c2_100, %c0_101, %c0_102] : memref<4x8x1xf32, #tpu.memory_space<vmem>>, vector<1x8x1xf32>
    %135 = vector.shape_cast %134 : vector<1x8x1xf32> to vector<8x1xf32>
    %136 = arith.mulf %130, %135 : vector<8x1xf32>
    %cst_103 = arith.constant dense<0.000000e+00> : vector<8xf32>
    %137 = vector.multi_reduction <add>, %133, %cst_103 [1] : vector<8x16xf32> to vector<8xf32>
    %138 = vector.shape_cast %137 : vector<8xf32> to vector<8x1xf32>
    %139 = arith.addf %136, %138 : vector<8x1xf32>
    %c2_104 = arith.constant 2 : index
    %c0_105 = arith.constant 0 : index
    %c0_106 = arith.constant 0 : index
    %140 = vector.load %arg15[%c2_104, %c0_105, %c0_106] : memref<4x8x1xf32, #tpu.memory_space<vmem>>, vector<1x8x1xf32>
    %141 = vector.shape_cast %140 : vector<1x8x1xf32> to vector<8x1xf32>
    %142 = vector.shape_cast %139 : vector<8x1xf32> to vector<1x8x1xf32>
    tpu.vector_store %arg15[%c2_104, %c0_105, %c0_106], %142 {strides = array<i32>} : memref<4x8x1xf32, #tpu.memory_space<vmem>>, vector<1x8x1xf32>,
    %c2_107 = arith.constant 2 : index
    %c0_108 = arith.constant 0 : index
    %c0_109 = arith.constant 0 : index
    %143 = vector.load %arg16[%c2_107, %c0_108, %c0_109] : memref<4x8x16xf32, #tpu.memory_space<vmem>>, vector<1x8x16xf32>
    %144 = vector.shape_cast %143 : vector<1x8x16xf32> to vector<8x16xf32>
    %145 = vector.broadcast %130 : vector<8x1xf32> to vector<8x16xf32>
    %146 = arith.mulf %145, %144 : vector<8x16xf32>
    %cst_110 = arith.constant dense<0.000000e+00> : vector<8x16xf32>
    %147 = tpu.matmul %133, %118, %cst_110 {dimension_numbers = #tpu.dot_dimension_numbers<[1], [0], [0], [1], [0, 0, 1, 1], [], []>} : vector<8x16xf32>, vector<16x16xf32>, vector<8x16xf32> -> vector<8x16xf32>
    %148 = arith.addf %146, %147 : vector<8x16xf32>
    %c2_111 = arith.constant 2 : index
    %c0_112 = arith.constant 0 : index
    %c0_113 = arith.constant 0 : index
    %149 = vector.load %arg16[%c2_111, %c0_112, %c0_113] : memref<4x8x16xf32, #tpu.memory_space<vmem>>, vector<1x8x16xf32>
    %150 = vector.shape_cast %149 : vector<1x8x16xf32> to vector<8x16xf32>
    %151 = vector.shape_cast %148 : vector<8x16xf32> to vector<1x8x16xf32>
    tpu.vector_store %arg16[%c2_111, %c0_112, %c0_113], %151 {strides = array<i32>} : memref<4x8x16xf32, #tpu.memory_space<vmem>>, vector<1x8x16xf32>,
    %c2_114 = arith.constant 2 : index
    %c0_115 = arith.constant 0 : index
    %c0_116 = arith.constant 0 : index
    %152 = vector.load %arg14[%c2_114, %c0_115, %c0_116] : memref<4x8x1xf32, #tpu.memory_space<vmem>>, vector<1x8x1xf32>
    %153 = vector.shape_cast %152 : vector<1x8x1xf32> to vector<8x1xf32>
    %154 = vector.shape_cast %126 : vector<8x1xf32> to vector<1x8x1xf32>
    tpu.vector_store %arg14[%c2_114, %c0_115, %c0_116], %154 {strides = array<i32>} : memref<4x8x1xf32, #tpu.memory_space<vmem>>, vector<1x8x1xf32>,
    %c3 = arith.constant 3 : index
    %c0_117 = arith.constant 0 : index
    %c0_118 = arith.constant 0 : index
    %155 = vector.load %arg9[%c3, %c0_117, %c0_118] : memref<4x32x16xf32, #tpu.memory_space<vmem>>, vector<1x32x16xf32>
    %156 = vector.shape_cast %155 : vector<1x32x16xf32> to vector<32x16xf32>
    %cst_119 = arith.constant dense<0.000000e+00> : vector<16x16xf32>
    %157 = tpu.matmul %28, %156, %cst_119 {dimension_numbers = #tpu.dot_dimension_numbers<[1], [0], [0], [1], [0, 0, 1, 1], [], []>} : vector<16x32xf32>, vector<32x16xf32>, vector<16x16xf32> -> vector<16x16xf32>
    %c3_120 = arith.constant 3 : index
    %c0_121 = arith.constant 0 : index
    %c0_122 = arith.constant 0 : index
    %158 = vector.load %arg10[%c3_120, %c0_121, %c0_122] : memref<4x32x16xf32, #tpu.memory_space<vmem>>, vector<1x32x16xf32>
    %159 = vector.shape_cast %158 : vector<1x32x16xf32> to vector<32x16xf32>
    %cst_123 = arith.constant dense<0.000000e+00> : vector<16x16xf32>
    %160 = tpu.matmul %28, %159, %cst_123 {dimension_numbers = #tpu.dot_dimension_numbers<[1], [0], [0], [1], [0, 0, 1, 1], [], []>} : vector<16x32xf32>, vector<32x16xf32>, vector<16x16xf32> -> vector<16x16xf32>
    %c3_124 = arith.constant 3 : index
    %c0_125 = arith.constant 0 : index
    %c0_126 = arith.constant 0 : index
    %161 = vector.load %arg13[%c3_124, %c0_125, %c0_126] : memref<4x8x16xf32, #tpu.memory_space<vmem>>, vector<1x8x16xf32>
    %162 = vector.shape_cast %161 : vector<1x8x16xf32> to vector<8x16xf32>
    %cst_127 = arith.constant dense<0.000000e+00> : vector<8x16xf32>
    %163 = tpu.matmul %162, %157, %cst_127 {dimension_numbers = #tpu.dot_dimension_numbers<[1], [1], [0], [0], [0, 0, 1, 0], [], []>} : vector<8x16xf32>, vector<16x16xf32>, vector<8x16xf32> -> vector<8x16xf32>
    %c3_128 = arith.constant 3 : index
    %c0_129 = arith.constant 0 : index
    %c0_130 = arith.constant 0 : index
    %164 = vector.load %arg14[%c3_128, %c0_129, %c0_130] : memref<4x8x1xf32, #tpu.memory_space<vmem>>, vector<1x8x1xf32>
    %165 = vector.shape_cast %164 : vector<1x8x1xf32> to vector<8x1xf32>
    %cst_131 = arith.constant dense<0xFF800000> : vector<8xf32>
    %166 = vector.multi_reduction <maximumf>, %163, %cst_131 [1] : vector<8x16xf32> to vector<8xf32>
    %167 = vector.shape_cast %166 : vector<8xf32> to vector<8x1xf32>
    %168 = arith.maximumf %165, %167 : vector<8x1xf32>
    %c3_132 = arith.constant 3 : index
    %c0_133 = arith.constant 0 : index
    %c0_134 = arith.constant 0 : index
    %169 = vector.load %arg14[%c3_132, %c0_133, %c0_134] : memref<4x8x1xf32, #tpu.memory_space<vmem>>, vector<1x8x1xf32>
    %170 = vector.shape_cast %169 : vector<1x8x1xf32> to vector<8x1xf32>
    %171 = arith.subf %170, %168 : vector<8x1xf32>
    %172 = math.exp %171 : vector<8x1xf32>
    %173 = vector.broadcast %168 : vector<8x1xf32> to vector<8x16xf32>
    %174 = arith.subf %163, %173 : vector<8x16xf32>
    %175 = math.exp %174 : vector<8x16xf32>
    %c3_135 = arith.constant 3 : index
    %c0_136 = arith.constant 0 : index
    %c0_137 = arith.constant 0 : index
    %176 = vector.load %arg15[%c3_135, %c0_136, %c0_137] : memref<4x8x1xf32, #tpu.memory_space<vmem>>, vector<1x8x1xf32>
    %177 = vector.shape_cast %176 : vector<1x8x1xf32> to vector<8x1xf32>
    %178 = arith.mulf %172, %177 : vector<8x1xf32>
    %cst_138 = arith.constant dense<0.000000e+00> : vector<8xf32>
    %179 = vector.multi_reduction <add>, %175, %cst_138 [1] : vector<8x16xf32> to vector<8xf32>
    %180 = vector.shape_cast %179 : vector<8xf32> to vector<8x1xf32>
    %181 = arith.addf %178, %180 : vector<8x1xf32>
    %c3_139 = arith.constant 3 : index
    %c0_140 = arith.constant 0 : index
    %c0_141 = arith.constant 0 : index
    %182 = vector.load %arg15[%c3_139, %c0_140, %c0_141] : memref<4x8x1xf32, #tpu.memory_space<vmem>>, vector<1x8x1xf32>
    %183 = vector.shape_cast %182 : vector<1x8x1xf32> to vector<8x1xf32>
    %184 = vector.shape_cast %181 : vector<8x1xf32> to vector<1x8x1xf32>
    tpu.vector_store %arg15[%c3_139, %c0_140, %c0_141], %184 {strides = array<i32>} : memref<4x8x1xf32, #tpu.memory_space<vmem>>, vector<1x8x1xf32>,
    %c3_142 = arith.constant 3 : index
    %c0_143 = arith.constant 0 : index
    %c0_144 = arith.constant 0 : index
    %185 = vector.load %arg16[%c3_142, %c0_143, %c0_144] : memref<4x8x16xf32, #tpu.memory_space<vmem>>, vector<1x8x16xf32>
    %186 = vector.shape_cast %185 : vector<1x8x16xf32> to vector<8x16xf32>
    %187 = vector.broadcast %172 : vector<8x1xf32> to vector<8x16xf32>
    %188 = arith.mulf %187, %186 : vector<8x16xf32>
    %cst_145 = arith.constant dense<0.000000e+00> : vector<8x16xf32>
    %189 = tpu.matmul %175, %160, %cst_145 {dimension_numbers = #tpu.dot_dimension_numbers<[1], [0], [0], [1], [0, 0, 1, 1], [], []>} : vector<8x16xf32>, vector<16x16xf32>, vector<8x16xf32> -> vector<8x16xf32>
    %190 = arith.addf %188, %189 : vector<8x16xf32>
    %c3_146 = arith.constant 3 : index
    %c0_147 = arith.constant 0 : index
    %c0_148 = arith.constant 0 : index
    %191 = vector.load %arg16[%c3_146, %c0_147, %c0_148] : memref<4x8x16xf32, #tpu.memory_space<vmem>>, vector<1x8x16xf32>
    %192 = vector.shape_cast %191 : vector<1x8x16xf32> to vector<8x16xf32>
    %193 = vector.shape_cast %190 : vector<8x16xf32> to vector<1x8x16xf32>
    tpu.vector_store %arg16[%c3_146, %c0_147, %c0_148], %193 {strides = array<i32>} : memref<4x8x16xf32, #tpu.memory_space<vmem>>, vector<1x8x16xf32>,
    %c3_149 = arith.constant 3 : index
    %c0_150 = arith.constant 0 : index
    %c0_151 = arith.constant 0 : index
    %194 = vector.load %arg14[%c3_149, %c0_150, %c0_151] : memref<4x8x1xf32, #tpu.memory_space<vmem>>, vector<1x8x1xf32>
    %195 = vector.shape_cast %194 : vector<1x8x1xf32> to vector<8x1xf32>
    %196 = vector.shape_cast %168 : vector<8x1xf32> to vector<1x8x1xf32>
    tpu.vector_store %arg14[%c3_149, %c0_150, %c0_151], %196 {strides = array<i32>} : memref<4x8x1xf32, #tpu.memory_space<vmem>>, vector<1x8x1xf32>,
    %c0_i32_152 = arith.constant 0 : i32
    %197 = arith.cmpi eq, %arg1, %c0_i32_152 : i32
    %198 = arith.extui %197 : i1 to i32
    %c0_i32_153 = arith.constant 0 : i32
    %199 = arith.cmpi ne, %198, %c0_i32_153 : i32
    scf.if %199 {
      %cst_154 = arith.constant 0.000000e+00 : f32
      %200 = vector.broadcast %cst_154 : f32 to vector<8x32xf32>
      %c0_155 = arith.constant 0 : index
      %c0_156 = arith.constant 0 : index
      %c0_157 = arith.constant 0 : index
      %201 = vector.load %arg15[%c0_155, %c0_156, %c0_157] : memref<4x8x1xf32, #tpu.memory_space<vmem>>, vector<1x8x1xf32>
      %202 = vector.shape_cast %201 : vector<1x8x1xf32> to vector<8x1xf32>
      %203 = tpu.reciprocal %202 : vector<8x1xf32> -> vector<8x1xf32>
      %c0_158 = arith.constant 0 : index
      %c0_159 = arith.constant 0 : index
      %c0_160 = arith.constant 0 : index
      %204 = vector.load %arg16[%c0_158, %c0_159, %c0_160] : memref<4x8x16xf32, #tpu.memory_space<vmem>>, vector<1x8x16xf32>
      %205 = vector.shape_cast %204 : vector<1x8x16xf32> to vector<8x16xf32>
      %206 = vector.broadcast %203 : vector<8x1xf32> to vector<8x16xf32>
      %207 = arith.mulf %205, %206 : vector<8x16xf32>
      %c0_161 = arith.constant 0 : index
      %c0_162 = arith.constant 0 : index
      %c0_163 = arith.constant 0 : index
      %208 = vector.load %arg11[%c0_161, %c0_162, %c0_163] : memref<4x16x32xf32, #tpu.memory_space<vmem>>, vector<1x16x32xf32>
      %209 = vector.shape_cast %208 : vector<1x16x32xf32> to vector<16x32xf32>
      %cst_164 = arith.constant dense<0.000000e+00> : vector<8x32xf32>
      %210 = tpu.matmul %207, %209, %cst_164 {dimension_numbers = #tpu.dot_dimension_numbers<[1], [0], [0], [1], [0, 0, 1, 1], [], []>} : vector<8x16xf32>, vector<16x32xf32>, vector<8x32xf32> -> vector<8x32xf32>
      %211 = arith.addf %200, %210 : vector<8x32xf32>
      %c1_165 = arith.constant 1 : index
      %c0_166 = arith.constant 0 : index
      %c0_167 = arith.constant 0 : index
      %212 = vector.load %arg15[%c1_165, %c0_166, %c0_167] : memref<4x8x1xf32, #tpu.memory_space<vmem>>, vector<1x8x1xf32>
      %213 = vector.shape_cast %212 : vector<1x8x1xf32> to vector<8x1xf32>
      %214 = tpu.reciprocal %213 : vector<8x1xf32> -> vector<8x1xf32>
      %c1_168 = arith.constant 1 : index
      %c0_169 = arith.constant 0 : index
      %c0_170 = arith.constant 0 : index
      %215 = vector.load %arg16[%c1_168, %c0_169, %c0_170] : memref<4x8x16xf32, #tpu.memory_space<vmem>>, vector<1x8x16xf32>
      %216 = vector.shape_cast %215 : vector<1x8x16xf32> to vector<8x16xf32>
      %217 = vector.broadcast %214 : vector<8x1xf32> to vector<8x16xf32>
      %218 = arith.mulf %216, %217 : vector<8x16xf32>
      %c1_171 = arith.constant 1 : index
      %c0_172 = arith.constant 0 : index
      %c0_173 = arith.constant 0 : index
      %219 = vector.load %arg11[%c1_171, %c0_172, %c0_173] : memref<4x16x32xf32, #tpu.memory_space<vmem>>, vector<1x16x32xf32>
      %220 = vector.shape_cast %219 : vector<1x16x32xf32> to vector<16x32xf32>
      %cst_174 = arith.constant dense<0.000000e+00> : vector<8x32xf32>
      %221 = tpu.matmul %218, %220, %cst_174 {dimension_numbers = #tpu.dot_dimension_numbers<[1], [0], [0], [1], [0, 0, 1, 1], [], []>} : vector<8x16xf32>, vector<16x32xf32>, vector<8x32xf32> -> vector<8x32xf32>
      %222 = arith.addf %211, %221 : vector<8x32xf32>
      %c2_175 = arith.constant 2 : index
      %c0_176 = arith.constant 0 : index
      %c0_177 = arith.constant 0 : index
      %223 = vector.load %arg15[%c2_175, %c0_176, %c0_177] : memref<4x8x1xf32, #tpu.memory_space<vmem>>, vector<1x8x1xf32>
      %224 = vector.shape_cast %223 : vector<1x8x1xf32> to vector<8x1xf32>
      %225 = tpu.reciprocal %224 : vector<8x1xf32> -> vector<8x1xf32>
      %c2_178 = arith.constant 2 : index
      %c0_179 = arith.constant 0 : index
      %c0_180 = arith.constant 0 : index
      %226 = vector.load %arg16[%c2_178, %c0_179, %c0_180] : memref<4x8x16xf32, #tpu.memory_space<vmem>>, vector<1x8x16xf32>
      %227 = vector.shape_cast %226 : vector<1x8x16xf32> to vector<8x16xf32>
      %228 = vector.broadcast %225 : vector<8x1xf32> to vector<8x16xf32>
      %229 = arith.mulf %227, %228 : vector<8x16xf32>
      %c2_181 = arith.constant 2 : index
      %c0_182 = arith.constant 0 : index
      %c0_183 = arith.constant 0 : index
      %230 = vector.load %arg11[%c2_181, %c0_182, %c0_183] : memref<4x16x32xf32, #tpu.memory_space<vmem>>, vector<1x16x32xf32>
      %231 = vector.shape_cast %230 : vector<1x16x32xf32> to vector<16x32xf32>
      %cst_184 = arith.constant dense<0.000000e+00> : vector<8x32xf32>
      %232 = tpu.matmul %229, %231, %cst_184 {dimension_numbers = #tpu.dot_dimension_numbers<[1], [0], [0], [1], [0, 0, 1, 1], [], []>} : vector<8x16xf32>, vector<16x32xf32>, vector<8x32xf32> -> vector<8x32xf32>
      %233 = arith.addf %222, %232 : vector<8x32xf32>
      %c3_185 = arith.constant 3 : index
      %c0_186 = arith.constant 0 : index
      %c0_187 = arith.constant 0 : index
      %234 = vector.load %arg15[%c3_185, %c0_186, %c0_187] : memref<4x8x1xf32, #tpu.memory_space<vmem>>, vector<1x8x1xf32>
      %235 = vector.shape_cast %234 : vector<1x8x1xf32> to vector<8x1xf32>
      %236 = tpu.reciprocal %235 : vector<8x1xf32> -> vector<8x1xf32>
      %c3_188 = arith.constant 3 : index
      %c0_189 = arith.constant 0 : index
      %c0_190 = arith.constant 0 : index
      %237 = vector.load %arg16[%c3_188, %c0_189, %c0_190] : memref<4x8x16xf32, #tpu.memory_space<vmem>>, vector<1x8x16xf32>
      %238 = vector.shape_cast %237 : vector<1x8x16xf32> to vector<8x16xf32>
      %239 = vector.broadcast %236 : vector<8x1xf32> to vector<8x16xf32>
      %240 = arith.mulf %238, %239 : vector<8x16xf32>
      %c3_191 = arith.constant 3 : index
      %c0_192 = arith.constant 0 : index
      %c0_193 = arith.constant 0 : index
      %241 = vector.load %arg11[%c3_191, %c0_192, %c0_193] : memref<4x16x32xf32, #tpu.memory_space<vmem>>, vector<1x16x32xf32>
      %242 = vector.shape_cast %241 : vector<1x16x32xf32> to vector<16x32xf32>
      %cst_194 = arith.constant dense<0.000000e+00> : vector<8x32xf32>
      %243 = tpu.matmul %240, %242, %cst_194 {dimension_numbers = #tpu.dot_dimension_numbers<[1], [0], [0], [1], [0, 0, 1, 1], [], []>} : vector<8x16xf32>, vector<16x32xf32>, vector<8x32xf32> -> vector<8x32xf32>
      %244 = arith.addf %233, %243 : vector<8x32xf32>
      %c0_195 = arith.constant 0 : index
      %c0_196 = arith.constant 0 : index
      %c0_197 = arith.constant 0 : index
      %245 = vector.load %arg12[%c0_195, %c0_196, %c0_197] : memref<1x8x32xf32, #tpu.memory_space<vmem>>, vector<1x8x32xf32>
      %246 = vector.shape_cast %245 : vector<1x8x32xf32> to vector<8x32xf32>
      %247 = vector.shape_cast %244 : vector<8x32xf32> to vector<1x8x32xf32>
      tpu.vector_store %arg12[%c0_195, %c0_196, %c0_197], %247 {strides = array<i32>} : memref<1x8x32xf32, #tpu.memory_space<vmem>>, vector<1x8x32xf32>,
    } else {
    }
    return
  }
  func.func @transform_0(%arg0: i32, %arg1: i32) -> (i32, i32, i32) {
    %c0_i32 = arith.constant 0 : i32
    %c0_i32_0 = arith.constant 0 : i32
    return %arg0, %arg1, %c0_i32 : i32, i32, i32
  }
  func.func @transform_1(%arg0: i32, %arg1: i32) -> (i32, i32, i32) {
    %c0_i32 = arith.constant 0 : i32
    %c0_i32_0 = arith.constant 0 : i32
    %c0_i32_1 = arith.constant 0 : i32
    return %arg0, %c0_i32, %c0_i32_0 : i32, i32, i32
  }
  func.func @transform_2(%arg0: i32, %arg1: i32) -> (i32, i32) {
    %c0_i32 = arith.constant 0 : i32
    %c0_i32_0 = arith.constant 0 : i32
    %c0_i32_1 = arith.constant 0 : i32
    return %c0_i32, %c0_i32_0 : i32, i32
  }
  func.func @transform_3(%arg0: i32, %arg1: i32) -> (i32, i32) {
    %c0_i32 = arith.constant 0 : i32
    %c0_i32_0 = arith.constant 0 : i32
    %c0_i32_1 = arith.constant 0 : i32
    return %c0_i32, %c0_i32_0 : i32, i32
  }
  func.func @transform_4(%arg0: i32, %arg1: i32) -> (i32, i32) {
    %c0_i32 = arith.constant 0 : i32
    %c0_i32_0 = arith.constant 0 : i32
    %c0_i32_1 = arith.constant 0 : i32
    return %c0_i32, %c0_i32_0 : i32, i32
  }
  func.func @transform_5(%arg0: i32, %arg1: i32) -> (i32, i32) {
    %c0_i32 = arith.constant 0 : i32
    %c0_i32_0 = arith.constant 0 : i32
    %c0_i32_1 = arith.constant 0 : i32
    return %c0_i32, %c0_i32_0 : i32, i32
  }
  func.func @transform_6(%arg0: i32, %arg1: i32) -> (i32, i32, i32) {
    %c0_i32 = arith.constant 0 : i32
    %c0_i32_0 = arith.constant 0 : i32
    %c0_i32_1 = arith.constant 0 : i32
    %c0_i32_2 = arith.constant 0 : i32
    return %c0_i32, %c0_i32_0, %c0_i32_1 : i32, i32, i32
  }
  func.func @transform_7(%arg0: i32, %arg1: i32) -> (i32, i32, i32) {
    %c0_i32 = arith.constant 0 : i32
    %c0_i32_0 = arith.constant 0 : i32
    %c0_i32_1 = arith.constant 0 : i32
    %c0_i32_2 = arith.constant 0 : i32
    return %c0_i32, %c0_i32_0, %c0_i32_1 : i32, i32, i32
  }
  func.func @transform_8(%arg0: i32, %arg1: i32) -> (i32, i32, i32) {
    %c0_i32 = arith.constant 0 : i32
    %c0_i32_0 = arith.constant 0 : i32
    %c0_i32_1 = arith.constant 0 : i32
    %c0_i32_2 = arith.constant 0 : i32
    return %c0_i32, %c0_i32_0, %c0_i32_1 : i32, i32, i32
  }
  func.func @transform_9(%arg0: i32, %arg1: i32) -> (i32, i32, i32) {
    %c0_i32 = arith.constant 0 : i32
    %c0_i32_0 = arith.constant 0 : i32
    %c0_i32_1 = arith.constant 0 : i32
    %c0_i32_2 = arith.constant 0 : i32
    return %c0_i32, %c0_i32_0, %c0_i32_1 : i32, i32, i32
  }
  func.func @transform_10(%arg0: i32, %arg1: i32) -> (i32, i32, i32) {
    %c0_i32 = arith.constant 0 : i32
    %c0_i32_0 = arith.constant 0 : i32
    %c0_i32_1 = arith.constant 0 : i32
    return %arg0, %c0_i32, %c0_i32_0 : i32, i32, i32
  }
}

</mosaic_0001>

<llo_original>
// kernel: tpu_custom_call.1
$region0: #{tpu_custom_call.1}
  #allocation0 [shape = 'u32[]', space=smem, size = 0x4, offset = 0x4, fixed_abs, tag = 'smem constant byte address 0x4 - core index']
  #allocation1 [shape = 'u32[144,128]{1,0:T(1,128)}', space=vmem, size = 0x12000, scoped, tag = 'internal scratch']
  #allocation2 [shape = 'f32[4,8,16]{2,1,0:T(8,128)}', space=vmem, size = 0x4000, scoped, tag = 'scratch operand']
  #allocation3 [shape = 'f32[4,8,1]{2,1,0:T(8,128)}', space=vmem, size = 0x4000, scoped, tag = 'scratch operand']
  #allocation4 [shape = 'f32[4,8,1]{2,1,0:T(8,128)}', space=vmem, size = 0x4000, scoped, tag = 'scratch operand']
  #allocation5 [shape = 'f32[4,8,16]{2,1,0:T(8,128)}', space=vmem, size = 0x4000, scoped, tag = 'scratch operand']
  %s0 = inlined_call_operand.hbm [shape: f32[2,16,32], index: 0, kind: input, shape index: {}]
  %s1 = inlined_call_operand.hbm [shape: f32[2,8,32], index: 1, kind: input, shape index: {}]
  %s2 = inlined_call_operand.hbm [shape: f32[1,32], index: 2, kind: input, shape index: {}]
  %s3 = inlined_call_operand.hbm [shape: f32[1,32], index: 3, kind: input, shape index: {}]
  %s4 = inlined_call_operand.hbm [shape: f32[1,32], index: 4, kind: input, shape index: {}]
  %s5 = inlined_call_operand.hbm [shape: f32[1,32], index: 5, kind: input, shape index: {}]
  %s6 = inlined_call_operand.hbm [shape: f32[4,32,16], index: 6, kind: input, shape index: {}]
  %s7 = inlined_call_operand.hbm [shape: f32[4,32,16], index: 7, kind: input, shape index: {}]
  %s8 = inlined_call_operand.hbm [shape: f32[4,32,16], index: 8, kind: input, shape index: {}]
  %s9 = inlined_call_operand.hbm [shape: f32[4,16,32], index: 9, kind: input, shape index: {}]
  %s10 = inlined_call_operand.hbm [shape: f32[2,8,32], index: 10, kind: output, shape index: {}]
  %s11 = sld [smem:[#allocation0]]
  $region121: #{tpu_custom_call.1} parent=0
    _
  %s13 = ssub.s32 1, %s11
  %s14 = scalar_select 0, %s13, %s11
  $region1: #{tpu_custom_call.1} parent=0
    #allocation6 [shape = 'u8[16384]{0}', space=vmem, size = 0x4000, scoped, tag = 'input window, operand 0']
    #allocation7 [shape = 's32[2]{0}', space=sflag, size = 0x8, scoped, tag = 'scoped memory for tpu_custom_call.1']
    #allocation8 [shape = 's32[2]{0}', space=sflag, size = 0x8, scoped, tag = 'scoped memory for tpu_custom_call.1']
    #allocation9 [shape = 'u8[8192]{0}', space=vmem, size = 0x2000, scoped, tag = 'input window, operand 1']
    #allocation10 [shape = 's32[2]{0}', space=sflag, size = 0x8, scoped, tag = 'scoped memory for tpu_custom_call.1']
    #allocation11 [shape = 'u8[512]{0}', space=vmem, size = 0x400, scoped, tag = 'input window, operand 2, single buffered']
    #allocation12 [shape = 'u8[512]{0}', space=vmem, size = 0x400, scoped, tag = 'input window, operand 3, single buffered']
    #allocation13 [shape = 's32[1]{0}', space=sflag, size = 0x4, scoped, tag = 'scoped memory for tpu_custom_call.1']
    #allocation14 [shape = 'u8[512]{0}', space=vmem, size = 0x400, scoped, tag = 'input window, operand 4, single buffered']
    #allocation15 [shape = 'u8[512]{0}', space=vmem, size = 0x400, scoped, tag = 'input window, operand 5, single buffered']
    #allocation16 [shape = 's32[1]{0}', space=sflag, size = 0x4, scoped, tag = 'scoped memory for tpu_custom_call.1']
    #allocation17 [shape = 'u8[65536]{0}', space=vmem, size = 0x10000, scoped, tag = 'input window, operand 6, single buffered']
    #allocation18 [shape = 'u8[65536]{0}', space=vmem, size = 0x10000, scoped, tag = 'input window, operand 7, single buffered']
    #allocation19 [shape = 's32[1]{0}', space=sflag, size = 0x4, scoped, tag = 'scoped memory for tpu_custom_call.1']
    #allocation20 [shape = 'u8[65536]{0}', space=vmem, size = 0x10000, scoped, tag = 'input window, operand 8, single buffered']
    #allocation21 [shape = 'u8[32768]{0}', space=vmem, size = 0x8000, scoped, tag = 'input window, operand 9, single buffered']
    #allocation22 [shape = 's32[1]{0}', space=sflag, size = 0x4, scoped, tag = 'scoped memory for tpu_custom_call.1']
    #allocation23 [shape = 'u8[8192]{0}', space=vmem, size = 0x2000, scoped, tag = 'output window, operand 0']
    %15 = vsyncpa [#allocation7], 0
    %s16 = scalar_lea.sflag [#allocation7], 1
    %17 = vsyncpa %s16, 0
    %18 = vsyncpa [#allocation10], 0
    %s19 = scalar_lea.sflag [#allocation10], 1
    %20 = vsyncpa %s19, 0
    %21 = vsyncpa [#allocation13], 0
    %22 = vsyncpa [#allocation16], 0
    %23 = vsyncpa [#allocation19], 0
    %24 = vsyncpa [#allocation22], 0
    %25 = vsyncpa [#allocation8], 0
    %s26 = scalar_lea.sflag [#allocation8], 1
    %27 = vsyncpa %s26, 0
    loop: start=0, step=1, limit=4
    $region2: #{tpu_custom_call.1} parent=1 // loop_pre_header
      _
    $region3: #{tpu_custom_call.1} parent=1 // loop_header
      %s29 = sphi 0, %s33
      %p30 = scmp.ge.s32.totalorder %s29, 4
      %s36 = sphi 0, %s48
      %s37 = sphi 0, %s44
      %s38 = sphi 0, %s36
      %s39 = sphi 0, %s37
      %s40 = sphi 0, %s38
      %s41 = sphi 0, %s39
      %s53 = sphi 0, %s55
      %s56 = sphi 0, %s53
      %s57 = sphi 0, %s56
      %s73 = sphi 0, %s57
      %s79 = sphi 0, %s81
      %s82 = sphi 0, %s79
      %s83 = sphi 0, %s82
      %s99 = sphi 0, %s83
      %s103 = sphi 0, %s103
      %s105 = sphi 0, %s103
      %s106 = sphi 0, %s105
      %s120 = sphi 0, %s106
      %s124 = sphi 0, %s124
      %s126 = sphi 0, %s124
      %s127 = sphi 0, %s126
      %s141 = sphi 0, %s127
      %s145 = sphi 0, %s145
      %s147 = sphi 0, %s145
      %s148 = sphi 0, %s147
      %s162 = sphi 0, %s148
      %s166 = sphi 0, %s166
      %s168 = sphi 0, %s166
      %s169 = sphi 0, %s168
      %s183 = sphi 0, %s169
      %s187 = sphi 0, %s187
      %s189 = sphi 0, %s187
      %s190 = sphi 0, %s189
      %s204 = sphi 0, %s190
      %s208 = sphi 0, %s208
      %s210 = sphi 0, %s208
      %s211 = sphi 0, %s210
      %s225 = sphi 0, %s211
      %s229 = sphi 0, %s229
      %s231 = sphi 0, %s229
      %s232 = sphi 0, %s231
      %s246 = sphi 0, %s232
      %s250 = sphi 0, %s250
      %s252 = sphi 0, %s250
      %s253 = sphi 0, %s252
      %s267 = sphi 0, %s253
      %s273 = sphi 0, %s275
      %s276 = sphi 0, %s273
      %s277 = sphi 0, %s276
      %s293 = sphi 0, %s277
    $region4: #{tpu_custom_call.1} parent=1 // loop_header_branch
      %32 = sbr.rel (%p30) target = $region8
    $region5: #{tpu_custom_call.1} parent=1 // loop_body
      %s34 = ssub.s32 %s29, 1
      %s35 = ssub.s32 %s29, 2
      %s42 = sadd.s32 1, %s37
      %p43 = scmp.ge.s32.totalorder %s42, 1
      %s44 = scalar_select %p43, 0, %s42
      %s45 = sadd.s32 1, %s36
      %s46 = scalar_select %p43, %s45, %s36
      %p47 = scmp.ge.s32.totalorder %s46, 2
      %s48 = scalar_select %p47, 0, %s46
      %s49 = ssub.s32 %s36, %s48
      %s50 = ssub.s32 %s37, %s44
      %s51 = sor.u32 %s49, %s50
      %p52 = scmp.eq.s32.totalorder %s51, 0
      %s54 = sadd.s32 %s53, 1
      %s55 = scalar_select %p52, %s53, %s54
      %p58 = pneg %p52
      %p59 = scmp.eq.s32.totalorder %s29, 1
      %p60 = por %p58, %p59
      %p61 = scmp.ne.s32.totalorder %s53, %s56
      %p62 = scmp.eq.s32.totalorder %s29, 0
      %p63 = por %p61, %p62
      %p64 = scmp.ne.s32.totalorder %s53, %s56
      %p65 = scmp.eq.s32.totalorder %s34, 1
      %p66 = por %p64, %p65
      %p67 = scmp.ne.s32.totalorder %s56, %s57
      %p68 = scmp.eq.s32.totalorder %s34, 0
      %p69 = por %p67, %p68
      %p70 = scmp.ne.s32.totalorder %s56, %s57
      %p71 = scmp.eq.s32.totalorder %s35, 1
      %p72 = por %p70, %p71
      %p74 = scmp.ne.s32.totalorder %s57, %s73
      %p75 = scmp.eq.s32.totalorder %s35, 0
      %p76 = por %p74, %p75
      %s77 = ssub.s32 %s36, %s48
      %p78 = scmp.eq.s32.totalorder %s77, 0
      %s80 = sadd.s32 %s79, 1
      %s81 = scalar_select %p78, %s79, %s80
      %p84 = pneg %p78
      %p85 = scmp.eq.s32.totalorder %s29, 1
      %p86 = por %p84, %p85
      %p87 = scmp.ne.s32.totalorder %s79, %s82
      %p88 = scmp.eq.s32.totalorder %s29, 0
      %p89 = por %p87, %p88
      %p90 = scmp.ne.s32.totalorder %s79, %s82
      %p91 = scmp.eq.s32.totalorder %s34, 1
      %p92 = por %p90, %p91
      %p93 = scmp.ne.s32.totalorder %s82, %s83
      %p94 = scmp.eq.s32.totalorder %s34, 0
      %p95 = por %p93, %p94
      %p96 = scmp.ne.s32.totalorder %s82, %s83
      %p97 = scmp.eq.s32.totalorder %s35, 1
      %p98 = por %p96, %p97
      %p100 = scmp.ne.s32.totalorder %s83, %s99
      %p101 = scmp.eq.s32.totalorder %s35, 0
      %p102 = por %p100, %p101
      %s104 = sadd.s32 %s103, 1
      %p107 = scmp.eq.s32.totalorder %s29, 1
      %p108 = scmp.ne.s32.totalorder %s103, %s105
      %p109 = scmp.eq.s32.totalorder %s29, 0
      %p110 = por %p108, %p109
      %p111 = scmp.ne.s32.totalorder %s103, %s105
      %p112 = scmp.eq.s32.totalorder %s34, 1
      %p113 = por %p111, %p112
      %p114 = scmp.ne.s32.totalorder %s105, %s106
      %p115 = scmp.eq.s32.totalorder %s34, 0
      %p116 = por %p114, %p115
      %p117 = scmp.ne.s32.totalorder %s105, %s106
      %p118 = scmp.eq.s32.totalorder %s35, 1
      %p119 = por %p117, %p118
      %p121 = scmp.ne.s32.totalorder %s106, %s120
      %p122 = scmp.eq.s32.totalorder %s35, 0
      %p123 = por %p121, %p122
      %s125 = sadd.s32 %s124, 1
      %p128 = scmp.eq.s32.totalorder %s29, 1
      %p129 = scmp.ne.s32.totalorder %s124, %s126
      %p130 = scmp.eq.s32.totalorder %s29, 0
      %p131 = por %p129, %p130
      %p132 = scmp.ne.s32.totalorder %s124, %s126
      %p133 = scmp.eq.s32.totalorder %s34, 1
      %p134 = por %p132, %p133
      %p135 = scmp.ne.s32.totalorder %s126, %s127
      %p136 = scmp.eq.s32.totalorder %s34, 0
      %p137 = por %p135, %p136
      %p138 = scmp.ne.s32.totalorder %s126, %s127
      %p139 = scmp.eq.s32.totalorder %s35, 1
      %p140 = por %p138, %p139
      %p142 = scmp.ne.s32.totalorder %s127, %s141
      %p143 = scmp.eq.s32.totalorder %s35, 0
      %p144 = por %p142, %p143
      %s146 = sadd.s32 %s145, 1
      %p149 = scmp.eq.s32.totalorder %s29, 1
      %p150 = scmp.ne.s32.totalorder %s145, %s147
      %p151 = scmp.eq.s32.totalorder %s29, 0
      %p152 = por %p150, %p151
      %p153 = scmp.ne.s32.totalorder %s145, %s147
      %p154 = scmp.eq.s32.totalorder %s34, 1
      %p155 = por %p153, %p154
      %p156 = scmp.ne.s32.totalorder %s147, %s148
      %p157 = scmp.eq.s32.totalorder %s34, 0
      %p158 = por %p156, %p157
      %p159 = scmp.ne.s32.totalorder %s147, %s148
      %p160 = scmp.eq.s32.totalorder %s35, 1
      %p161 = por %p159, %p160
      %p163 = scmp.ne.s32.totalorder %s148, %s162
      %p164 = scmp.eq.s32.totalorder %s35, 0
      %p165 = por %p163, %p164
      %s167 = sadd.s32 %s166, 1
      %p170 = scmp.eq.s32.totalorder %s29, 1
      %p171 = scmp.ne.s32.totalorder %s166, %s168
      %p172 = scmp.eq.s32.totalorder %s29, 0
      %p173 = por %p171, %p172
      %p174 = scmp.ne.s32.totalorder %s166, %s168
      %p175 = scmp.eq.s32.totalorder %s34, 1
      %p176 = por %p174, %p175
      %p177 = scmp.ne.s32.totalorder %s168, %s169
      %p178 = scmp.eq.s32.totalorder %s34, 0
      %p179 = por %p177, %p178
      %p180 = scmp.ne.s32.totalorder %s168, %s169
      %p181 = scmp.eq.s32.totalorder %s35, 1
      %p182 = por %p180, %p181
      %p184 = scmp.ne.s32.totalorder %s169, %s183
      %p185 = scmp.eq.s32.totalorder %s35, 0
      %p186 = por %p184, %p185
      %s188 = sadd.s32 %s187, 1
      %p191 = scmp.eq.s32.totalorder %s29, 1
      %p192 = scmp.ne.s32.totalorder %s187, %s189
      %p193 = scmp.eq.s32.totalorder %s29, 0
      %p194 = por %p192, %p193
      %p195 = scmp.ne.s32.totalorder %s187, %s189
      %p196 = scmp.eq.s32.totalorder %s34, 1
      %p197 = por %p195, %p196
      %p198 = scmp.ne.s32.totalorder %s189, %s190
      %p199 = scmp.eq.s32.totalorder %s34, 0
      %p200 = por %p198, %p199
      %p201 = scmp.ne.s32.totalorder %s189, %s190
      %p202 = scmp.eq.s32.totalorder %s35, 1
      %p203 = por %p201, %p202
      %p205 = scmp.ne.s32.totalorder %s190, %s204
      %p206 = scmp.eq.s32.totalorder %s35, 0
      %p207 = por %p205, %p206
      %s209 = sadd.s32 %s208, 1
      %p212 = scmp.eq.s32.totalorder %s29, 1
      %p213 = scmp.ne.s32.totalorder %s208, %s210
      %p214 = scmp.eq.s32.totalorder %s29, 0
      %p215 = por %p213, %p214
      %p216 = scmp.ne.s32.totalorder %s208, %s210
      %p217 = scmp.eq.s32.totalorder %s34, 1
      %p218 = por %p216, %p217
      %p219 = scmp.ne.s32.totalorder %s210, %s211
      %p220 = scmp.eq.s32.totalorder %s34, 0
      %p221 = por %p219, %p220
      %p222 = scmp.ne.s32.totalorder %s210, %s211
      %p223 = scmp.eq.s32.totalorder %s35, 1
      %p224 = por %p222, %p223
      %p226 = scmp.ne.s32.totalorder %s211, %s225
      %p227 = scmp.eq.s32.totalorder %s35, 0
      %p228 = por %p226, %p227
      %s230 = sadd.s32 %s229, 1
      %p233 = scmp.eq.s32.totalorder %s29, 1
      %p234 = scmp.ne.s32.totalorder %s229, %s231
      %p235 = scmp.eq.s32.totalorder %s29, 0
      %p236 = por %p234, %p235
      %p237 = scmp.ne.s32.totalorder %s229, %s231
      %p238 = scmp.eq.s32.totalorder %s34, 1
      %p239 = por %p237, %p238
      %p240 = scmp.ne.s32.totalorder %s231, %s232
      %p241 = scmp.eq.s32.totalorder %s34, 0
      %p242 = por %p240, %p241
      %p243 = scmp.ne.s32.totalorder %s231, %s232
      %p244 = scmp.eq.s32.totalorder %s35, 1
      %p245 = por %p243, %p244
      %p247 = scmp.ne.s32.totalorder %s232, %s246
      %p248 = scmp.eq.s32.totalorder %s35, 0
      %p249 = por %p247, %p248
      %s251 = sadd.s32 %s250, 1
      %p254 = scmp.eq.s32.totalorder %s29, 1
      %p255 = scmp.ne.s32.totalorder %s250, %s252
      %p256 = scmp.eq.s32.totalorder %s29, 0
      %p257 = por %p255, %p256
      %p258 = scmp.ne.s32.totalorder %s250, %s252
      %p259 = scmp.eq.s32.totalorder %s34, 1
      %p260 = por %p258, %p259
      %p261 = scmp.ne.s32.totalorder %s252, %s253
      %p262 = scmp.eq.s32.totalorder %s34, 0
      %p263 = por %p261, %p262
      %p264 = scmp.ne.s32.totalorder %s252, %s253
      %p265 = scmp.eq.s32.totalorder %s35, 1
      %p266 = por %p264, %p265
      %p268 = scmp.ne.s32.totalorder %s253, %s267
      %p269 = scmp.eq.s32.totalorder %s35, 0
      %p270 = por %p268, %p269
      %s271 = ssub.s32 %s36, %s48
      %p272 = scmp.eq.s32.totalorder %s271, 0
      %s274 = sadd.s32 %s273, 1
      %s275 = scalar_select %p272, %s273, %s274
      %p278 = pneg %p272
      %p279 = scmp.eq.s32.totalorder %s29, 1
      %p280 = por %p278, %p279
      %p281 = scmp.ne.s32.totalorder %s273, %s276
      %p282 = scmp.eq.s32.totalorder %s29, 0
      %p283 = por %p281, %p282
      %p284 = scmp.ne.s32.totalorder %s273, %s276
      %p285 = scmp.eq.s32.totalorder %s34, 1
      %p286 = por %p284, %p285
      %p287 = scmp.ne.s32.totalorder %s276, %s277
      %p288 = scmp.eq.s32.totalorder %s34, 0
      %p289 = por %p287, %p288
      %p290 = scmp.ne.s32.totalorder %s276, %s277
      %p291 = scmp.eq.s32.totalorder %s35, 1
      %p292 = por %p290, %p291
      %p294 = scmp.ne.s32.totalorder %s277, %s293
      %p295 = scmp.eq.s32.totalorder %s35, 0
      %p296 = por %p294, %p295
      %p297 = scmp.le.s32.totalorder 1, %s29
      %p298 = scmp.lt.s32.totalorder %s29, 3
      %p299 = pnand %p297, %p298
      %p300 = pneg %p299
      // Predicated region
      $region9: #{tpu_custom_call.1} parent=5 // pred_check
        _
      $region10: #{tpu_custom_call.1} parent=5 // pred_check_branch
        %302 = sbr.rel (%p299) target = $region12
      $region11: #{tpu_custom_call.1} parent=5 // pred_region
        %s303 = ssub.s32 %s29, 1
        // Predicated region
        $region13: #{tpu_custom_call.1} parent=11 // pred_check
          %p304 = pneg %p116
        $region14: #{tpu_custom_call.1} parent=11 // pred_check_branch
          %306 = sbr.rel (%p304) target = $region16
        $region15: #{tpu_custom_call.1} parent=11 // pred_region
          %s308 = ssub.s32 16, 16
          %309 = vsyncadd [#allocation10], %s308
          %s311 = sshll.u32 [#allocation11], 4
          %s312 = int_to_ptr.vmem [resolvable:$true] %s311
          %314 = dma.hbm_to_vmem [thread:$0]  %s2, 16, %s312, [#allocation10]
        $region16: #{tpu_custom_call.1} parent=11 // pred_fallthru
          _
        // Predicated region
        $region17: #{tpu_custom_call.1} parent=11 // pred_check
          %p315 = pneg %p137
        $region18: #{tpu_custom_call.1} parent=11 // pred_check_branch
          %317 = sbr.rel (%p315) target = $region20
        $region19: #{tpu_custom_call.1} parent=11 // pred_region
          %s319 = ssub.s32 16, 16
          %320 = vsyncadd [#allocation13], %s319
          %s322 = sshll.u32 [#allocation12], 4
          %s323 = int_to_ptr.vmem [resolvable:$true] %s322
          %325 = dma.hbm_to_vmem [thread:$0]  %s3, 16, %s323, [#allocation13]
        $region20: #{tpu_custom_call.1} parent=11 // pred_fallthru
          _
        // Predicated region
        $region21: #{tpu_custom_call.1} parent=11 // pred_check
          %p326 = pneg %p158
        $region22: #{tpu_custom_call.1} parent=11 // pred_check_branch
          %328 = sbr.rel (%p326) target = $region24
        $region23: #{tpu_custom_call.1} parent=11 // pred_region
          %s330 = ssub.s32 16, 16
          %331 = vsyncadd [#allocation13], %s330
          %s333 = sshll.u32 [#allocation14], 4
          %s334 = int_to_ptr.vmem [resolvable:$true] %s333
          %336 = dma.hbm_to_vmem [thread:$0]  %s4, 16, %s334, [#allocation13]
        $region24: #{tpu_custom_call.1} parent=11 // pred_fallthru
          _
        // Predicated region
        $region25: #{tpu_custom_call.1} parent=11 // pred_check
          %p337 = pneg %p179
        $region26: #{tpu_custom_call.1} parent=11 // pred_check_branch
          %339 = sbr.rel (%p337) target = $region28
        $region27: #{tpu_custom_call.1} parent=11 // pred_region
          %s341 = ssub.s32 16, 16
          %342 = vsyncadd [#allocation16], %s341
          %s344 = sshll.u32 [#allocation15], 4
          %s345 = int_to_ptr.vmem [resolvable:$true] %s344
          %347 = dma.hbm_to_vmem [thread:$0]  %s5, 16, %s345, [#allocation16]
        $region28: #{tpu_custom_call.1} parent=11 // pred_fallthru
          _
        // Predicated region
        $region29: #{tpu_custom_call.1} parent=11 // pred_check
          %p348 = pneg %p200
        $region30: #{tpu_custom_call.1} parent=11 // pred_check_branch
          %350 = sbr.rel (%p348) target = $region32
        $region31: #{tpu_custom_call.1} parent=11 // pred_region
          %s352 = ssub.s32 2048, 2048
          %353 = vsyncadd [#allocation16], %s352
          %s354 = sshll.u32 [#allocation17], 4
          %s355 = int_to_ptr.vmem [resolvable:$true] %s354
          %360 = dma.hbm_to_vmem [thread:$0]  %s6, 2048, %s355, [#allocation16], 128, 128, 8
        $region32: #{tpu_custom_call.1} parent=11 // pred_fallthru
          _
        // Predicated region
        $region33: #{tpu_custom_call.1} parent=11 // pred_check
          %p361 = pneg %p221
        $region34: #{tpu_custom_call.1} parent=11 // pred_check_branch
          %363 = sbr.rel (%p361) target = $region36
        $region35: #{tpu_custom_call.1} parent=11 // pred_region
          %s365 = ssub.s32 2048, 2048
          %366 = vsyncadd [#allocation19], %s365
          %s367 = sshll.u32 [#allocation18], 4
          %s368 = int_to_ptr.vmem [resolvable:$true] %s367
          %373 = dma.hbm_to_vmem [thread:$0]  %s7, 2048, %s368, [#allocation19], 128, 128, 8
        $region36: #{tpu_custom_call.1} parent=11 // pred_fallthru
          _
        // Predicated region
        $region37: #{tpu_custom_call.1} parent=11 // pred_check
          %p374 = pneg %p242
        $region38: #{tpu_custom_call.1} parent=11 // pred_check_branch
          %376 = sbr.rel (%p374) target = $region40
        $region39: #{tpu_custom_call.1} parent=11 // pred_region
          %s378 = ssub.s32 2048, 2048
          %379 = vsyncadd [#allocation19], %s378
          %s380 = sshll.u32 [#allocation20], 4
          %s381 = int_to_ptr.vmem [resolvable:$true] %s380
          %386 = dma.hbm_to_vmem [thread:$0]  %s8, 2048, %s381, [#allocation19], 128, 128, 8
        $region40: #{tpu_custom_call.1} parent=11 // pred_fallthru
          _
        // Predicated region
        $region41: #{tpu_custom_call.1} parent=11 // pred_check
          %p387 = pneg %p263
        $region42: #{tpu_custom_call.1} parent=11 // pred_check_branch
          %389 = sbr.rel (%p387) target = $region44
        $region43: #{tpu_custom_call.1} parent=11 // pred_region
          %s391 = ssub.s32 1024, 1024
          %392 = vsyncadd [#allocation22], %s391
          %s393 = sshll.u32 [#allocation21], 4
          %s394 = int_to_ptr.vmem [resolvable:$true] %s393
          %399 = dma.hbm_to_vmem [thread:$0]  %s9, 1024, %s394, [#allocation22], 128, 128, 8
        $region44: #{tpu_custom_call.1} parent=11 // pred_fallthru
          _
      $region12: #{tpu_custom_call.1} parent=5 // pred_fallthru
        _
      %p400 = scmp.lt.s32.totalorder %s29, 2
      // Predicated region
      $region45: #{tpu_custom_call.1} parent=5 // pred_check
        %p401 = pneg %p400
      $region46: #{tpu_custom_call.1} parent=5 // pred_check_branch
        %403 = sbr.rel (%p401) target = $region48
      $region47: #{tpu_custom_call.1} parent=5 // pred_region
        // Predicated region
        $region49: #{tpu_custom_call.1} parent=47 // pred_check
          %p404 = pneg %p63
        $region50: #{tpu_custom_call.1} parent=47 // pred_check_branch
          %406 = sbr.rel (%p404) target = $region52
        $region51: #{tpu_custom_call.1} parent=47 // pred_region
          %s407 = sand.u32 %s53, 1
          %s408 = scalar_lea.sflag [#allocation7], %s407
          %s409 = sand.u32 %s53, 1
          %s410 = smul.addr %s409, 16
          %s411 = scalar_lea.vmem [#allocation6], %s410
          %s412 = smul.u32 2, %s37
          %s414 = ssub.s32 256, 256
          %415 = vsyncadd %s408, %s414
          %s416 = smul.addr %s36, 2
          %s417 = sadd.s32 %s412, %s416
          %s418 = smul.addr %s417, 128
          %s419 = scalar_lea.hbm %s0, %s418
          %s420 = sshll.u32 %s411, 4
          %s421 = int_to_ptr.vmem [resolvable:$true] %s420
          %426 = dma.hbm_to_vmem [thread:$0]  %s419, 256, %s421, %s408, 128, 128, 8
        $region52: #{tpu_custom_call.1} parent=47 // pred_fallthru
          _
        // Predicated region
        $region53: #{tpu_custom_call.1} parent=47 // pred_check
          %p427 = pneg %p89
        $region54: #{tpu_custom_call.1} parent=47 // pred_check_branch
          %429 = sbr.rel (%p427) target = $region56
        $region55: #{tpu_custom_call.1} parent=47 // pred_region
          %s430 = sand.u32 %s29, 1
          %s431 = scalar_lea.sflag [#allocation10], %s430
          %s432 = sand.u32 %s79, 1
          %s433 = smul.addr %s432, 8
          %s434 = scalar_lea.vmem [#allocation9], %s433
          %s436 = ssub.s32 128, 128
          %437 = vsyncadd %s431, %s436
          %s438 = smul.addr %s36, 128
          %s439 = scalar_lea.hbm %s1, %s438
          %s441 = sshll.u32 %s434, 4
          %s442 = int_to_ptr.vmem [resolvable:$true] %s441
          %444 = dma.hbm_to_vmem [thread:$0]  %s439, 128, %s442, %s431
        $region56: #{tpu_custom_call.1} parent=47 // pred_fallthru
          _
      $region48: #{tpu_custom_call.1} parent=5 // pred_fallthru
        _
      %p445 = scmp.le.s32.totalorder 1, %s29
      %p446 = scmp.lt.s32.totalorder %s29, 3
      %p447 = pnand %p445, %p446
      %p448 = pneg %p447
      // Predicated region
      $region57: #{tpu_custom_call.1} parent=5 // pred_check
        _
      $region58: #{tpu_custom_call.1} parent=5 // pred_check_branch
        %450 = sbr.rel (%p447) target = $region60
      $region59: #{tpu_custom_call.1} parent=5 // pred_region
        %s451 = ssub.s32 %s29, 1
        %s452 = sand.u32 %s56, 1
        %s453 = scalar_lea.sflag [#allocation7], %s452
        %s454 = sand.u32 %s56, 1
        %s455 = smul.addr %s454, 16
        %s456 = scalar_lea.vmem [#allocation6], %s455
        // Predicated region
        $region61: #{tpu_custom_call.1} parent=59 // pred_check
          %p457 = pneg %p69
        $region62: #{tpu_custom_call.1} parent=59 // pred_check_branch
          %459 = sbr.rel (%p457) target = $region64
        $region63: #{tpu_custom_call.1} parent=59 // pred_region
          %460 = dma.done %s453, 256
        $region64: #{tpu_custom_call.1} parent=59 // pred_fallthru
          _
        %s461 = sand.u32 %s34, 1
        %s462 = scalar_lea.sflag [#allocation10], %s461
        %s463 = sand.u32 %s82, 1
        %s464 = smul.addr %s463, 8
        %s465 = scalar_lea.vmem [#allocation9], %s464
        // Predicated region
        $region65: #{tpu_custom_call.1} parent=59 // pred_check
          %p466 = pneg %p95
        $region66: #{tpu_custom_call.1} parent=59 // pred_check_branch
          %468 = sbr.rel (%p466) target = $region68
        $region67: #{tpu_custom_call.1} parent=59 // pred_region
          %469 = dma.done %s462, 128
        $region68: #{tpu_custom_call.1} parent=59 // pred_fallthru
          _
        // Predicated region
        $region69: #{tpu_custom_call.1} parent=59 // pred_check
          %p470 = pneg %p116
        $region70: #{tpu_custom_call.1} parent=59 // pred_check_branch
          %472 = sbr.rel (%p470) target = $region72
        $region71: #{tpu_custom_call.1} parent=59 // pred_region
          %473 = dma.done [#allocation10], 16
        $region72: #{tpu_custom_call.1} parent=59 // pred_fallthru
          _
        // Predicated region
        $region73: #{tpu_custom_call.1} parent=59 // pred_check
          %p474 = pneg %p137
        $region74: #{tpu_custom_call.1} parent=59 // pred_check_branch
          %476 = sbr.rel (%p474) target = $region76
        $region75: #{tpu_custom_call.1} parent=59 // pred_region
          %477 = dma.done [#allocation13], 16
        $region76: #{tpu_custom_call.1} parent=59 // pred_fallthru
          _
        // Predicated region
        $region77: #{tpu_custom_call.1} parent=59 // pred_check
          %p478 = pneg %p158
        $region78: #{tpu_custom_call.1} parent=59 // pred_check_branch
          %480 = sbr.rel (%p478) target = $region80
        $region79: #{tpu_custom_call.1} parent=59 // pred_region
          %481 = dma.done [#allocation13], 16
        $region80: #{tpu_custom_call.1} parent=59 // pred_fallthru
          _
        // Predicated region
        $region81: #{tpu_custom_call.1} parent=59 // pred_check
          %p482 = pneg %p179
        $region82: #{tpu_custom_call.1} parent=59 // pred_check_branch
          %484 = sbr.rel (%p482) target = $region84
        $region83: #{tpu_custom_call.1} parent=59 // pred_region
          %485 = dma.done [#allocation16], 16
        $region84: #{tpu_custom_call.1} parent=59 // pred_fallthru
          _
        // Predicated region
        $region85: #{tpu_custom_call.1} parent=59 // pred_check
          %p486 = pneg %p200
        $region86: #{tpu_custom_call.1} parent=59 // pred_check_branch
          %488 = sbr.rel (%p486) target = $region88
        $region87: #{tpu_custom_call.1} parent=59 // pred_region
          %489 = dma.done [#allocation16], 2048
        $region88: #{tpu_custom_call.1} parent=59 // pred_fallthru
          _
        // Predicated region
        $region89: #{tpu_custom_call.1} parent=59 // pred_check
          %p490 = pneg %p221
        $region90: #{tpu_custom_call.1} parent=59 // pred_check_branch
          %492 = sbr.rel (%p490) target = $region92
        $region91: #{tpu_custom_call.1} parent=59 // pred_region
          %493 = dma.done [#allocation19], 2048
        $region92: #{tpu_custom_call.1} parent=59 // pred_fallthru
          _
        // Predicated region
        $region93: #{tpu_custom_call.1} parent=59 // pred_check
          %p494 = pneg %p242
        $region94: #{tpu_custom_call.1} parent=59 // pred_check_branch
          %496 = sbr.rel (%p494) target = $region96
        $region95: #{tpu_custom_call.1} parent=59 // pred_region
          %497 = dma.done [#allocation19], 2048
        $region96: #{tpu_custom_call.1} parent=59 // pred_fallthru
          _
        // Predicated region
        $region97: #{tpu_custom_call.1} parent=59 // pred_check
          %p498 = pneg %p263
        $region98: #{tpu_custom_call.1} parent=59 // pred_check_branch
          %500 = sbr.rel (%p498) target = $region100
        $region99: #{tpu_custom_call.1} parent=59 // pred_region
          %501 = dma.done [#allocation22], 1024
        $region100: #{tpu_custom_call.1} parent=59 // pred_fallthru
          _
        %s502 = sand.u32 %s56, 1
        %s503 = scalar_lea.sflag [#allocation7], %s502
        %s504 = sand.u32 %s56, 1
        %s505 = smul.addr %s504, 16
        %s506 = scalar_lea.vmem [#allocation6], %s505
        %p507 = pneg %p69
        %p508 = pneg %p66
        %s509 = sand.u32 %s34, 1
        %s510 = scalar_lea.sflag [#allocation10], %s509
        %s511 = sand.u32 %s82, 1
        %s512 = smul.addr %s511, 8
        %s513 = scalar_lea.vmem [#allocation9], %s512
        %p514 = pneg %p95
        %p515 = pneg %p92
        %p516 = pneg %p116
        %p517 = pneg %p113
        %p518 = pneg %p137
        %p519 = pneg %p134
        %p520 = pneg %p158
        %p521 = pneg %p155
        %p522 = pneg %p179
        %p523 = pneg %p176
        %p524 = pneg %p200
        %p525 = pneg %p197
        %p526 = pneg %p221
        %p527 = pneg %p218
        %p528 = pneg %p242
        %p529 = pneg %p239
        %p530 = pneg %p263
        %p531 = pneg %p260
        %p532 = pneg %p289
        %p533 = pneg %p286
        %s534 = sand.u32 %s276, 1
        %s535 = scalar_lea.sflag [#allocation8], %s534
        %s536 = sand.u32 %s276, 1
        %s537 = smul.addr %s536, 8
        %s538 = scalar_lea.vmem [#allocation23], %s537
        %s539 = smul.u32 2, %s39
        %p540 = scmp.eq.s32.totalorder %s39, 0
        // Predicated region
        $region101: #{tpu_custom_call.1} parent=59 // pred_check
          %p541 = pneg %p540
        $region102: #{tpu_custom_call.1} parent=59 // pred_check_branch
          %543 = sbr.rel (%p541) target = $region104
        $region103: #{tpu_custom_call.1} parent=59 // pred_region
          %v544 = vld [vmem:[%s465] sm:$0xff]
          %v545 = vld [vmem:[#allocation14] sm:$0x1]
          %v546 = vld [vmem:[#allocation15] sm:$0x1]
          %vm547 = vcmask 261120
          %v548 = vsel %vm547, %v544, 0.0
          %549 = vadd.xlane.f32.xlu0 %v548
          %v550 = vpop.xlane.xlu0 %549
          %v551 = vrcp.pop 32.0
          %v552 = vmul.f32 %v550, %v551
          %v553 = vsub.f32 %v544, %v552
          %v554 = vmul.f32 %v553, %v553
          %v555 = vsel %vm547, %v554, 0.0
          %556 = vadd.xlane.f32.xlu0 %v555
          %v557 = vpop.xlane.xlu0 %556
          %v558 = vmul.f32 %v557, %v551
          %v559 = vadd.f32 %v558, 1e-05
          %v560 = vrsqrt.pop %v559
          %v561 = vmul.f32 %v553, %v560
          %v563 = vlaneseq
          %v564 = vshrl.u32 %v563, 7
          %v565 = vsub.s32 0, %v564
          %v566 = vrot.slane %v545, %v565
          %v568 = vmul.f32 %v561, %v566
          %v570 = vlaneseq
          %v571 = vshrl.u32 %v570, 7
          %v572 = vsub.s32 0, %v571
          %v573 = vrot.slane %v546, %v572
          %v575 = vadd.f32 %v568, %v573
          %v576 = vld [vmem:[#allocation17] sm:$0xff]
          %v577 = vld [vmem:[#allocation17 + $0x8] sm:$0xff]
          %v578 = vld [vmem:[#allocation17 + $0x10] sm:$0xff]
          %v579 = vld [vmem:[#allocation17 + $0x18] sm:$0xff]
          %v581 = vsel %vm547, %v575, 0
          %583 = vmatprep.subr.mxu0 0.0
          %584 = vmatpush1.msra.mxu0 %v576
          %585 = vmatprep.subr.mxu0 0.0
          %586 = vmatpush1.msra.mxu0 %v577
          %587 = vmatprep.subr.mxu0 0.0
          %588 = vmatpush1.msra.mxu0 %v578
          %589 = vmatprep.subr.mxu0 0.0
          %590 = vmatpush1.msra.mxu0 %v579
          %591 = vmatprep.subr.mxu0 0.0
          %592 = vmatpush1.msra.mxu0 0.0
          %593 = vmatprep.subr.mxu0 0.0
          %594 = vmatpush1.msra.mxu0 0.0
          %595 = vmatprep.subr.mxu0 0.0
          %596 = vmatpush1.msra.mxu0 0.0
          %597 = vmatprep.subr.mxu0 0.0
          %598 = vmatpush1.msra.mxu0 0.0
          %599 = vmatprep.subr.mxu0 0.0
          %600 = vmatpush1.msra.mxu0 0.0
          %601 = vmatprep.subr.mxu0 0.0
          %602 = vmatpush1.msra.mxu0 0.0
          %603 = vmatprep.subr.mxu0 0.0
          %604 = vmatpush1.msra.mxu0 0.0
          %605 = vmatprep.subr.mxu0 0.0
          %606 = vmatpush1.msra.mxu0 0.0
          %607 = vmatprep.subr.mxu0 0.0
          %608 = vmatpush1.msra.mxu0 0.0
          %609 = vmatprep.subr.mxu0 0.0
          %610 = vmatpush1.msra.mxu0 0.0
          %611 = vmatprep.subr.mxu0 0.0
          %612 = vmatpush1.msra.mxu0 0.0
          %613 = vmatprep.subr.mxu0 0.0
          %614 = vmatpush1.msra.mxu0 0.0
          %615 = vmatprep.subr.mxu0 0.0
          %616 = vmatpush1.msra.mxu0 0.0
          %617 = vmatprep.subr.mxu0 0.0
          %618 = vmatpush1.msra.mxu0 0.0
          %619 = vmatprep.subr.mxu0 0.0
          %620 = vmatpush1.msra.mxu0 0.0
          %621 = vmatprep.subr.mxu0 0.0
          %622 = vmatpush1.msra.mxu0 0.0
          %623 = vmatprep.subr.mxu0 0.0
          %624 = vmatpush1.msra.mxu0 0.0
          %625 = vmatprep.subr.mxu0 0.0
          %626 = vmatpush1.msra.mxu0 0.0
          %627 = vmatprep.subr.mxu0 0.0
          %628 = vmatpush1.msra.mxu0 0.0
          %629 = vmatprep.subr.mxu0 0.0
          %630 = vmatpush1.msra.mxu0 0.0
          %631 = vmatprep.subr.mxu0 0.0
          %632 = vmatpush1.msra.mxu0 0.0
          %633 = vmatprep.subr.mxu0 0.0
          %634 = vmatpush1.msra.mxu0 0.0
          %635 = vmatprep.subr.mxu0 0.0
          %636 = vmatpush1.msra.mxu0 0.0
          %637 = vmatprep.subr.mxu0 0.0
          %638 = vmatpush1.msra.mxu0 0.0
          %639 = vmatprep.subr.mxu0 0.0
          %640 = vmatpush1.msra.mxu0 0.0
          %641 = vmatprep.subr.mxu0 0.0
          %642 = vmatpush1.msra.mxu0 0.0
          %643 = vmatprep.subr.mxu0 0.0
          %644 = vmatpush1.msra.mxu0 0.0
          %645 = vmatprep.subr.mxu0 0.0
          %646 = vmatpush1.msra.mxu0 0.0
          %647 = vmatprep.mubr.f32.mxu0 0.0
          %648 = vmatmul.mubr.f32.gmra.mrb[0].mxu0 %v581
          %v649 = vpop.f32.mrb[0].mxu0
          %v650 = vadd.f32 0.0, %v649
          %v651 = vpop.f32.mrb[0].mxu0
          %652 = vdwg.mxu0
          %vm653 = vcmask 130048
          %654 = vst.msk [vmem:[#allocation2] sm:$0xff] %vm653, %v650
          %vm655 = vcmask 7168
          %656 = vst.msk [vmem:[#allocation3] sm:$0xff] %vm655, -1e+30
          %657 = vst.msk [vmem:[#allocation4] sm:$0xff] %vm655, 0.0
          %658 = vst.msk [vmem:[#allocation5] sm:$0xff] %vm653, 0.0
          %v659 = vld [vmem:[#allocation18] sm:$0xff]
          %v660 = vld [vmem:[#allocation18 + $0x8] sm:$0xff]
          %v661 = vld [vmem:[#allocation18 + $0x10] sm:$0xff]
          %v662 = vld [vmem:[#allocation18 + $0x18] sm:$0xff]
          %663 = vmatprep.subr.mxu0 0.0
          %664 = vmatpush1.msra.mxu0 %v659
          %665 = vmatprep.subr.mxu0 0.0
          %666 = vmatpush1.msra.mxu0 %v660
          %667 = vmatprep.subr.mxu0 0.0
          %668 = vmatpush1.msra.mxu0 %v661
          %669 = vmatprep.subr.mxu0 0.0
          %670 = vmatpush1.msra.mxu0 %v662
          %671 = vmatprep.subr.mxu0 0.0
          %672 = vmatpush1.msra.mxu0 0.0
          %673 = vmatprep.subr.mxu0 0.0
          %674 = vmatpush1.msra.mxu0 0.0
          %675 = vmatprep.subr.mxu0 0.0
          %676 = vmatpush1.msra.mxu0 0.0
          %677 = vmatprep.subr.mxu0 0.0
          %678 = vmatpush1.msra.mxu0 0.0
          %679 = vmatprep.subr.mxu0 0.0
          %680 = vmatpush1.msra.mxu0 0.0
          %681 = vmatprep.subr.mxu0 0.0
          %682 = vmatpush1.msra.mxu0 0.0
          %683 = vmatprep.subr.mxu0 0.0
          %684 = vmatpush1.msra.mxu0 0.0
          %685 = vmatprep.subr.mxu0 0.0
          %686 = vmatpush1.msra.mxu0 0.0
          %687 = vmatprep.subr.mxu0 0.0
          %688 = vmatpush1.msra.mxu0 0.0
          %689 = vmatprep.subr.mxu0 0.0
          %690 = vmatpush1.msra.mxu0 0.0
          %691 = vmatprep.subr.mxu0 0.0
          %692 = vmatpush1.msra.mxu0 0.0
          %693 = vmatprep.subr.mxu0 0.0
          %694 = vmatpush1.msra.mxu0 0.0
          %695 = vmatprep.subr.mxu0 0.0
          %696 = vmatpush1.msra.mxu0 0.0
          %697 = vmatprep.subr.mxu0 0.0
          %698 = vmatpush1.msra.mxu0 0.0
          %699 = vmatprep.subr.mxu0 0.0
          %700 = vmatpush1.msra.mxu0 0.0
          %701 = vmatprep.subr.mxu0 0.0
          %702 = vmatpush1.msra.mxu0 0.0
          %703 = vmatprep.subr.mxu0 0.0
          %704 = vmatpush1.msra.mxu0 0.0
          %705 = vmatprep.subr.mxu0 0.0
          %706 = vmatpush1.msra.mxu0 0.0
          %707 = vmatprep.subr.mxu0 0.0
          %708 = vmatpush1.msra.mxu0 0.0
          %709 = vmatprep.subr.mxu0 0.0
          %710 = vmatpush1.msra.mxu0 0.0
          %711 = vmatprep.subr.mxu0 0.0
          %712 = vmatpush1.msra.mxu0 0.0
          %713 = vmatprep.subr.mxu0 0.0
          %714 = vmatpush1.msra.mxu0 0.0
          %715 = vmatprep.subr.mxu0 0.0
          %716 = vmatpush1.msra.mxu0 0.0
          %717 = vmatprep.subr.mxu0 0.0
          %718 = vmatpush1.msra.mxu0 0.0
          %719 = vmatprep.subr.mxu0 0.0
          %720 = vmatpush1.msra.mxu0 0.0
          %721 = vmatprep.subr.mxu0 0.0
          %722 = vmatpush1.msra.mxu0 0.0
          %723 = vmatprep.subr.mxu0 0.0
          %724 = vmatpush1.msra.mxu0 0.0
          %725 = vmatprep.subr.mxu0 0.0
          %726 = vmatpush1.msra.mxu0 0.0
          %727 = vmatprep.mubr.f32.mxu0 0.0
          %728 = vmatmul.mubr.f32.gmra.mrb[0].mxu0 %v581
          %v729 = vpop.f32.mrb[0].mxu0
          %v730 = vadd.f32 0.0, %v729
          %v731 = vpop.f32.mrb[0].mxu0
          %732 = vdwg.mxu0
          %v733 = vld [vmem:[#allocation20] sm:$0xff]
          %v734 = vld [vmem:[#allocation20 + $0x8] sm:$0xff]
          %v735 = vld [vmem:[#allocation20 + $0x10] sm:$0xff]
          %v736 = vld [vmem:[#allocation20 + $0x18] sm:$0xff]
          %737 = vmatprep.subr.mxu0 0.0
          %738 = vmatpush1.msra.mxu0 %v733
          %739 = vmatprep.subr.mxu0 0.0
          %740 = vmatpush1.msra.mxu0 %v734
          %741 = vmatprep.subr.mxu0 0.0
          %742 = vmatpush1.msra.mxu0 %v735
          %743 = vmatprep.subr.mxu0 0.0
          %744 = vmatpush1.msra.mxu0 %v736
          %745 = vmatprep.subr.mxu0 0.0
          %746 = vmatpush1.msra.mxu0 0.0
          %747 = vmatprep.subr.mxu0 0.0
          %748 = vmatpush1.msra.mxu0 0.0
          %749 = vmatprep.subr.mxu0 0.0
          %750 = vmatpush1.msra.mxu0 0.0
          %751 = vmatprep.subr.mxu0 0.0
          %752 = vmatpush1.msra.mxu0 0.0
          %753 = vmatprep.subr.mxu0 0.0
          %754 = vmatpush1.msra.mxu0 0.0
          %755 = vmatprep.subr.mxu0 0.0
          %756 = vmatpush1.msra.mxu0 0.0
          %757 = vmatprep.subr.mxu0 0.0
          %758 = vmatpush1.msra.mxu0 0.0
          %759 = vmatprep.subr.mxu0 0.0
          %760 = vmatpush1.msra.mxu0 0.0
          %761 = vmatprep.subr.mxu0 0.0
          %762 = vmatpush1.msra.mxu0 0.0
          %763 = vmatprep.subr.mxu0 0.0
          %764 = vmatpush1.msra.mxu0 0.0
          %765 = vmatprep.subr.mxu0 0.0
          %766 = vmatpush1.msra.mxu0 0.0
          %767 = vmatprep.subr.mxu0 0.0
          %768 = vmatpush1.msra.mxu0 0.0
          %769 = vmatprep.subr.mxu0 0.0
          %770 = vmatpush1.msra.mxu0 0.0
          %771 = vmatprep.subr.mxu0 0.0
          %772 = vmatpush1.msra.mxu0 0.0
          %773 = vmatprep.subr.mxu0 0.0
          %774 = vmatpush1.msra.mxu0 0.0
          %775 = vmatprep.subr.mxu0 0.0
          %776 = vmatpush1.msra.mxu0 0.0
          %777 = vmatprep.subr.mxu0 0.0
          %778 = vmatpush1.msra.mxu0 0.0
          %779 = vmatprep.subr.mxu0 0.0
          %780 = vmatpush1.msra.mxu0 0.0
          %781 = vmatprep.subr.mxu0 0.0
          %782 = vmatpush1.msra.mxu0 0.0
          %783 = vmatprep.subr.mxu0 0.0
          %784 = vmatpush1.msra.mxu0 0.0
          %785 = vmatprep.subr.mxu0 0.0
          %786 = vmatpush1.msra.mxu0 0.0
          %787 = vmatprep.subr.mxu0 0.0
          %788 = vmatpush1.msra.mxu0 0.0
          %789 = vmatprep.subr.mxu0 0.0
          %790 = vmatpush1.msra.mxu0 0.0
          %791 = vmatprep.subr.mxu0 0.0
          %792 = vmatpush1.msra.mxu0 0.0
          %793 = vmatprep.subr.mxu0 0.0
          %794 = vmatpush1.msra.mxu0 0.0
          %795 = vmatprep.subr.mxu0 0.0
          %796 = vmatpush1.msra.mxu0 0.0
          %797 = vmatprep.subr.mxu0 0.0
          %798 = vmatpush1.msra.mxu0 0.0
          %799 = vmatprep.subr.mxu0 0.0
          %800 = vmatpush1.msra.mxu0 0.0
          %801 = vmatprep.mubr.f32.mxu0 0.0
          %802 = vmatmul.mubr.f32.gmra.mrb[0].mxu0 %v581
          %v803 = vpop.f32.mrb[0].mxu0
          %v804 = vadd.f32 0.0, %v803
          %v805 = vpop.f32.mrb[0].mxu0
          %806 = vdwg.mxu0
          %v807 = vld [vmem:[#allocation2] sm:$0xff]
          %v809 = vsel %vm653, %v807, 0
          %v812 = vsel %vm653, %v730, 0
          %814 = vmatprep.subr.mxu0 0.0
          %815 = vmatpush1.xpose.msra.mxu0 %v812
          %816 = vmatprep.subr.mxu0 0.0
          %817 = vmatpush1.xpose.msra.mxu0 0.0
          %818 = vmatprep.subr.mxu0 0.0
          %819 = vmatpush1.xpose.msra.mxu0 0.0
          %820 = vmatprep.subr.mxu0 0.0
          %821 = vmatpush1.xpose.msra.mxu0 0.0
          %822 = vmatprep.subr.mxu0 0.0
          %823 = vmatpush1.xpose.msra.mxu0 0.0
          %824 = vmatprep.subr.mxu0 0.0
          %825 = vmatpush1.xpose.msra.mxu0 0.0
          %826 = vmatprep.subr.mxu0 0.0
          %827 = vmatpush1.xpose.msra.mxu0 0.0
          %828 = vmatprep.subr.mxu0 0.0
          %829 = vmatpush1.xpose.msra.mxu0 0.0
          %830 = vmatprep.subr.mxu0 0.0
          %831 = vmatpush1.xpose.msra.mxu0 0.0
          %832 = vmatprep.subr.mxu0 0.0
          %833 = vmatpush1.xpose.msra.mxu0 0.0
          %834 = vmatprep.subr.mxu0 0.0
          %835 = vmatpush1.xpose.msra.mxu0 0.0
          %836 = vmatprep.subr.mxu0 0.0
          %837 = vmatpush1.xpose.msra.mxu0 0.0
          %838 = vmatprep.subr.mxu0 0.0
          %839 = vmatpush1.xpose.msra.mxu0 0.0
          %840 = vmatprep.subr.mxu0 0.0
          %841 = vmatpush1.xpose.msra.mxu0 0.0
          %842 = vmatprep.subr.mxu0 0.0
          %843 = vmatpush1.xpose.msra.mxu0 0.0
          %844 = vmatprep.subr.mxu0 0.0
          %845 = vmatpush1.xpose.msra.mxu0 0.0
          %846 = vmatprep.subr.mxu0 0.0
          %847 = vmatpush1.xpose.msra.mxu0 0.0
          %848 = vmatprep.subr.mxu0 0.0
          %849 = vmatpush1.xpose.msra.mxu0 0.0
          %850 = vmatprep.subr.mxu0 0.0
          %851 = vmatpush1.xpose.msra.mxu0 0.0
          %852 = vmatprep.subr.mxu0 0.0
          %853 = vmatpush1.xpose.msra.mxu0 0.0
          %854 = vmatprep.subr.mxu0 0.0
          %855 = vmatpush1.xpose.msra.mxu0 0.0
          %856 = vmatprep.subr.mxu0 0.0
          %857 = vmatpush1.xpose.msra.mxu0 0.0
          %858 = vmatprep.subr.mxu0 0.0
          %859 = vmatpush1.xpose.msra.mxu0 0.0
          %860 = vmatprep.subr.mxu0 0.0
          %861 = vmatpush1.xpose.msra.mxu0 0.0
          %862 = vmatprep.subr.mxu0 0.0
          %863 = vmatpush1.xpose.msra.mxu0 0.0
          %864 = vmatprep.subr.mxu0 0.0
          %865 = vmatpush1.xpose.msra.mxu0 0.0
          %866 = vmatprep.subr.mxu0 0.0
          %867 = vmatpush1.xpose.msra.mxu0 0.0
          %868 = vmatprep.subr.mxu0 0.0
          %869 = vmatpush1.xpose.msra.mxu0 0.0
          %870 = vmatprep.subr.mxu0 0.0
          %871 = vmatpush1.xpose.msra.mxu0 0.0
          %872 = vmatprep.subr.mxu0 0.0
          %873 = vmatpush1.xpose.msra.mxu0 0.0
          %874 = vmatprep.subr.mxu0 0.0
          %875 = vmatpush1.xpose.msra.mxu0 0.0
          %876 = vmatprep.subr.mxu0 0.0
          %877 = vmatpush1.xpose.msra.mxu0 0.0
          %878 = vmatprep.mubr.f32.mxu0 0.0
          %879 = vmatmul.mubr.f32.gmra.mrb[0].mxu0 %v809
          %v880 = vpop.f32.mrb[0].mxu0
          %v881 = vadd.f32 0.0, %v880
          %v882 = vpop.f32.mrb[0].mxu0
          %883 = vdwg.mxu0
          %v884 = vld [vmem:[#allocation3] sm:$0xff]
          %vm885 = vcmask 64512
          %v886 = vsel %vm885, %v881, -inf
          %887 = vmax.xlane.f32.xlu0 %v886
          %v888 = vpop.xlane.xlu0 %887
          %v889 = vmax.f32 %v884, %v888
          %v890 = vsub.f32 %v884, %v889
          %v891 = vmul.f32 %v890, 1.442695
          %v892 = vpow.pop %v891
          %894 = vset.pattern.permute.xlu0 0
          %895 = vperm.xlu0 %894, %v889
          %v896 = vpop.permute.xlu0 %895
          %v898 = vsub.f32 %v881, %v896
          %v899 = vmul.f32 %v898, 1.442695
          %v900 = vpow.pop %v899
          %v901 = vld [vmem:[#allocation4] sm:$0xff]
          %v902 = vmul.f32 %v892, %v901
          %v903 = vsel %vm885, %v900, 0.0
          %904 = vadd.xlane.f32.xlu0 %v903
          %v905 = vpop.xlane.xlu0 %904
          %v906 = vadd.f32 %v902, %v905
          %907 = vst.msk [vmem:[#allocation4] sm:$0xff] %vm655, %v906
          %v908 = vld [vmem:[#allocation5] sm:$0xff]
          %910 = vset.pattern.permute.xlu0 0
          %911 = vperm.xlu0 %910, %v892
          %v912 = vpop.permute.xlu0 %911
          %v914 = vmul.f32 %v912, %v908
          %v916 = vsel %vm885, %v900, 0
          %918 = vmatprep.subr.mxu0 0.0
          %919 = vmatpush1.msra.mxu0 %v804
          %920 = vmatprep.subr.mxu0 0.0
          %921 = vmatpush1.msra.mxu0 0.0
          %922 = vmatprep.subr.mxu0 0.0
          %923 = vmatpush1.msra.mxu0 0.0
          %924 = vmatprep.subr.mxu0 0.0
          %925 = vmatpush1.msra.mxu0 0.0
          %926 = vmatprep.subr.mxu0 0.0
          %927 = vmatpush1.msra.mxu0 0.0
          %928 = vmatprep.subr.mxu0 0.0
          %929 = vmatpush1.msra.mxu0 0.0
          %930 = vmatprep.subr.mxu0 0.0
          %931 = vmatpush1.msra.mxu0 0.0
          %932 = vmatprep.subr.mxu0 0.0
          %933 = vmatpush1.msra.mxu0 0.0
          %934 = vmatprep.subr.mxu0 0.0
          %935 = vmatpush1.msra.mxu0 0.0
          %936 = vmatprep.subr.mxu0 0.0
          %937 = vmatpush1.msra.mxu0 0.0
          %938 = vmatprep.subr.mxu0 0.0
          %939 = vmatpush1.msra.mxu0 0.0
          %940 = vmatprep.subr.mxu0 0.0
          %941 = vmatpush1.msra.mxu0 0.0
          %942 = vmatprep.subr.mxu0 0.0
          %943 = vmatpush1.msra.mxu0 0.0
          %944 = vmatprep.subr.mxu0 0.0
          %945 = vmatpush1.msra.mxu0 0.0
          %946 = vmatprep.subr.mxu0 0.0
          %947 = vmatpush1.msra.mxu0 0.0
          %948 = vmatprep.subr.mxu0 0.0
          %949 = vmatpush1.msra.mxu0 0.0
          %950 = vmatprep.subr.mxu0 0.0
          %951 = vmatpush1.msra.mxu0 0.0
          %952 = vmatprep.subr.mxu0 0.0
          %953 = vmatpush1.msra.mxu0 0.0
          %954 = vmatprep.subr.mxu0 0.0
          %955 = vmatpush1.msra.mxu0 0.0
          %956 = vmatprep.subr.mxu0 0.0
          %957 = vmatpush1.msra.mxu0 0.0
          %958 = vmatprep.subr.mxu0 0.0
          %959 = vmatpush1.msra.mxu0 0.0
          %960 = vmatprep.subr.mxu0 0.0
          %961 = vmatpush1.msra.mxu0 0.0
          %962 = vmatprep.subr.mxu0 0.0
          %963 = vmatpush1.msra.mxu0 0.0
          %964 = vmatprep.subr.mxu0 0.0
          %965 = vmatpush1.msra.mxu0 0.0
          %966 = vmatprep.subr.mxu0 0.0
          %967 = vmatpush1.msra.mxu0 0.0
          %968 = vmatprep.subr.mxu0 0.0
          %969 = vmatpush1.msra.mxu0 0.0
          %970 = vmatprep.subr.mxu0 0.0
          %971 = vmatpush1.msra.mxu0 0.0
          %972 = vmatprep.subr.mxu0 0.0
          %973 = vmatpush1.msra.mxu0 0.0
          %974 = vmatprep.subr.mxu0 0.0
          %975 = vmatpush1.msra.mxu0 0.0
          %976 = vmatprep.subr.mxu0 0.0
          %977 = vmatpush1.msra.mxu0 0.0
          %978 = vmatprep.subr.mxu0 0.0
          %979 = vmatpush1.msra.mxu0 0.0
          %980 = vmatprep.subr.mxu0 0.0
          %981 = vmatpush1.msra.mxu0 0.0
          %982 = vmatprep.mubr.f32.mxu0 0.0
          %983 = vmatmul.mubr.f32.gmra.mrb[0].mxu0 %v916
          %v984 = vpop.f32.mrb[0].mxu0
          %v985 = vadd.f32 0.0, %v984
          %v986 = vpop.f32.mrb[0].mxu0
          %987 = vdwg.mxu0
          %v988 = vadd.f32 %v914, %v985
          %989 = vst.msk [vmem:[#allocation5] sm:$0xff] %vm653, %v988
          %990 = vst.msk [vmem:[#allocation3] sm:$0xff] %vm655, %v889
          %s991 = scalar_lea.vmem [#allocation17], 32
          %v992 = vld [vmem:[%s991] sm:$0xff]
          %v993 = vld [vmem:[%s991 + $0x8] sm:$0xff]
          %v994 = vld [vmem:[%s991 + $0x10] sm:$0xff]
          %v995 = vld [vmem:[%s991 + $0x18] sm:$0xff]
          %996 = vmatprep.subr.mxu0 0.0
          %997 = vmatpush1.msra.mxu0 %v992
          %998 = vmatprep.subr.mxu0 0.0
          %999 = vmatpush1.msra.mxu0 %v993
          %1000 = vmatprep.subr.mxu0 0.0
          %1001 = vmatpush1.msra.mxu0 %v994
          %1002 = vmatprep.subr.mxu0 0.0
          %1003 = vmatpush1.msra.mxu0 %v995
          %1004 = vmatprep.subr.mxu0 0.0
          %1005 = vmatpush1.msra.mxu0 0.0
          %1006 = vmatprep.subr.mxu0 0.0
          %1007 = vmatpush1.msra.mxu0 0.0
          %1008 = vmatprep.subr.mxu0 0.0
          %1009 = vmatpush1.msra.mxu0 0.0
          %1010 = vmatprep.subr.mxu0 0.0
          %1011 = vmatpush1.msra.mxu0 0.0
          %1012 = vmatprep.subr.mxu0 0.0
          %1013 = vmatpush1.msra.mxu0 0.0
          %1014 = vmatprep.subr.mxu0 0.0
          %1015 = vmatpush1.msra.mxu0 0.0
          %1016 = vmatprep.subr.mxu0 0.0
          %1017 = vmatpush1.msra.mxu0 0.0
          %1018 = vmatprep.subr.mxu0 0.0
          %1019 = vmatpush1.msra.mxu0 0.0
          %1020 = vmatprep.subr.mxu0 0.0
          %1021 = vmatpush1.msra.mxu0 0.0
          %1022 = vmatprep.subr.mxu0 0.0
          %1023 = vmatpush1.msra.mxu0 0.0
          %1024 = vmatprep.subr.mxu0 0.0
          %1025 = vmatpush1.msra.mxu0 0.0
          %1026 = vmatprep.subr.mxu0 0.0
          %1027 = vmatpush1.msra.mxu0 0.0
          %1028 = vmatprep.subr.mxu0 0.0
          %1029 = vmatpush1.msra.mxu0 0.0
          %1030 = vmatprep.subr.mxu0 0.0
          %1031 = vmatpush1.msra.mxu0 0.0
          %1032 = vmatprep.subr.mxu0 0.0
          %1033 = vmatpush1.msra.mxu0 0.0
          %1034 = vmatprep.subr.mxu0 0.0
          %1035 = vmatpush1.msra.mxu0 0.0
          %1036 = vmatprep.subr.mxu0 0.0
          %1037 = vmatpush1.msra.mxu0 0.0
          %1038 = vmatprep.subr.mxu0 0.0
          %1039 = vmatpush1.msra.mxu0 0.0
          %1040 = vmatprep.subr.mxu0 0.0
          %1041 = vmatpush1.msra.mxu0 0.0
          %1042 = vmatprep.subr.mxu0 0.0
          %1043 = vmatpush1.msra.mxu0 0.0
          %1044 = vmatprep.subr.mxu0 0.0
          %1045 = vmatpush1.msra.mxu0 0.0
          %1046 = vmatprep.subr.mxu0 0.0
          %1047 = vmatpush1.msra.mxu0 0.0
          %1048 = vmatprep.subr.mxu0 0.0
          %1049 = vmatpush1.msra.mxu0 0.0
          %1050 = vmatprep.subr.mxu0 0.0
          %1051 = vmatpush1.msra.mxu0 0.0
          %1052 = vmatprep.subr.mxu0 0.0
          %1053 = vmatpush1.msra.mxu0 0.0
          %1054 = vmatprep.subr.mxu0 0.0
          %1055 = vmatpush1.msra.mxu0 0.0
          %1056 = vmatprep.subr.mxu0 0.0
          %1057 = vmatpush1.msra.mxu0 0.0
          %1058 = vmatprep.subr.mxu0 0.0
          %1059 = vmatpush1.msra.mxu0 0.0
          %1060 = vmatprep.mubr.f32.mxu0 0.0
          %1061 = vmatmul.mubr.f32.gmra.mrb[0].mxu0 %v581
          %v1062 = vpop.f32.mrb[0].mxu0
          %v1063 = vadd.f32 0.0, %v1062
          %v1064 = vpop.f32.mrb[0].mxu0
          %1065 = vdwg.mxu0
          %s1066 = scalar_lea.vmem [#allocation2], 8
          %1067 = vst.msk [vmem:[%s1066] sm:$0xff] %vm653, %v1063
          %s1068 = scalar_lea.vmem [#allocation3], 8
          %1069 = vst.msk [vmem:[%s1068] sm:$0xff] %vm655, -1e+30
          %s1070 = scalar_lea.vmem [#allocation4], 8
          %1071 = vst.msk [vmem:[%s1070] sm:$0xff] %vm655, 0.0
          %s1072 = scalar_lea.vmem [#allocation5], 8
          %1073 = vst.msk [vmem:[%s1072] sm:$0xff] %vm653, 0.0
          %s1074 = scalar_lea.vmem [#allocation18], 32
          %v1075 = vld [vmem:[%s1074] sm:$0xff]
          %v1076 = vld [vmem:[%s1074 + $0x8] sm:$0xff]
          %v1077 = vld [vmem:[%s1074 + $0x10] sm:$0xff]
          %v1078 = vld [vmem:[%s1074 + $0x18] sm:$0xff]
          %1079 = vmatprep.subr.mxu0 0.0
          %1080 = vmatpush1.msra.mxu0 %v1075
          %1081 = vmatprep.subr.mxu0 0.0
          %1082 = vmatpush1.msra.mxu0 %v1076
          %1083 = vmatprep.subr.mxu0 0.0
          %1084 = vmatpush1.msra.mxu0 %v1077
          %1085 = vmatprep.subr.mxu0 0.0
          %1086 = vmatpush1.msra.mxu0 %v1078
          %1087 = vmatprep.subr.mxu0 0.0
          %1088 = vmatpush1.msra.mxu0 0.0
          %1089 = vmatprep.subr.mxu0 0.0
          %1090 = vmatpush1.msra.mxu0 0.0
          %1091 = vmatprep.subr.mxu0 0.0
          %1092 = vmatpush1.msra.mxu0 0.0
          %1093 = vmatprep.subr.mxu0 0.0
          %1094 = vmatpush1.msra.mxu0 0.0
          %1095 = vmatprep.subr.mxu0 0.0
          %1096 = vmatpush1.msra.mxu0 0.0
          %1097 = vmatprep.subr.mxu0 0.0
          %1098 = vmatpush1.msra.mxu0 0.0
          %1099 = vmatprep.subr.mxu0 0.0
          %1100 = vmatpush1.msra.mxu0 0.0
          %1101 = vmatprep.subr.mxu0 0.0
          %1102 = vmatpush1.msra.mxu0 0.0
          %1103 = vmatprep.subr.mxu0 0.0
          %1104 = vmatpush1.msra.mxu0 0.0
          %1105 = vmatprep.subr.mxu0 0.0
          %1106 = vmatpush1.msra.mxu0 0.0
          %1107 = vmatprep.subr.mxu0 0.0
          %1108 = vmatpush1.msra.mxu0 0.0
          %1109 = vmatprep.subr.mxu0 0.0
          %1110 = vmatpush1.msra.mxu0 0.0
          %1111 = vmatprep.subr.mxu0 0.0
          %1112 = vmatpush1.msra.mxu0 0.0
          %1113 = vmatprep.subr.mxu0 0.0
          %1114 = vmatpush1.msra.mxu0 0.0
          %1115 = vmatprep.subr.mxu0 0.0
          %1116 = vmatpush1.msra.mxu0 0.0
          %1117 = vmatprep.subr.mxu0 0.0
          %1118 = vmatpush1.msra.mxu0 0.0
          %1119 = vmatprep.subr.mxu0 0.0
          %1120 = vmatpush1.msra.mxu0 0.0
          %1121 = vmatprep.subr.mxu0 0.0
          %1122 = vmatpush1.msra.mxu0 0.0
          %1123 = vmatprep.subr.mxu0 0.0
          %1124 = vmatpush1.msra.mxu0 0.0
          %1125 = vmatprep.subr.mxu0 0.0
          %1126 = vmatpush1.msra.mxu0 0.0
          %1127 = vmatprep.subr.mxu0 0.0
          %1128 = vmatpush1.msra.mxu0 0.0
          %1129 = vmatprep.subr.mxu0 0.0
          %1130 = vmatpush1.msra.mxu0 0.0
          %1131 = vmatprep.subr.mxu0 0.0
          %1132 = vmatpush1.msra.mxu0 0.0
          %1133 = vmatprep.subr.mxu0 0.0
          %1134 = vmatpush1.msra.mxu0 0.0
          %1135 = vmatprep.subr.mxu0 0.0
          %1136 = vmatpush1.msra.mxu0 0.0
          %1137 = vmatprep.subr.mxu0 0.0
          %1138 = vmatpush1.msra.mxu0 0.0
          %1139 = vmatprep.subr.mxu0 0.0
          %1140 = vmatpush1.msra.mxu0 0.0
          %1141 = vmatprep.subr.mxu0 0.0
          %1142 = vmatpush1.msra.mxu0 0.0
          %1143 = vmatprep.mubr.f32.mxu0 0.0
          %1144 = vmatmul.mubr.f32.gmra.mrb[0].mxu0 %v581
          %v1145 = vpop.f32.mrb[0].mxu0
          %v1146 = vadd.f32 0.0, %v1145
          %v1147 = vpop.f32.mrb[0].mxu0
          %1148 = vdwg.mxu0
          %s1149 = scalar_lea.vmem [#allocation20], 32
          %v1150 = vld [vmem:[%s1149] sm:$0xff]
          %v1151 = vld [vmem:[%s1149 + $0x8] sm:$0xff]
          %v1152 = vld [vmem:[%s1149 + $0x10] sm:$0xff]
          %v1153 = vld [vmem:[%s1149 + $0x18] sm:$0xff]
          %1154 = vmatprep.subr.mxu0 0.0
          %1155 = vmatpush1.msra.mxu0 %v1150
          %1156 = vmatprep.subr.mxu0 0.0
          %1157 = vmatpush1.msra.mxu0 %v1151
          %1158 = vmatprep.subr.mxu0 0.0
          %1159 = vmatpush1.msra.mxu0 %v1152
          %1160 = vmatprep.subr.mxu0 0.0
          %1161 = vmatpush1.msra.mxu0 %v1153
          %1162 = vmatprep.subr.mxu0 0.0
          %1163 = vmatpush1.msra.mxu0 0.0
          %1164 = vmatprep.subr.mxu0 0.0
          %1165 = vmatpush1.msra.mxu0 0.0
          %1166 = vmatprep.subr.mxu0 0.0
          %1167 = vmatpush1.msra.mxu0 0.0
          %1168 = vmatprep.subr.mxu0 0.0
          %1169 = vmatpush1.msra.mxu0 0.0
          %1170 = vmatprep.subr.mxu0 0.0
          %1171 = vmatpush1.msra.mxu0 0.0
          %1172 = vmatprep.subr.mxu0 0.0
          %1173 = vmatpush1.msra.mxu0 0.0
          %1174 = vmatprep.subr.mxu0 0.0
          %1175 = vmatpush1.msra.mxu0 0.0
          %1176 = vmatprep.subr.mxu0 0.0
          %1177 = vmatpush1.msra.mxu0 0.0
          %1178 = vmatprep.subr.mxu0 0.0
          %1179 = vmatpush1.msra.mxu0 0.0
          %1180 = vmatprep.subr.mxu0 0.0
          %1181 = vmatpush1.msra.mxu0 0.0
          %1182 = vmatprep.subr.mxu0 0.0
          %1183 = vmatpush1.msra.mxu0 0.0
          %1184 = vmatprep.subr.mxu0 0.0
          %1185 = vmatpush1.msra.mxu0 0.0
          %1186 = vmatprep.subr.mxu0 0.0
          %1187 = vmatpush1.msra.mxu0 0.0
          %1188 = vmatprep.subr.mxu0 0.0
          %1189 = vmatpush1.msra.mxu0 0.0
          %1190 = vmatprep.subr.mxu0 0.0
          %1191 = vmatpush1.msra.mxu0 0.0
          %1192 = vmatprep.subr.mxu0 0.0
          %1193 = vmatpush1.msra.mxu0 0.0
          %1194 = vmatprep.subr.mxu0 0.0
          %1195 = vmatpush1.msra.mxu0 0.0
          %1196 = vmatprep.subr.mxu0 0.0
          %1197 = vmatpush1.msra.mxu0 0.0
          %1198 = vmatprep.subr.mxu0 0.0
          %1199 = vmatpush1.msra.mxu0 0.0
          %1200 = vmatprep.subr.mxu0 0.0
          %1201 = vmatpush1.msra.mxu0 0.0
          %1202 = vmatprep.subr.mxu0 0.0
          %1203 = vmatpush1.msra.mxu0 0.0
          %1204 = vmatprep.subr.mxu0 0.0
          %1205 = vmatpush1.msra.mxu0 0.0
          %1206 = vmatprep.subr.mxu0 0.0
          %1207 = vmatpush1.msra.mxu0 0.0
          %1208 = vmatprep.subr.mxu0 0.0
          %1209 = vmatpush1.msra.mxu0 0.0
          %1210 = vmatprep.subr.mxu0 0.0
          %1211 = vmatpush1.msra.mxu0 0.0
          %1212 = vmatprep.subr.mxu0 0.0
          %1213 = vmatpush1.msra.mxu0 0.0
          %1214 = vmatprep.subr.mxu0 0.0
          %1215 = vmatpush1.msra.mxu0 0.0
          %1216 = vmatprep.subr.mxu0 0.0
          %1217 = vmatpush1.msra.mxu0 0.0
          %1218 = vmatprep.mubr.f32.mxu0 0.0
          %1219 = vmatmul.mubr.f32.gmra.mrb[0].mxu0 %v581
          %v1220 = vpop.f32.mrb[0].mxu0
          %v1221 = vadd.f32 0.0, %v1220
          %v1222 = vpop.f32.mrb[0].mxu0
          %1223 = vdwg.mxu0
          %v1224 = vld [vmem:[%s1066] sm:$0xff]
          %v1226 = vsel %vm653, %v1224, 0
          %v1229 = vsel %vm653, %v1146, 0
          %1231 = vmatprep.subr.mxu0 0.0
          %1232 = vmatpush1.xpose.msra.mxu0 %v1229
          %1233 = vmatprep.subr.mxu0 0.0
          %1234 = vmatpush1.xpose.msra.mxu0 0.0
          %1235 = vmatprep.subr.mxu0 0.0
          %1236 = vmatpush1.xpose.msra.mxu0 0.0
          %1237 = vmatprep.subr.mxu0 0.0
          %1238 = vmatpush1.xpose.msra.mxu0 0.0
          %1239 = vmatprep.subr.mxu0 0.0
          %1240 = vmatpush1.xpose.msra.mxu0 0.0
          %1241 = vmatprep.subr.mxu0 0.0
          %1242 = vmatpush1.xpose.msra.mxu0 0.0
          %1243 = vmatprep.subr.mxu0 0.0
          %1244 = vmatpush1.xpose.msra.mxu0 0.0
          %1245 = vmatprep.subr.mxu0 0.0
          %1246 = vmatpush1.xpose.msra.mxu0 0.0
          %1247 = vmatprep.subr.mxu0 0.0
          %1248 = vmatpush1.xpose.msra.mxu0 0.0
          %1249 = vmatprep.subr.mxu0 0.0
          %1250 = vmatpush1.xpose.msra.mxu0 0.0
          %1251 = vmatprep.subr.mxu0 0.0
          %1252 = vmatpush1.xpose.msra.mxu0 0.0
          %1253 = vmatprep.subr.mxu0 0.0
          %1254 = vmatpush1.xpose.msra.mxu0 0.0
          %1255 = vmatprep.subr.mxu0 0.0
          %1256 = vmatpush1.xpose.msra.mxu0 0.0
          %1257 = vmatprep.subr.mxu0 0.0
          %1258 = vmatpush1.xpose.msra.mxu0 0.0
          %1259 = vmatprep.subr.mxu0 0.0
          %1260 = vmatpush1.xpose.msra.mxu0 0.0
          %1261 = vmatprep.subr.mxu0 0.0
          %1262 = vmatpush1.xpose.msra.mxu0 0.0
          %1263 = vmatprep.subr.mxu0 0.0
          %1264 = vmatpush1.xpose.msra.mxu0 0.0
          %1265 = vmatprep.subr.mxu0 0.0
          %1266 = vmatpush1.xpose.msra.mxu0 0.0
          %1267 = vmatprep.subr.mxu0 0.0
          %1268 = vmatpush1.xpose.msra.mxu0 0.0
          %1269 = vmatprep.subr.mxu0 0.0
          %1270 = vmatpush1.xpose.msra.mxu0 0.0
          %1271 = vmatprep.subr.mxu0 0.0
          %1272 = vmatpush1.xpose.msra.mxu0 0.0
          %1273 = vmatprep.subr.mxu0 0.0
          %1274 = vmatpush1.xpose.msra.mxu0 0.0
          %1275 = vmatprep.subr.mxu0 0.0
          %1276 = vmatpush1.xpose.msra.mxu0 0.0
          %1277 = vmatprep.subr.mxu0 0.0
          %1278 = vmatpush1.xpose.msra.mxu0 0.0
          %1279 = vmatprep.subr.mxu0 0.0
          %1280 = vmatpush1.xpose.msra.mxu0 0.0
          %1281 = vmatprep.subr.mxu0 0.0
          %1282 = vmatpush1.xpose.msra.mxu0 0.0
          %1283 = vmatprep.subr.mxu0 0.0
          %1284 = vmatpush1.xpose.msra.mxu0 0.0
          %1285 = vmatprep.subr.mxu0 0.0
          %1286 = vmatpush1.xpose.msra.mxu0 0.0
          %1287 = vmatprep.subr.mxu0 0.0
          %1288 = vmatpush1.xpose.msra.mxu0 0.0
          %1289 = vmatprep.subr.mxu0 0.0
          %1290 = vmatpush1.xpose.msra.mxu0 0.0
          %1291 = vmatprep.subr.mxu0 0.0
          %1292 = vmatpush1.xpose.msra.mxu0 0.0
          %1293 = vmatprep.subr.mxu0 0.0
          %1294 = vmatpush1.xpose.msra.mxu0 0.0
          %1295 = vmatprep.mubr.f32.mxu0 0.0
          %1296 = vmatmul.mubr.f32.gmra.mrb[0].mxu0 %v1226
          %v1297 = vpop.f32.mrb[0].mxu0
          %v1298 = vadd.f32 0.0, %v1297
          %v1299 = vpop.f32.mrb[0].mxu0
          %1300 = vdwg.mxu0
          %v1301 = vld [vmem:[%s1068] sm:$0xff]
          %v1302 = vsel %vm885, %v1298, -inf
          %1303 = vmax.xlane.f32.xlu0 %v1302
          %v1304 = vpop.xlane.xlu0 %1303
          %v1305 = vmax.f32 %v1301, %v1304
          %v1306 = vsub.f32 %v1301, %v1305
          %v1307 = vmul.f32 %v1306, 1.442695
          %v1308 = vpow.pop %v1307
          %1310 = vset.pattern.permute.xlu0 0
          %1311 = vperm.xlu0 %1310, %v1305
          %v1312 = vpop.permute.xlu0 %1311
          %v1314 = vsub.f32 %v1298, %v1312
          %v1315 = vmul.f32 %v1314, 1.442695
          %v1316 = vpow.pop %v1315
          %v1317 = vld [vmem:[%s1070] sm:$0xff]
          %v1318 = vmul.f32 %v1308, %v1317
          %v1319 = vsel %vm885, %v1316, 0.0
          %1320 = vadd.xlane.f32.xlu0 %v1319
          %v1321 = vpop.xlane.xlu0 %1320
          %v1322 = vadd.f32 %v1318, %v1321
          %1323 = vst.msk [vmem:[%s1070] sm:$0xff] %vm655, %v1322
          %v1324 = vld [vmem:[%s1072] sm:$0xff]
          %1326 = vset.pattern.permute.xlu0 0
          %1327 = vperm.xlu0 %1326, %v1308
          %v1328 = vpop.permute.xlu0 %1327
          %v1330 = vmul.f32 %v1328, %v1324
          %v1332 = vsel %vm885, %v1316, 0
          %1334 = vmatprep.subr.mxu0 0.0
          %1335 = vmatpush1.msra.mxu0 %v1221
          %1336 = vmatprep.subr.mxu0 0.0
          %1337 = vmatpush1.msra.mxu0 0.0
          %1338 = vmatprep.subr.mxu0 0.0
          %1339 = vmatpush1.msra.mxu0 0.0
          %1340 = vmatprep.subr.mxu0 0.0
          %1341 = vmatpush1.msra.mxu0 0.0
          %1342 = vmatprep.subr.mxu0 0.0
          %1343 = vmatpush1.msra.mxu0 0.0
          %1344 = vmatprep.subr.mxu0 0.0
          %1345 = vmatpush1.msra.mxu0 0.0
          %1346 = vmatprep.subr.mxu0 0.0
          %1347 = vmatpush1.msra.mxu0 0.0
          %1348 = vmatprep.subr.mxu0 0.0
          %1349 = vmatpush1.msra.mxu0 0.0
          %1350 = vmatprep.subr.mxu0 0.0
          %1351 = vmatpush1.msra.mxu0 0.0
          %1352 = vmatprep.subr.mxu0 0.0
          %1353 = vmatpush1.msra.mxu0 0.0
          %1354 = vmatprep.subr.mxu0 0.0
          %1355 = vmatpush1.msra.mxu0 0.0
          %1356 = vmatprep.subr.mxu0 0.0
          %1357 = vmatpush1.msra.mxu0 0.0
          %1358 = vmatprep.subr.mxu0 0.0
          %1359 = vmatpush1.msra.mxu0 0.0
          %1360 = vmatprep.subr.mxu0 0.0
          %1361 = vmatpush1.msra.mxu0 0.0
          %1362 = vmatprep.subr.mxu0 0.0
          %1363 = vmatpush1.msra.mxu0 0.0
          %1364 = vmatprep.subr.mxu0 0.0
          %1365 = vmatpush1.msra.mxu0 0.0
          %1366 = vmatprep.subr.mxu0 0.0
          %1367 = vmatpush1.msra.mxu0 0.0
          %1368 = vmatprep.subr.mxu0 0.0
          %1369 = vmatpush1.msra.mxu0 0.0
          %1370 = vmatprep.subr.mxu0 0.0
          %1371 = vmatpush1.msra.mxu0 0.0
          %1372 = vmatprep.subr.mxu0 0.0
          %1373 = vmatpush1.msra.mxu0 0.0
          %1374 = vmatprep.subr.mxu0 0.0
          %1375 = vmatpush1.msra.mxu0 0.0
          %1376 = vmatprep.subr.mxu0 0.0
          %1377 = vmatpush1.msra.mxu0 0.0
          %1378 = vmatprep.subr.mxu0 0.0
          %1379 = vmatpush1.msra.mxu0 0.0
          %1380 = vmatprep.subr.mxu0 0.0
          %1381 = vmatpush1.msra.mxu0 0.0
          %1382 = vmatprep.subr.mxu0 0.0
          %1383 = vmatpush1.msra.mxu0 0.0
          %1384 = vmatprep.subr.mxu0 0.0
          %1385 = vmatpush1.msra.mxu0 0.0
          %1386 = vmatprep.subr.mxu0 0.0
          %1387 = vmatpush1.msra.mxu0 0.0
          %1388 = vmatprep.subr.mxu0 0.0
          %1389 = vmatpush1.msra.mxu0 0.0
          %1390 = vmatprep.subr.mxu0 0.0
          %1391 = vmatpush1.msra.mxu0 0.0
          %1392 = vmatprep.subr.mxu0 0.0
          %1393 = vmatpush1.msra.mxu0 0.0
          %1394 = vmatprep.subr.mxu0 0.0
          %1395 = vmatpush1.msra.mxu0 0.0
          %1396 = vmatprep.subr.mxu0 0.0
          %1397 = vmatpush1.msra.mxu0 0.0
          %1398 = vmatprep.mubr.f32.mxu0 0.0
          %1399 = vmatmul.mubr.f32.gmra.mrb[0].mxu0 %v1332
          %v1400 = vpop.f32.mrb[0].mxu0
          %v1401 = vadd.f32 0.0, %v1400
          %v1402 = vpop.f32.mrb[0].mxu0
          %1403 = vdwg.mxu0
          %v1404 = vadd.f32 %v1330, %v1401
          %1405 = vst.msk [vmem:[%s1072] sm:$0xff] %vm653, %v1404
          %1406 = vst.msk [vmem:[%s1068] sm:$0xff] %vm655, %v1305
          %s1407 = scalar_lea.vmem [#allocation17], 64
          %v1408 = vld [vmem:[%s1407] sm:$0xff]
          %v1409 = vld [vmem:[%s1407 + $0x8] sm:$0xff]
          %v1410 = vld [vmem:[%s1407 + $0x10] sm:$0xff]
          %v1411 = vld [vmem:[%s1407 + $0x18] sm:$0xff]
          %1412 = vmatprep.subr.mxu0 0.0
          %1413 = vmatpush1.msra.mxu0 %v1408
          %1414 = vmatprep.subr.mxu0 0.0
          %1415 = vmatpush1.msra.mxu0 %v1409
          %1416 = vmatprep.subr.mxu0 0.0
          %1417 = vmatpush1.msra.mxu0 %v1410
          %1418 = vmatprep.subr.mxu0 0.0
          %1419 = vmatpush1.msra.mxu0 %v1411
          %1420 = vmatprep.subr.mxu0 0.0
          %1421 = vmatpush1.msra.mxu0 0.0
          %1422 = vmatprep.subr.mxu0 0.0
          %1423 = vmatpush1.msra.mxu0 0.0
          %1424 = vmatprep.subr.mxu0 0.0
          %1425 = vmatpush1.msra.mxu0 0.0
          %1426 = vmatprep.subr.mxu0 0.0
          %1427 = vmatpush1.msra.mxu0 0.0
          %1428 = vmatprep.subr.mxu0 0.0
          %1429 = vmatpush1.msra.mxu0 0.0
          %1430 = vmatprep.subr.mxu0 0.0
          %1431 = vmatpush1.msra.mxu0 0.0
          %1432 = vmatprep.subr.mxu0 0.0
          %1433 = vmatpush1.msra.mxu0 0.0
          %1434 = vmatprep.subr.mxu0 0.0
          %1435 = vmatpush1.msra.mxu0 0.0
          %1436 = vmatprep.subr.mxu0 0.0
          %1437 = vmatpush1.msra.mxu0 0.0
          %1438 = vmatprep.subr.mxu0 0.0
          %1439 = vmatpush1.msra.mxu0 0.0
          %1440 = vmatprep.subr.mxu0 0.0
          %1441 = vmatpush1.msra.mxu0 0.0
          %1442 = vmatprep.subr.mxu0 0.0
          %1443 = vmatpush1.msra.mxu0 0.0
          %1444 = vmatprep.subr.mxu0 0.0
          %1445 = vmatpush1.msra.mxu0 0.0
          %1446 = vmatprep.subr.mxu0 0.0
          %1447 = vmatpush1.msra.mxu0 0.0
          %1448 = vmatprep.subr.mxu0 0.0
          %1449 = vmatpush1.msra.mxu0 0.0
          %1450 = vmatprep.subr.mxu0 0.0
          %1451 = vmatpush1.msra.mxu0 0.0
          %1452 = vmatprep.subr.mxu0 0.0
          %1453 = vmatpush1.msra.mxu0 0.0
          %1454 = vmatprep.subr.mxu0 0.0
          %1455 = vmatpush1.msra.mxu0 0.0
          %1456 = vmatprep.subr.mxu0 0.0
          %1457 = vmatpush1.msra.mxu0 0.0
          %1458 = vmatprep.subr.mxu0 0.0
          %1459 = vmatpush1.msra.mxu0 0.0
          %1460 = vmatprep.subr.mxu0 0.0
          %1461 = vmatpush1.msra.mxu0 0.0
          %1462 = vmatprep.subr.mxu0 0.0
          %1463 = vmatpush1.msra.mxu0 0.0
          %1464 = vmatprep.subr.mxu0 0.0
          %1465 = vmatpush1.msra.mxu0 0.0
          %1466 = vmatprep.subr.mxu0 0.0
          %1467 = vmatpush1.msra.mxu0 0.0
          %1468 = vmatprep.subr.mxu0 0.0
          %1469 = vmatpush1.msra.mxu0 0.0
          %1470 = vmatprep.subr.mxu0 0.0
          %1471 = vmatpush1.msra.mxu0 0.0
          %1472 = vmatprep.subr.mxu0 0.0
          %1473 = vmatpush1.msra.mxu0 0.0
          %1474 = vmatprep.subr.mxu0 0.0
          %1475 = vmatpush1.msra.mxu0 0.0
          %1476 = vmatprep.mubr.f32.mxu0 0.0
          %1477 = vmatmul.mubr.f32.gmra.mrb[0].mxu0 %v581
          %v1478 = vpop.f32.mrb[0].mxu0
          %v1479 = vadd.f32 0.0, %v1478
          %v1480 = vpop.f32.mrb[0].mxu0
          %1481 = vdwg.mxu0
          %s1482 = scalar_lea.vmem [#allocation2], 16
          %1483 = vst.msk [vmem:[%s1482] sm:$0xff] %vm653, %v1479
          %s1484 = scalar_lea.vmem [#allocation3], 16
          %1485 = vst.msk [vmem:[%s1484] sm:$0xff] %vm655, -1e+30
          %s1486 = scalar_lea.vmem [#allocation4], 16
          %1487 = vst.msk [vmem:[%s1486] sm:$0xff] %vm655, 0.0
          %s1488 = scalar_lea.vmem [#allocation5], 16
          %1489 = vst.msk [vmem:[%s1488] sm:$0xff] %vm653, 0.0
          %s1490 = scalar_lea.vmem [#allocation18], 64
          %v1491 = vld [vmem:[%s1490] sm:$0xff]
          %v1492 = vld [vmem:[%s1490 + $0x8] sm:$0xff]
          %v1493 = vld [vmem:[%s1490 + $0x10] sm:$0xff]
          %v1494 = vld [vmem:[%s1490 + $0x18] sm:$0xff]
          %1495 = vmatprep.subr.mxu0 0.0
          %1496 = vmatpush1.msra.mxu0 %v1491
          %1497 = vmatprep.subr.mxu0 0.0
          %1498 = vmatpush1.msra.mxu0 %v1492
          %1499 = vmatprep.subr.mxu0 0.0
          %1500 = vmatpush1.msra.mxu0 %v1493
          %1501 = vmatprep.subr.mxu0 0.0
          %1502 = vmatpush1.msra.mxu0 %v1494
          %1503 = vmatprep.subr.mxu0 0.0
          %1504 = vmatpush1.msra.mxu0 0.0
          %1505 = vmatprep.subr.mxu0 0.0
          %1506 = vmatpush1.msra.mxu0 0.0
          %1507 = vmatprep.subr.mxu0 0.0
          %1508 = vmatpush1.msra.mxu0 0.0
          %1509 = vmatprep.subr.mxu0 0.0
          %1510 = vmatpush1.msra.mxu0 0.0
          %1511 = vmatprep.subr.mxu0 0.0
          %1512 = vmatpush1.msra.mxu0 0.0
          %1513 = vmatprep.subr.mxu0 0.0
          %1514 = vmatpush1.msra.mxu0 0.0
          %1515 = vmatprep.subr.mxu0 0.0
          %1516 = vmatpush1.msra.mxu0 0.0
          %1517 = vmatprep.subr.mxu0 0.0
          %1518 = vmatpush1.msra.mxu0 0.0
          %1519 = vmatprep.subr.mxu0 0.0
          %1520 = vmatpush1.msra.mxu0 0.0
          %1521 = vmatprep.subr.mxu0 0.0
          %1522 = vmatpush1.msra.mxu0 0.0
          %1523 = vmatprep.subr.mxu0 0.0
          %1524 = vmatpush1.msra.mxu0 0.0
          %1525 = vmatprep.subr.mxu0 0.0
          %1526 = vmatpush1.msra.mxu0 0.0
          %1527 = vmatprep.subr.mxu0 0.0
          %1528 = vmatpush1.msra.mxu0 0.0
          %1529 = vmatprep.subr.mxu0 0.0
          %1530 = vmatpush1.msra.mxu0 0.0
          %1531 = vmatprep.subr.mxu0 0.0
          %1532 = vmatpush1.msra.mxu0 0.0
          %1533 = vmatprep.subr.mxu0 0.0
          %1534 = vmatpush1.msra.mxu0 0.0
          %1535 = vmatprep.subr.mxu0 0.0
          %1536 = vmatpush1.msra.mxu0 0.0
          %1537 = vmatprep.subr.mxu0 0.0
          %1538 = vmatpush1.msra.mxu0 0.0
          %1539 = vmatprep.subr.mxu0 0.0
          %1540 = vmatpush1.msra.mxu0 0.0
          %1541 = vmatprep.subr.mxu0 0.0
          %1542 = vmatpush1.msra.mxu0 0.0
          %1543 = vmatprep.subr.mxu0 0.0
          %1544 = vmatpush1.msra.mxu0 0.0
          %1545 = vmatprep.subr.mxu0 0.0
          %1546 = vmatpush1.msra.mxu0 0.0
          %1547 = vmatprep.subr.mxu0 0.0
          %1548 = vmatpush1.msra.mxu0 0.0
          %1549 = vmatprep.subr.mxu0 0.0
          %1550 = vmatpush1.msra.mxu0 0.0
          %1551 = vmatprep.subr.mxu0 0.0
          %1552 = vmatpush1.msra.mxu0 0.0
          %1553 = vmatprep.subr.mxu0 0.0
          %1554 = vmatpush1.msra.mxu0 0.0
          %1555 = vmatprep.subr.mxu0 0.0
          %1556 = vmatpush1.msra.mxu0 0.0
          %1557 = vmatprep.subr.mxu0 0.0
          %1558 = vmatpush1.msra.mxu0 0.0
          %1559 = vmatprep.mubr.f32.mxu0 0.0
          %1560 = vmatmul.mubr.f32.gmra.mrb[0].mxu0 %v581
          %v1561 = vpop.f32.mrb[0].mxu0
          %v1562 = vadd.f32 0.0, %v1561
          %v1563 = vpop.f32.mrb[0].mxu0
          %1564 = vdwg.mxu0
          %s1565 = scalar_lea.vmem [#allocation20], 64
          %v1566 = vld [vmem:[%s1565] sm:$0xff]
          %v1567 = vld [vmem:[%s1565 + $0x8] sm:$0xff]
          %v1568 = vld [vmem:[%s1565 + $0x10] sm:$0xff]
          %v1569 = vld [vmem:[%s1565 + $0x18] sm:$0xff]
          %1570 = vmatprep.subr.mxu0 0.0
          %1571 = vmatpush1.msra.mxu0 %v1566
          %1572 = vmatprep.subr.mxu0 0.0
          %1573 = vmatpush1.msra.mxu0 %v1567
          %1574 = vmatprep.subr.mxu0 0.0
          %1575 = vmatpush1.msra.mxu0 %v1568
          %1576 = vmatprep.subr.mxu0 0.0
          %1577 = vmatpush1.msra.mxu0 %v1569
          %1578 = vmatprep.subr.mxu0 0.0
          %1579 = vmatpush1.msra.mxu0 0.0
          %1580 = vmatprep.subr.mxu0 0.0
          %1581 = vmatpush1.msra.mxu0 0.0
          %1582 = vmatprep.subr.mxu0 0.0
          %1583 = vmatpush1.msra.mxu0 0.0
          %1584 = vmatprep.subr.mxu0 0.0
          %1585 = vmatpush1.msra.mxu0 0.0
          %1586 = vmatprep.subr.mxu0 0.0
          %1587 = vmatpush1.msra.mxu0 0.0
          %1588 = vmatprep.subr.mxu0 0.0
          %1589 = vmatpush1.msra.mxu0 0.0
          %1590 = vmatprep.subr.mxu0 0.0
          %1591 = vmatpush1.msra.mxu0 0.0
          %1592 = vmatprep.subr.mxu0 0.0
          %1593 = vmatpush1.msra.mxu0 0.0
          %1594 = vmatprep.subr.mxu0 0.0
          %1595 = vmatpush1.msra.mxu0 0.0
          %1596 = vmatprep.subr.mxu0 0.0
          %1597 = vmatpush1.msra.mxu0 0.0
          %1598 = vmatprep.subr.mxu0 0.0
          %1599 = vmatpush1.msra.mxu0 0.0
          %1600 = vmatprep.subr.mxu0 0.0
          %1601 = vmatpush1.msra.mxu0 0.0
          %1602 = vmatprep.subr.mxu0 0.0
          %1603 = vmatpush1.msra.mxu0 0.0
          %1604 = vmatprep.subr.mxu0 0.0
          %1605 = vmatpush1.msra.mxu0 0.0
          %1606 = vmatprep.subr.mxu0 0.0
          %1607 = vmatpush1.msra.mxu0 0.0
          %1608 = vmatprep.subr.mxu0 0.0
          %1609 = vmatpush1.msra.mxu0 0.0
          %1610 = vmatprep.subr.mxu0 0.0
          %1611 = vmatpush1.msra.mxu0 0.0
          %1612 = vmatprep.subr.mxu0 0.0
          %1613 = vmatpush1.msra.mxu0 0.0
          %1614 = vmatprep.subr.mxu0 0.0
          %1615 = vmatpush1.msra.mxu0 0.0
          %1616 = vmatprep.subr.mxu0 0.0
          %1617 = vmatpush1.msra.mxu0 0.0
          %1618 = vmatprep.subr.mxu0 0.0
          %1619 = vmatpush1.msra.mxu0 0.0
          %1620 = vmatprep.subr.mxu0 0.0
          %1621 = vmatpush1.msra.mxu0 0.0
          %1622 = vmatprep.subr.mxu0 0.0
          %1623 = vmatpush1.msra.mxu0 0.0
          %1624 = vmatprep.subr.mxu0 0.0
          %1625 = vmatpush1.msra.mxu0 0.0
          %1626 = vmatprep.subr.mxu0 0.0
          %1627 = vmatpush1.msra.mxu0 0.0
          %1628 = vmatprep.subr.mxu0 0.0
          %1629 = vmatpush1.msra.mxu0 0.0
          %1630 = vmatprep.subr.mxu0 0.0
          %1631 = vmatpush1.msra.mxu0 0.0
          %1632 = vmatprep.subr.mxu0 0.0
          %1633 = vmatpush1.msra.mxu0 0.0
          %1634 = vmatprep.mubr.f32.mxu0 0.0
          %1635 = vmatmul.mubr.f32.gmra.mrb[0].mxu0 %v581
          %v1636 = vpop.f32.mrb[0].mxu0
          %v1637 = vadd.f32 0.0, %v1636
          %v1638 = vpop.f32.mrb[0].mxu0
          %1639 = vdwg.mxu0
          %v1640 = vld [vmem:[%s1482] sm:$0xff]
          %v1642 = vsel %vm653, %v1640, 0
          %v1645 = vsel %vm653, %v1562, 0
          %1647 = vmatprep.subr.mxu0 0.0
          %1648 = vmatpush1.xpose.msra.mxu0 %v1645
          %1649 = vmatprep.subr.mxu0 0.0
          %1650 = vmatpush1.xpose.msra.mxu0 0.0
          %1651 = vmatprep.subr.mxu0 0.0
          %1652 = vmatpush1.xpose.msra.mxu0 0.0
          %1653 = vmatprep.subr.mxu0 0.0
          %1654 = vmatpush1.xpose.msra.mxu0 0.0
          %1655 = vmatprep.subr.mxu0 0.0
          %1656 = vmatpush1.xpose.msra.mxu0 0.0
          %1657 = vmatprep.subr.mxu0 0.0
          %1658 = vmatpush1.xpose.msra.mxu0 0.0
          %1659 = vmatprep.subr.mxu0 0.0
          %1660 = vmatpush1.xpose.msra.mxu0 0.0
          %1661 = vmatprep.subr.mxu0 0.0
          %1662 = vmatpush1.xpose.msra.mxu0 0.0
          %1663 = vmatprep.subr.mxu0 0.0
          %1664 = vmatpush1.xpose.msra.mxu0 0.0
          %1665 = vmatprep.subr.mxu0 0.0
          %1666 = vmatpush1.xpose.msra.mxu0 0.0
          %1667 = vmatprep.subr.mxu0 0.0
          %1668 = vmatpush1.xpose.msra.mxu0 0.0
          %1669 = vmatprep.subr.mxu0 0.0
          %1670 = vmatpush1.xpose.msra.mxu0 0.0
          %1671 = vmatprep.subr.mxu0 0.0
          %1672 = vmatpush1.xpose.msra.mxu0 0.0
          %1673 = vmatprep.subr.mxu0 0.0
          %1674 = vmatpush1.xpose.msra.mxu0 0.0
          %1675 = vmatprep.subr.mxu0 0.0
          %1676 = vmatpush1.xpose.msra.mxu0 0.0
          %1677 = vmatprep.subr.mxu0 0.0
          %1678 = vmatpush1.xpose.msra.mxu0 0.0
          %1679 = vmatprep.subr.mxu0 0.0
          %1680 = vmatpush1.xpose.msra.mxu0 0.0
          %1681 = vmatprep.subr.mxu0 0.0
          %1682 = vmatpush1.xpose.msra.mxu0 0.0
          %1683 = vmatprep.subr.mxu0 0.0
          %1684 = vmatpush1.xpose.msra.mxu0 0.0
          %1685 = vmatprep.subr.mxu0 0.0
          %1686 = vmatpush1.xpose.msra.mxu0 0.0
          %1687 = vmatprep.subr.mxu0 0.0
          %1688 = vmatpush1.xpose.msra.mxu0 0.0
          %1689 = vmatprep.subr.mxu0 0.0
          %1690 = vmatpush1.xpose.msra.mxu0 0.0
          %1691 = vmatprep.subr.mxu0 0.0
          %1692 = vmatpush1.xpose.msra.mxu0 0.0
          %1693 = vmatprep.subr.mxu0 0.0
          %1694 = vmatpush1.xpose.msra.mxu0 0.0
          %1695 = vmatprep.subr.mxu0 0.0
          %1696 = vmatpush1.xpose.msra.mxu0 0.0
          %1697 = vmatprep.subr.mxu0 0.0
          %1698 = vmatpush1.xpose.msra.mxu0 0.0
          %1699 = vmatprep.subr.mxu0 0.0
          %1700 = vmatpush1.xpose.msra.mxu0 0.0
          %1701 = vmatprep.subr.mxu0 0.0
          %1702 = vmatpush1.xpose.msra.mxu0 0.0
          %1703 = vmatprep.subr.mxu0 0.0
          %1704 = vmatpush1.xpose.msra.mxu0 0.0
          %1705 = vmatprep.subr.mxu0 0.0
          %1706 = vmatpush1.xpose.msra.mxu0 0.0
          %1707 = vmatprep.subr.mxu0 0.0
          %1708 = vmatpush1.xpose.msra.mxu0 0.0
          %1709 = vmatprep.subr.mxu0 0.0
          %1710 = vmatpush1.xpose.msra.mxu0 0.0
          %1711 = vmatprep.mubr.f32.mxu0 0.0
          %1712 = vmatmul.mubr.f32.gmra.mrb[0].mxu0 %v1642
          %v1713 = vpop.f32.mrb[0].mxu0
          %v1714 = vadd.f32 0.0, %v1713
          %v1715 = vpop.f32.mrb[0].mxu0
          %1716 = vdwg.mxu0
          %v1717 = vld [vmem:[%s1484] sm:$0xff]
          %v1718 = vsel %vm885, %v1714, -inf
          %1719 = vmax.xlane.f32.xlu0 %v1718
          %v1720 = vpop.xlane.xlu0 %1719
          %v1721 = vmax.f32 %v1717, %v1720
          %v1722 = vsub.f32 %v1717, %v1721
          %v1723 = vmul.f32 %v1722, 1.442695
          %v1724 = vpow.pop %v1723
          %1726 = vset.pattern.permute.xlu0 0
          %1727 = vperm.xlu0 %1726, %v1721
          %v1728 = vpop.permute.xlu0 %1727
          %v1730 = vsub.f32 %v1714, %v1728
          %v1731 = vmul.f32 %v1730, 1.442695
          %v1732 = vpow.pop %v1731
          %v1733 = vld [vmem:[%s1486] sm:$0xff]
          %v1734 = vmul.f32 %v1724, %v1733
          %v1735 = vsel %vm885, %v1732, 0.0
          %1736 = vadd.xlane.f32.xlu0 %v1735
          %v1737 = vpop.xlane.xlu0 %1736
          %v1738 = vadd.f32 %v1734, %v1737
          %1739 = vst.msk [vmem:[%s1486] sm:$0xff] %vm655, %v1738
          %v1740 = vld [vmem:[%s1488] sm:$0xff]
          %1742 = vset.pattern.permute.xlu0 0
          %1743 = vperm.xlu0 %1742, %v1724
          %v1744 = vpop.permute.xlu0 %1743
          %v1746 = vmul.f32 %v1744, %v1740
          %v1748 = vsel %vm885, %v1732, 0
          %1750 = vmatprep.subr.mxu0 0.0
          %1751 = vmatpush1.msra.mxu0 %v1637
          %1752 = vmatprep.subr.mxu0 0.0
          %1753 = vmatpush1.msra.mxu0 0.0
          %1754 = vmatprep.subr.mxu0 0.0
          %1755 = vmatpush1.msra.mxu0 0.0
          %1756 = vmatprep.subr.mxu0 0.0
          %1757 = vmatpush1.msra.mxu0 0.0
          %1758 = vmatprep.subr.mxu0 0.0
          %1759 = vmatpush1.msra.mxu0 0.0
          %1760 = vmatprep.subr.mxu0 0.0
          %1761 = vmatpush1.msra.mxu0 0.0
          %1762 = vmatprep.subr.mxu0 0.0
          %1763 = vmatpush1.msra.mxu0 0.0
          %1764 = vmatprep.subr.mxu0 0.0
          %1765 = vmatpush1.msra.mxu0 0.0
          %1766 = vmatprep.subr.mxu0 0.0
          %1767 = vmatpush1.msra.mxu0 0.0
          %1768 = vmatprep.subr.mxu0 0.0
          %1769 = vmatpush1.msra.mxu0 0.0
          %1770 = vmatprep.subr.mxu0 0.0
          %1771 = vmatpush1.msra.mxu0 0.0
          %1772 = vmatprep.subr.mxu0 0.0
          %1773 = vmatpush1.msra.mxu0 0.0
          %1774 = vmatprep.subr.mxu0 0.0
          %1775 = vmatpush1.msra.mxu0 0.0
          %1776 = vmatprep.subr.mxu0 0.0
          %1777 = vmatpush1.msra.mxu0 0.0
          %1778 = vmatprep.subr.mxu0 0.0
          %1779 = vmatpush1.msra.mxu0 0.0
          %1780 = vmatprep.subr.mxu0 0.0
          %1781 = vmatpush1.msra.mxu0 0.0
          %1782 = vmatprep.subr.mxu0 0.0
          %1783 = vmatpush1.msra.mxu0 0.0
          %1784 = vmatprep.subr.mxu0 0.0
          %1785 = vmatpush1.msra.mxu0 0.0
          %1786 = vmatprep.subr.mxu0 0.0
          %1787 = vmatpush1.msra.mxu0 0.0
          %1788 = vmatprep.subr.mxu0 0.0
          %1789 = vmatpush1.msra.mxu0 0.0
          %1790 = vmatprep.subr.mxu0 0.0
          %1791 = vmatpush1.msra.mxu0 0.0
          %1792 = vmatprep.subr.mxu0 0.0
          %1793 = vmatpush1.msra.mxu0 0.0
          %1794 = vmatprep.subr.mxu0 0.0
          %1795 = vmatpush1.msra.mxu0 0.0
          %1796 = vmatprep.subr.mxu0 0.0
          %1797 = vmatpush1.msra.mxu0 0.0
          %1798 = vmatprep.subr.mxu0 0.0
          %1799 = vmatpush1.msra.mxu0 0.0
          %1800 = vmatprep.subr.mxu0 0.0
          %1801 = vmatpush1.msra.mxu0 0.0
          %1802 = vmatprep.subr.mxu0 0.0
          %1803 = vmatpush1.msra.mxu0 0.0
          %1804 = vmatprep.subr.mxu0 0.0
          %1805 = vmatpush1.msra.mxu0 0.0
          %1806 = vmatprep.subr.mxu0 0.0
          %1807 = vmatpush1.msra.mxu0 0.0
          %1808 = vmatprep.subr.mxu0 0.0
          %1809 = vmatpush1.msra.mxu0 0.0
          %1810 = vmatprep.subr.mxu0 0.0
          %1811 = vmatpush1.msra.mxu0 0.0
          %1812 = vmatprep.subr.mxu0 0.0
          %1813 = vmatpush1.msra.mxu0 0.0
          %1814 = vmatprep.mubr.f32.mxu0 0.0
          %1815 = vmatmul.mubr.f32.gmra.mrb[0].mxu0 %v1748
          %v1816 = vpop.f32.mrb[0].mxu0
          %v1817 = vadd.f32 0.0, %v1816
          %v1818 = vpop.f32.mrb[0].mxu0
          %1819 = vdwg.mxu0
          %v1820 = vadd.f32 %v1746, %v1817
          %1821 = vst.msk [vmem:[%s1488] sm:$0xff] %vm653, %v1820
          %1822 = vst.msk [vmem:[%s1484] sm:$0xff] %vm655, %v1721
          %s1823 = scalar_lea.vmem [#allocation17], 96
          %v1824 = vld [vmem:[%s1823] sm:$0xff]
          %v1825 = vld [vmem:[%s1823 + $0x8] sm:$0xff]
          %v1826 = vld [vmem:[%s1823 + $0x10] sm:$0xff]
          %v1827 = vld [vmem:[%s1823 + $0x18] sm:$0xff]
          %1828 = vmatprep.subr.mxu0 0.0
          %1829 = vmatpush1.msra.mxu0 %v1824
          %1830 = vmatprep.subr.mxu0 0.0
          %1831 = vmatpush1.msra.mxu0 %v1825
          %1832 = vmatprep.subr.mxu0 0.0
          %1833 = vmatpush1.msra.mxu0 %v1826
          %1834 = vmatprep.subr.mxu0 0.0
          %1835 = vmatpush1.msra.mxu0 %v1827
          %1836 = vmatprep.subr.mxu0 0.0
          %1837 = vmatpush1.msra.mxu0 0.0
          %1838 = vmatprep.subr.mxu0 0.0
          %1839 = vmatpush1.msra.mxu0 0.0
          %1840 = vmatprep.subr.mxu0 0.0
          %1841 = vmatpush1.msra.mxu0 0.0
          %1842 = vmatprep.subr.mxu0 0.0
          %1843 = vmatpush1.msra.mxu0 0.0
          %1844 = vmatprep.subr.mxu0 0.0
          %1845 = vmatpush1.msra.mxu0 0.0
          %1846 = vmatprep.subr.mxu0 0.0
          %1847 = vmatpush1.msra.mxu0 0.0
          %1848 = vmatprep.subr.mxu0 0.0
          %1849 = vmatpush1.msra.mxu0 0.0
          %1850 = vmatprep.subr.mxu0 0.0
          %1851 = vmatpush1.msra.mxu0 0.0
          %1852 = vmatprep.subr.mxu0 0.0
          %1853 = vmatpush1.msra.mxu0 0.0
          %1854 = vmatprep.subr.mxu0 0.0
          %1855 = vmatpush1.msra.mxu0 0.0
          %1856 = vmatprep.subr.mxu0 0.0
          %1857 = vmatpush1.msra.mxu0 0.0
          %1858 = vmatprep.subr.mxu0 0.0
          %1859 = vmatpush1.msra.mxu0 0.0
          %1860 = vmatprep.subr.mxu0 0.0
          %1861 = vmatpush1.msra.mxu0 0.0
          %1862 = vmatprep.subr.mxu0 0.0
          %1863 = vmatpush1.msra.mxu0 0.0
          %1864 = vmatprep.subr.mxu0 0.0
          %1865 = vmatpush1.msra.mxu0 0.0
          %1866 = vmatprep.subr.mxu0 0.0
          %1867 = vmatpush1.msra.mxu0 0.0
          %1868 = vmatprep.subr.mxu0 0.0
          %1869 = vmatpush1.msra.mxu0 0.0
          %1870 = vmatprep.subr.mxu0 0.0
          %1871 = vmatpush1.msra.mxu0 0.0
          %1872 = vmatprep.subr.mxu0 0.0
          %1873 = vmatpush1.msra.mxu0 0.0
          %1874 = vmatprep.subr.mxu0 0.0
          %1875 = vmatpush1.msra.mxu0 0.0
          %1876 = vmatprep.subr.mxu0 0.0
          %1877 = vmatpush1.msra.mxu0 0.0
          %1878 = vmatprep.subr.mxu0 0.0
          %1879 = vmatpush1.msra.mxu0 0.0
          %1880 = vmatprep.subr.mxu0 0.0
          %1881 = vmatpush1.msra.mxu0 0.0
          %1882 = vmatprep.subr.mxu0 0.0
          %1883 = vmatpush1.msra.mxu0 0.0
          %1884 = vmatprep.subr.mxu0 0.0
          %1885 = vmatpush1.msra.mxu0 0.0
          %1886 = vmatprep.subr.mxu0 0.0
          %1887 = vmatpush1.msra.mxu0 0.0
          %1888 = vmatprep.subr.mxu0 0.0
          %1889 = vmatpush1.msra.mxu0 0.0
          %1890 = vmatprep.subr.mxu0 0.0
          %1891 = vmatpush1.msra.mxu0 0.0
          %1892 = vmatprep.mubr.f32.mxu0 0.0
          %1893 = vmatmul.mubr.f32.gmra.mrb[0].mxu0 %v581
          %v1894 = vpop.f32.mrb[0].mxu0
          %v1895 = vadd.f32 0.0, %v1894
          %v1896 = vpop.f32.mrb[0].mxu0
          %1897 = vdwg.mxu0
          %s1898 = scalar_lea.vmem [#allocation2], 24
          %1899 = vst.msk [vmem:[%s1898] sm:$0xff] %vm653, %v1895
          %s1900 = scalar_lea.vmem [#allocation3], 24
          %1901 = vst.msk [vmem:[%s1900] sm:$0xff] %vm655, -1e+30
          %s1902 = scalar_lea.vmem [#allocation4], 24
          %1903 = vst.msk [vmem:[%s1902] sm:$0xff] %vm655, 0.0
          %s1904 = scalar_lea.vmem [#allocation5], 24
          %1905 = vst.msk [vmem:[%s1904] sm:$0xff] %vm653, 0.0
          %s1906 = scalar_lea.vmem [#allocation18], 96
          %v1907 = vld [vmem:[%s1906] sm:$0xff]
          %v1908 = vld [vmem:[%s1906 + $0x8] sm:$0xff]
          %v1909 = vld [vmem:[%s1906 + $0x10] sm:$0xff]
          %v1910 = vld [vmem:[%s1906 + $0x18] sm:$0xff]
          %1911 = vmatprep.subr.mxu0 0.0
          %1912 = vmatpush1.msra.mxu0 %v1907
          %1913 = vmatprep.subr.mxu0 0.0
          %1914 = vmatpush1.msra.mxu0 %v1908
          %1915 = vmatprep.subr.mxu0 0.0
          %1916 = vmatpush1.msra.mxu0 %v1909
          %1917 = vmatprep.subr.mxu0 0.0
          %1918 = vmatpush1.msra.mxu0 %v1910
          %1919 = vmatprep.subr.mxu0 0.0
          %1920 = vmatpush1.msra.mxu0 0.0
          %1921 = vmatprep.subr.mxu0 0.0
          %1922 = vmatpush1.msra.mxu0 0.0
          %1923 = vmatprep.subr.mxu0 0.0
          %1924 = vmatpush1.msra.mxu0 0.0
          %1925 = vmatprep.subr.mxu0 0.0
          %1926 = vmatpush1.msra.mxu0 0.0
          %1927 = vmatprep.subr.mxu0 0.0
          %1928 = vmatpush1.msra.mxu0 0.0
          %1929 = vmatprep.subr.mxu0 0.0
          %1930 = vmatpush1.msra.mxu0 0.0
          %1931 = vmatprep.subr.mxu0 0.0
          %1932 = vmatpush1.msra.mxu0 0.0
          %1933 = vmatprep.subr.mxu0 0.0
          %1934 = vmatpush1.msra.mxu0 0.0
          %1935 = vmatprep.subr.mxu0 0.0
          %1936 = vmatpush1.msra.mxu0 0.0
          %1937 = vmatprep.subr.mxu0 0.0
          %1938 = vmatpush1.msra.mxu0 0.0
          %1939 = vmatprep.subr.mxu0 0.0
          %1940 = vmatpush1.msra.mxu0 0.0
          %1941 = vmatprep.subr.mxu0 0.0
          %1942 = vmatpush1.msra.mxu0 0.0
          %1943 = vmatprep.subr.mxu0 0.0
          %1944 = vmatpush1.msra.mxu0 0.0
          %1945 = vmatprep.subr.mxu0 0.0
          %1946 = vmatpush1.msra.mxu0 0.0
          %1947 = vmatprep.subr.mxu0 0.0
          %1948 = vmatpush1.msra.mxu0 0.0
          %1949 = vmatprep.subr.mxu0 0.0
          %1950 = vmatpush1.msra.mxu0 0.0
          %1951 = vmatprep.subr.mxu0 0.0
          %1952 = vmatpush1.msra.mxu0 0.0
          %1953 = vmatprep.subr.mxu0 0.0
          %1954 = vmatpush1.msra.mxu0 0.0
          %1955 = vmatprep.subr.mxu0 0.0
          %1956 = vmatpush1.msra.mxu0 0.0
          %1957 = vmatprep.subr.mxu0 0.0
          %1958 = vmatpush1.msra.mxu0 0.0
          %1959 = vmatprep.subr.mxu0 0.0
          %1960 = vmatpush1.msra.mxu0 0.0
          %1961 = vmatprep.subr.mxu0 0.0
          %1962 = vmatpush1.msra.mxu0 0.0
          %1963 = vmatprep.subr.mxu0 0.0
          %1964 = vmatpush1.msra.mxu0 0.0
          %1965 = vmatprep.subr.mxu0 0.0
          %1966 = vmatpush1.msra.mxu0 0.0
          %1967 = vmatprep.subr.mxu0 0.0
          %1968 = vmatpush1.msra.mxu0 0.0
          %1969 = vmatprep.subr.mxu0 0.0
          %1970 = vmatpush1.msra.mxu0 0.0
          %1971 = vmatprep.subr.mxu0 0.0
          %1972 = vmatpush1.msra.mxu0 0.0
          %1973 = vmatprep.subr.mxu0 0.0
          %1974 = vmatpush1.msra.mxu0 0.0
          %1975 = vmatprep.mubr.f32.mxu0 0.0
          %1976 = vmatmul.mubr.f32.gmra.mrb[0].mxu0 %v581
          %v1977 = vpop.f32.mrb[0].mxu0
          %v1978 = vadd.f32 0.0, %v1977
          %v1979 = vpop.f32.mrb[0].mxu0
          %1980 = vdwg.mxu0
          %s1981 = scalar_lea.vmem [#allocation20], 96
          %v1982 = vld [vmem:[%s1981] sm:$0xff]
          %v1983 = vld [vmem:[%s1981 + $0x8] sm:$0xff]
          %v1984 = vld [vmem:[%s1981 + $0x10] sm:$0xff]
          %v1985 = vld [vmem:[%s1981 + $0x18] sm:$0xff]
          %1986 = vmatprep.subr.mxu0 0.0
          %1987 = vmatpush1.msra.mxu0 %v1982
          %1988 = vmatprep.subr.mxu0 0.0
          %1989 = vmatpush1.msra.mxu0 %v1983
          %1990 = vmatprep.subr.mxu0 0.0
          %1991 = vmatpush1.msra.mxu0 %v1984
          %1992 = vmatprep.subr.mxu0 0.0
          %1993 = vmatpush1.msra.mxu0 %v1985
          %1994 = vmatprep.subr.mxu0 0.0
          %1995 = vmatpush1.msra.mxu0 0.0
          %1996 = vmatprep.subr.mxu0 0.0
          %1997 = vmatpush1.msra.mxu0 0.0
          %1998 = vmatprep.subr.mxu0 0.0
          %1999 = vmatpush1.msra.mxu0 0.0
          %2000 = vmatprep.subr.mxu0 0.0
          %2001 = vmatpush1.msra.mxu0 0.0
          %2002 = vmatprep.subr.mxu0 0.0
          %2003 = vmatpush1.msra.mxu0 0.0
          %2004 = vmatprep.subr.mxu0 0.0
          %2005 = vmatpush1.msra.mxu0 0.0
          %2006 = vmatprep.subr.mxu0 0.0
          %2007 = vmatpush1.msra.mxu0 0.0
          %2008 = vmatprep.subr.mxu0 0.0
          %2009 = vmatpush1.msra.mxu0 0.0
          %2010 = vmatprep.subr.mxu0 0.0
          %2011 = vmatpush1.msra.mxu0 0.0
          %2012 = vmatprep.subr.mxu0 0.0
          %2013 = vmatpush1.msra.mxu0 0.0
          %2014 = vmatprep.subr.mxu0 0.0
          %2015 = vmatpush1.msra.mxu0 0.0
          %2016 = vmatprep.subr.mxu0 0.0
          %2017 = vmatpush1.msra.mxu0 0.0
          %2018 = vmatprep.subr.mxu0 0.0
          %2019 = vmatpush1.msra.mxu0 0.0
          %2020 = vmatprep.subr.mxu0 0.0
          %2021 = vmatpush1.msra.mxu0 0.0
          %2022 = vmatprep.subr.mxu0 0.0
          %2023 = vmatpush1.msra.mxu0 0.0
          %2024 = vmatprep.subr.mxu0 0.0
          %2025 = vmatpush1.msra.mxu0 0.0
          %2026 = vmatprep.subr.mxu0 0.0
          %2027 = vmatpush1.msra.mxu0 0.0
          %2028 = vmatprep.subr.mxu0 0.0
          %2029 = vmatpush1.msra.mxu0 0.0
          %2030 = vmatprep.subr.mxu0 0.0
          %2031 = vmatpush1.msra.mxu0 0.0
          %2032 = vmatprep.subr.mxu0 0.0
          %2033 = vmatpush1.msra.mxu0 0.0
          %2034 = vmatprep.subr.mxu0 0.0
          %2035 = vmatpush1.msra.mxu0 0.0
          %2036 = vmatprep.subr.mxu0 0.0
          %2037 = vmatpush1.msra.mxu0 0.0
          %2038 = vmatprep.subr.mxu0 0.0
          %2039 = vmatpush1.msra.mxu0 0.0
          %2040 = vmatprep.subr.mxu0 0.0
          %2041 = vmatpush1.msra.mxu0 0.0
          %2042 = vmatprep.subr.mxu0 0.0
          %2043 = vmatpush1.msra.mxu0 0.0
          %2044 = vmatprep.subr.mxu0 0.0
          %2045 = vmatpush1.msra.mxu0 0.0
          %2046 = vmatprep.subr.mxu0 0.0
          %2047 = vmatpush1.msra.mxu0 0.0
          %2048 = vmatprep.subr.mxu0 0.0
          %2049 = vmatpush1.msra.mxu0 0.0
          %2050 = vmatprep.mubr.f32.mxu0 0.0
          %2051 = vmatmul.mubr.f32.gmra.mrb[0].mxu0 %v581
          %v2052 = vpop.f32.mrb[0].mxu0
          %v2053 = vadd.f32 0.0, %v2052
          %v2054 = vpop.f32.mrb[0].mxu0
          %2055 = vdwg.mxu0
          %v2056 = vld [vmem:[%s1898] sm:$0xff]
          %v2058 = vsel %vm653, %v2056, 0
          %v2061 = vsel %vm653, %v1978, 0
          %2063 = vmatprep.subr.mxu0 0.0
          %2064 = vmatpush1.xpose.msra.mxu0 %v2061
          %2065 = vmatprep.subr.mxu0 0.0
          %2066 = vmatpush1.xpose.msra.mxu0 0.0
          %2067 = vmatprep.subr.mxu0 0.0
          %2068 = vmatpush1.xpose.msra.mxu0 0.0
          %2069 = vmatprep.subr.mxu0 0.0
          %2070 = vmatpush1.xpose.msra.mxu0 0.0
          %2071 = vmatprep.subr.mxu0 0.0
          %2072 = vmatpush1.xpose.msra.mxu0 0.0
          %2073 = vmatprep.subr.mxu0 0.0
          %2074 = vmatpush1.xpose.msra.mxu0 0.0
          %2075 = vmatprep.subr.mxu0 0.0
          %2076 = vmatpush1.xpose.msra.mxu0 0.0
          %2077 = vmatprep.subr.mxu0 0.0
          %2078 = vmatpush1.xpose.msra.mxu0 0.0
          %2079 = vmatprep.subr.mxu0 0.0
          %2080 = vmatpush1.xpose.msra.mxu0 0.0
          %2081 = vmatprep.subr.mxu0 0.0
          %2082 = vmatpush1.xpose.msra.mxu0 0.0
          %2083 = vmatprep.subr.mxu0 0.0
          %2084 = vmatpush1.xpose.msra.mxu0 0.0
          %2085 = vmatprep.subr.mxu0 0.0
          %2086 = vmatpush1.xpose.msra.mxu0 0.0
          %2087 = vmatprep.subr.mxu0 0.0
          %2088 = vmatpush1.xpose.msra.mxu0 0.0
          %2089 = vmatprep.subr.mxu0 0.0
          %2090 = vmatpush1.xpose.msra.mxu0 0.0
          %2091 = vmatprep.subr.mxu0 0.0
          %2092 = vmatpush1.xpose.msra.mxu0 0.0
          %2093 = vmatprep.subr.mxu0 0.0
          %2094 = vmatpush1.xpose.msra.mxu0 0.0
          %2095 = vmatprep.subr.mxu0 0.0
          %2096 = vmatpush1.xpose.msra.mxu0 0.0
          %2097 = vmatprep.subr.mxu0 0.0
          %2098 = vmatpush1.xpose.msra.mxu0 0.0
          %2099 = vmatprep.subr.mxu0 0.0
          %2100 = vmatpush1.xpose.msra.mxu0 0.0
          %2101 = vmatprep.subr.mxu0 0.0
          %2102 = vmatpush1.xpose.msra.mxu0 0.0
          %2103 = vmatprep.subr.mxu0 0.0
          %2104 = vmatpush1.xpose.msra.mxu0 0.0
          %2105 = vmatprep.subr.mxu0 0.0
          %2106 = vmatpush1.xpose.msra.mxu0 0.0
          %2107 = vmatprep.subr.mxu0 0.0
          %2108 = vmatpush1.xpose.msra.mxu0 0.0
          %2109 = vmatprep.subr.mxu0 0.0
          %2110 = vmatpush1.xpose.msra.mxu0 0.0
          %2111 = vmatprep.subr.mxu0 0.0
          %2112 = vmatpush1.xpose.msra.mxu0 0.0
          %2113 = vmatprep.subr.mxu0 0.0
          %2114 = vmatpush1.xpose.msra.mxu0 0.0
          %2115 = vmatprep.subr.mxu0 0.0
          %2116 = vmatpush1.xpose.msra.mxu0 0.0
          %2117 = vmatprep.subr.mxu0 0.0
          %2118 = vmatpush1.xpose.msra.mxu0 0.0
          %2119 = vmatprep.subr.mxu0 0.0
          %2120 = vmatpush1.xpose.msra.mxu0 0.0
          %2121 = vmatprep.subr.mxu0 0.0
          %2122 = vmatpush1.xpose.msra.mxu0 0.0
          %2123 = vmatprep.subr.mxu0 0.0
          %2124 = vmatpush1.xpose.msra.mxu0 0.0
          %2125 = vmatprep.subr.mxu0 0.0
          %2126 = vmatpush1.xpose.msra.mxu0 0.0
          %2127 = vmatprep.mubr.f32.mxu0 0.0
          %2128 = vmatmul.mubr.f32.gmra.mrb[0].mxu0 %v2058
          %v2129 = vpop.f32.mrb[0].mxu0
          %v2130 = vadd.f32 0.0, %v2129
          %v2131 = vpop.f32.mrb[0].mxu0
          %2132 = vdwg.mxu0
          %v2133 = vld [vmem:[%s1900] sm:$0xff]
          %v2134 = vsel %vm885, %v2130, -inf
          %2135 = vmax.xlane.f32.xlu0 %v2134
          %v2136 = vpop.xlane.xlu0 %2135
          %v2137 = vmax.f32 %v2133, %v2136
          %v2138 = vsub.f32 %v2133, %v2137
          %v2139 = vmul.f32 %v2138, 1.442695
          %v2140 = vpow.pop %v2139
          %2142 = vset.pattern.permute.xlu0 0
          %2143 = vperm.xlu0 %2142, %v2137
          %v2144 = vpop.permute.xlu0 %2143
          %v2146 = vsub.f32 %v2130, %v2144
          %v2147 = vmul.f32 %v2146, 1.442695
          %v2148 = vpow.pop %v2147
          %v2149 = vld [vmem:[%s1902] sm:$0xff]
          %v2150 = vmul.f32 %v2140, %v2149
          %v2151 = vsel %vm885, %v2148, 0.0
          %2152 = vadd.xlane.f32.xlu0 %v2151
          %v2153 = vpop.xlane.xlu0 %2152
          %v2154 = vadd.f32 %v2150, %v2153
          %2155 = vst.msk [vmem:[%s1902] sm:$0xff] %vm655, %v2154
          %v2156 = vld [vmem:[%s1904] sm:$0xff]
          %2158 = vset.pattern.permute.xlu0 0
          %2159 = vperm.xlu0 %2158, %v2140
          %v2160 = vpop.permute.xlu0 %2159
          %v2162 = vmul.f32 %v2160, %v2156
          %v2164 = vsel %vm885, %v2148, 0
          %2166 = vmatprep.subr.mxu0 0.0
          %2167 = vmatpush1.msra.mxu0 %v2053
          %2168 = vmatprep.subr.mxu0 0.0
          %2169 = vmatpush1.msra.mxu0 0.0
          %2170 = vmatprep.subr.mxu0 0.0
          %2171 = vmatpush1.msra.mxu0 0.0
          %2172 = vmatprep.subr.mxu0 0.0
          %2173 = vmatpush1.msra.mxu0 0.0
          %2174 = vmatprep.subr.mxu0 0.0
          %2175 = vmatpush1.msra.mxu0 0.0
          %2176 = vmatprep.subr.mxu0 0.0
          %2177 = vmatpush1.msra.mxu0 0.0
          %2178 = vmatprep.subr.mxu0 0.0
          %2179 = vmatpush1.msra.mxu0 0.0
          %2180 = vmatprep.subr.mxu0 0.0
          %2181 = vmatpush1.msra.mxu0 0.0
          %2182 = vmatprep.subr.mxu0 0.0
          %2183 = vmatpush1.msra.mxu0 0.0
          %2184 = vmatprep.subr.mxu0 0.0
          %2185 = vmatpush1.msra.mxu0 0.0
          %2186 = vmatprep.subr.mxu0 0.0
          %2187 = vmatpush1.msra.mxu0 0.0
          %2188 = vmatprep.subr.mxu0 0.0
          %2189 = vmatpush1.msra.mxu0 0.0
          %2190 = vmatprep.subr.mxu0 0.0
          %2191 = vmatpush1.msra.mxu0 0.0
          %2192 = vmatprep.subr.mxu0 0.0
          %2193 = vmatpush1.msra.mxu0 0.0
          %2194 = vmatprep.subr.mxu0 0.0
          %2195 = vmatpush1.msra.mxu0 0.0
          %2196 = vmatprep.subr.mxu0 0.0
          %2197 = vmatpush1.msra.mxu0 0.0
          %2198 = vmatprep.subr.mxu0 0.0
          %2199 = vmatpush1.msra.mxu0 0.0
          %2200 = vmatprep.subr.mxu0 0.0
          %2201 = vmatpush1.msra.mxu0 0.0
          %2202 = vmatprep.subr.mxu0 0.0
          %2203 = vmatpush1.msra.mxu0 0.0
          %2204 = vmatprep.subr.mxu0 0.0
          %2205 = vmatpush1.msra.mxu0 0.0
          %2206 = vmatprep.subr.mxu0 0.0
          %2207 = vmatpush1.msra.mxu0 0.0
          %2208 = vmatprep.subr.mxu0 0.0
          %2209 = vmatpush1.msra.mxu0 0.0
          %2210 = vmatprep.subr.mxu0 0.0
          %2211 = vmatpush1.msra.mxu0 0.0
          %2212 = vmatprep.subr.mxu0 0.0
          %2213 = vmatpush1.msra.mxu0 0.0
          %2214 = vmatprep.subr.mxu0 0.0
          %2215 = vmatpush1.msra.mxu0 0.0
          %2216 = vmatprep.subr.mxu0 0.0
          %2217 = vmatpush1.msra.mxu0 0.0
          %2218 = vmatprep.subr.mxu0 0.0
          %2219 = vmatpush1.msra.mxu0 0.0
          %2220 = vmatprep.subr.mxu0 0.0
          %2221 = vmatpush1.msra.mxu0 0.0
          %2222 = vmatprep.subr.mxu0 0.0
          %2223 = vmatpush1.msra.mxu0 0.0
          %2224 = vmatprep.subr.mxu0 0.0
          %2225 = vmatpush1.msra.mxu0 0.0
          %2226 = vmatprep.subr.mxu0 0.0
          %2227 = vmatpush1.msra.mxu0 0.0
          %2228 = vmatprep.subr.mxu0 0.0
          %2229 = vmatpush1.msra.mxu0 0.0
          %2230 = vmatprep.mubr.f32.mxu0 0.0
          %2231 = vmatmul.mubr.f32.gmra.mrb[0].mxu0 %v2164
          %v2232 = vpop.f32.mrb[0].mxu0
          %v2233 = vadd.f32 0.0, %v2232
          %v2234 = vpop.f32.mrb[0].mxu0
          %2235 = vdwg.mxu0
          %v2236 = vadd.f32 %v2162, %v2233
          %2237 = vst.msk [vmem:[%s1904] sm:$0xff] %vm653, %v2236
          %2238 = vst.msk [vmem:[%s1900] sm:$0xff] %vm655, %v2137
        $region104: #{tpu_custom_call.1} parent=59 // pred_fallthru
          _
        %v2239 = vld [vmem:[%s456] sm:$0xff]
        %v2240 = vld [vmem:[%s456 + $0x8] sm:$0xff]
        %v2241 = vld [vmem:[#allocation11] sm:$0x1]
        %v2242 = vld [vmem:[#allocation12] sm:$0x1]
        %vm2243 = vcmask 261120
        %v2244 = vsel %vm2243, %v2239, 0.0
        %2245 = vadd.xlane.f32.xlu0 %v2244
        %v2246 = vpop.xlane.xlu0 %2245
        %v2247 = vsel %vm2243, %v2240, 0.0
        %2248 = vadd.xlane.f32.xlu0 %v2247
        %v2249 = vpop.xlane.xlu0 %2248
        %v2250 = vrcp.pop 32.0
        %v2251 = vmul.f32 %v2246, %v2250
        %v2252 = vmul.f32 %v2249, %v2250
        %v2253 = vsub.f32 %v2239, %v2251
        %v2254 = vsub.f32 %v2240, %v2252
        %v2255 = vmul.f32 %v2253, %v2253
        %v2256 = vmul.f32 %v2254, %v2254
        %v2257 = vsel %vm2243, %v2255, 0.0
        %2258 = vadd.xlane.f32.xlu0 %v2257
        %v2259 = vpop.xlane.xlu0 %2258
        %v2260 = vsel %vm2243, %v2256, 0.0
        %2261 = vadd.xlane.f32.xlu0 %v2260
        %v2262 = vpop.xlane.xlu0 %2261
        %v2263 = vmul.f32 %v2259, %v2250
        %v2264 = vmul.f32 %v2262, %v2250
        %v2265 = vadd.f32 %v2263, 1e-05
        %v2266 = vadd.f32 %v2264, 1e-05
        %v2267 = vrsqrt.pop %v2265
        %v2268 = vrsqrt.pop %v2266
        %v2269 = vmul.f32 %v2253, %v2267
        %v2270 = vmul.f32 %v2254, %v2268
        %v2272 = vlaneseq
        %v2273 = vshrl.u32 %v2272, 7
        %v2274 = vsub.s32 0, %v2273
        %v2275 = vrot.slane %v2241, %v2274
        %v2277 = vmul.f32 %v2269, %v2275
        %v2278 = vmul.f32 %v2270, %v2275
        %v2280 = vlaneseq
        %v2281 = vshrl.u32 %v2280, 7
        %v2282 = vsub.s32 0, %v2281
        %v2283 = vrot.slane %v2242, %v2282
        %v2285 = vadd.f32 %v2277, %v2283
        %v2286 = vadd.f32 %v2278, %v2283
        %v2287 = vld [vmem:[#allocation18] sm:$0xff]
        %v2288 = vld [vmem:[#allocation18 + $0x8] sm:$0xff]
        %v2289 = vld [vmem:[#allocation18 + $0x10] sm:$0xff]
        %v2290 = vld [vmem:[#allocation18 + $0x18] sm:$0xff]
        %v2292 = vsel %vm2243, %v2285, 0
        %v2295 = vsel %vm2243, %v2286, 0
        %2297 = vmatprep.subr.mxu0 0.0
        %2298 = vmatpush1.msra.mxu0 %v2287
        %2299 = vmatprep.subr.mxu0 0.0
        %2300 = vmatpush1.msra.mxu0 %v2288
        %2301 = vmatprep.subr.mxu0 0.0
        %2302 = vmatpush1.msra.mxu0 %v2289
        %2303 = vmatprep.subr.mxu0 0.0
        %2304 = vmatpush1.msra.mxu0 %v2290
        %2305 = vmatprep.subr.mxu0 0.0
        %2306 = vmatpush1.msra.mxu0 0.0
        %2307 = vmatprep.subr.mxu0 0.0
        %2308 = vmatpush1.msra.mxu0 0.0
        %2309 = vmatprep.subr.mxu0 0.0
        %2310 = vmatpush1.msra.mxu0 0.0
        %2311 = vmatprep.subr.mxu0 0.0
        %2312 = vmatpush1.msra.mxu0 0.0
        %2313 = vmatprep.subr.mxu0 0.0
        %2314 = vmatpush1.msra.mxu0 0.0
        %2315 = vmatprep.subr.mxu0 0.0
        %2316 = vmatpush1.msra.mxu0 0.0
        %2317 = vmatprep.subr.mxu0 0.0
        %2318 = vmatpush1.msra.mxu0 0.0
        %2319 = vmatprep.subr.mxu0 0.0
        %2320 = vmatpush1.msra.mxu0 0.0
        %2321 = vmatprep.subr.mxu0 0.0
        %2322 = vmatpush1.msra.mxu0 0.0
        %2323 = vmatprep.subr.mxu0 0.0
        %2324 = vmatpush1.msra.mxu0 0.0
        %2325 = vmatprep.subr.mxu0 0.0
        %2326 = vmatpush1.msra.mxu0 0.0
        %2327 = vmatprep.subr.mxu0 0.0
        %2328 = vmatpush1.msra.mxu0 0.0
        %2329 = vmatprep.subr.mxu0 0.0
        %2330 = vmatpush1.msra.mxu0 0.0
        %2331 = vmatprep.subr.mxu0 0.0
        %2332 = vmatpush1.msra.mxu0 0.0
        %2333 = vmatprep.subr.mxu0 0.0
        %2334 = vmatpush1.msra.mxu0 0.0
        %2335 = vmatprep.subr.mxu0 0.0
        %2336 = vmatpush1.msra.mxu0 0.0
        %2337 = vmatprep.subr.mxu0 0.0
        %2338 = vmatpush1.msra.mxu0 0.0
        %2339 = vmatprep.subr.mxu0 0.0
        %2340 = vmatpush1.msra.mxu0 0.0
        %2341 = vmatprep.subr.mxu0 0.0
        %2342 = vmatpush1.msra.mxu0 0.0
        %2343 = vmatprep.subr.mxu0 0.0
        %2344 = vmatpush1.msra.mxu0 0.0
        %2345 = vmatprep.subr.mxu0 0.0
        %2346 = vmatpush1.msra.mxu0 0.0
        %2347 = vmatprep.subr.mxu0 0.0
        %2348 = vmatpush1.msra.mxu0 0.0
        %2349 = vmatprep.subr.mxu0 0.0
        %2350 = vmatpush1.msra.mxu0 0.0
        %2351 = vmatprep.subr.mxu0 0.0
        %2352 = vmatpush1.msra.mxu0 0.0
        %2353 = vmatprep.subr.mxu0 0.0
        %2354 = vmatpush1.msra.mxu0 0.0
        %2355 = vmatprep.subr.mxu0 0.0
        %2356 = vmatpush1.msra.mxu0 0.0
        %2357 = vmatprep.subr.mxu0 0.0
        %2358 = vmatpush1.msra.mxu0 0.0
        %2359 = vmatprep.subr.mxu0 0.0
        %2360 = vmatpush1.msra.mxu0 0.0
        %2361 = vmatprep.mubr.f32.mxu0 0.0
        %2362 = vmatmul.mubr.f32.gmra.mrb[0].mxu0 %v2292
        %v2363 = vpop.f32.mrb[0].mxu0
        %v2364 = vadd.f32 0.0, %v2363
        %v2365 = vpop.f32.mrb[0].mxu0
        %2366 = vmatprep.mubr.f32.mxu0 0.0
        %2367 = vmatmul.mubr.f32.gmra.mrb[0].mxu0 %v2295
        %v2368 = vpop.f32.mrb[0].mxu0
        %v2369 = vadd.f32 0.0, %v2368
        %v2370 = vpop.f32.mrb[0].mxu0
        %2371 = vdwg.mxu0
        %v2372 = vld [vmem:[#allocation20] sm:$0xff]
        %v2373 = vld [vmem:[#allocation20 + $0x8] sm:$0xff]
        %v2374 = vld [vmem:[#allocation20 + $0x10] sm:$0xff]
        %v2375 = vld [vmem:[#allocation20 + $0x18] sm:$0xff]
        %2376 = vmatprep.subr.mxu0 0.0
        %2377 = vmatpush1.msra.mxu0 %v2372
        %2378 = vmatprep.subr.mxu0 0.0
        %2379 = vmatpush1.msra.mxu0 %v2373
        %2380 = vmatprep.subr.mxu0 0.0
        %2381 = vmatpush1.msra.mxu0 %v2374
        %2382 = vmatprep.subr.mxu0 0.0
        %2383 = vmatpush1.msra.mxu0 %v2375
        %2384 = vmatprep.subr.mxu0 0.0
        %2385 = vmatpush1.msra.mxu0 0.0
        %2386 = vmatprep.subr.mxu0 0.0
        %2387 = vmatpush1.msra.mxu0 0.0
        %2388 = vmatprep.subr.mxu0 0.0
        %2389 = vmatpush1.msra.mxu0 0.0
        %2390 = vmatprep.subr.mxu0 0.0
        %2391 = vmatpush1.msra.mxu0 0.0
        %2392 = vmatprep.subr.mxu0 0.0
        %2393 = vmatpush1.msra.mxu0 0.0
        %2394 = vmatprep.subr.mxu0 0.0
        %2395 = vmatpush1.msra.mxu0 0.0
        %2396 = vmatprep.subr.mxu0 0.0
        %2397 = vmatpush1.msra.mxu0 0.0
        %2398 = vmatprep.subr.mxu0 0.0
        %2399 = vmatpush1.msra.mxu0 0.0
        %2400 = vmatprep.subr.mxu0 0.0
        %2401 = vmatpush1.msra.mxu0 0.0
        %2402 = vmatprep.subr.mxu0 0.0
        %2403 = vmatpush1.msra.mxu0 0.0
        %2404 = vmatprep.subr.mxu0 0.0
        %2405 = vmatpush1.msra.mxu0 0.0
        %2406 = vmatprep.subr.mxu0 0.0
        %2407 = vmatpush1.msra.mxu0 0.0
        %2408 = vmatprep.subr.mxu0 0.0
        %2409 = vmatpush1.msra.mxu0 0.0
        %2410 = vmatprep.subr.mxu0 0.0
        %2411 = vmatpush1.msra.mxu0 0.0
        %2412 = vmatprep.subr.mxu0 0.0
        %2413 = vmatpush1.msra.mxu0 0.0
        %2414 = vmatprep.subr.mxu0 0.0
        %2415 = vmatpush1.msra.mxu0 0.0
        %2416 = vmatprep.subr.mxu0 0.0
        %2417 = vmatpush1.msra.mxu0 0.0
        %2418 = vmatprep.subr.mxu0 0.0
        %2419 = vmatpush1.msra.mxu0 0.0
        %2420 = vmatprep.subr.mxu0 0.0
        %2421 = vmatpush1.msra.mxu0 0.0
        %2422 = vmatprep.subr.mxu0 0.0
        %2423 = vmatpush1.msra.mxu0 0.0
        %2424 = vmatprep.subr.mxu0 0.0
        %2425 = vmatpush1.msra.mxu0 0.0
        %2426 = vmatprep.subr.mxu0 0.0
        %2427 = vmatpush1.msra.mxu0 0.0
        %2428 = vmatprep.subr.mxu0 0.0
        %2429 = vmatpush1.msra.mxu0 0.0
        %2430 = vmatprep.subr.mxu0 0.0
        %2431 = vmatpush1.msra.mxu0 0.0
        %2432 = vmatprep.subr.mxu0 0.0
        %2433 = vmatpush1.msra.mxu0 0.0
        %2434 = vmatprep.subr.mxu0 0.0
        %2435 = vmatpush1.msra.mxu0 0.0
        %2436 = vmatprep.subr.mxu0 0.0
        %2437 = vmatpush1.msra.mxu0 0.0
        %2438 = vmatprep.subr.mxu0 0.0
        %2439 = vmatpush1.msra.mxu0 0.0
        %2440 = vmatprep.mubr.f32.mxu0 0.0
        %2441 = vmatmul.mubr.f32.gmra.mrb[0].mxu0 %v2292
        %v2442 = vpop.f32.mrb[0].mxu0
        %v2443 = vadd.f32 0.0, %v2442
        %v2444 = vpop.f32.mrb[0].mxu0
        %2445 = vmatprep.mubr.f32.mxu0 0.0
        %2446 = vmatmul.mubr.f32.gmra.mrb[0].mxu0 %v2295
        %v2447 = vpop.f32.mrb[0].mxu0
        %v2448 = vadd.f32 0.0, %v2447
        %v2449 = vpop.f32.mrb[0].mxu0
        %2450 = vdwg.mxu0
        %v2451 = vld [vmem:[#allocation2] sm:$0xff]
        %vm2452 = vcmask 130048
        %v2454 = vsel %vm2452, %v2451, 0
        %v2457 = vsel %vm2452, %v2364, 0
        %v2460 = vsel %vm2452, %v2369, 0
        %2462 = vmatprep.subr.mxu0 0.0
        %2463 = vmatpush1.xpose.msra.mxu0 %v2457
        %2464 = vmatprep.subr.mxu0 0.0
        %2465 = vmatpush1.xpose.msra.mxu0 %v2460
        %2466 = vmatprep.subr.mxu0 0.0
        %2467 = vmatpush1.xpose.msra.mxu0 0.0
        %2468 = vmatprep.subr.mxu0 0.0
        %2469 = vmatpush1.xpose.msra.mxu0 0.0
        %2470 = vmatprep.subr.mxu0 0.0
        %2471 = vmatpush1.xpose.msra.mxu0 0.0
        %2472 = vmatprep.subr.mxu0 0.0
        %2473 = vmatpush1.xpose.msra.mxu0 0.0
        %2474 = vmatprep.subr.mxu0 0.0
        %2475 = vmatpush1.xpose.msra.mxu0 0.0
        %2476 = vmatprep.subr.mxu0 0.0
        %2477 = vmatpush1.xpose.msra.mxu0 0.0
        %2478 = vmatprep.subr.mxu0 0.0
        %2479 = vmatpush1.xpose.msra.mxu0 0.0
        %2480 = vmatprep.subr.mxu0 0.0
        %2481 = vmatpush1.xpose.msra.mxu0 0.0
        %2482 = vmatprep.subr.mxu0 0.0
        %2483 = vmatpush1.xpose.msra.mxu0 0.0
        %2484 = vmatprep.subr.mxu0 0.0
        %2485 = vmatpush1.xpose.msra.mxu0 0.0
        %2486 = vmatprep.subr.mxu0 0.0
        %2487 = vmatpush1.xpose.msra.mxu0 0.0
        %2488 = vmatprep.subr.mxu0 0.0
        %2489 = vmatpush1.xpose.msra.mxu0 0.0
        %2490 = vmatprep.subr.mxu0 0.0
        %2491 = vmatpush1.xpose.msra.mxu0 0.0
        %2492 = vmatprep.subr.mxu0 0.0
        %2493 = vmatpush1.xpose.msra.mxu0 0.0
        %2494 = vmatprep.subr.mxu0 0.0
        %2495 = vmatpush1.xpose.msra.mxu0 0.0
        %2496 = vmatprep.subr.mxu0 0.0
        %2497 = vmatpush1.xpose.msra.mxu0 0.0
        %2498 = vmatprep.subr.mxu0 0.0
        %2499 = vmatpush1.xpose.msra.mxu0 0.0
        %2500 = vmatprep.subr.mxu0 0.0
        %2501 = vmatpush1.xpose.msra.mxu0 0.0
        %2502 = vmatprep.subr.mxu0 0.0
        %2503 = vmatpush1.xpose.msra.mxu0 0.0
        %2504 = vmatprep.subr.mxu0 0.0
        %2505 = vmatpush1.xpose.msra.mxu0 0.0
        %2506 = vmatprep.subr.mxu0 0.0
        %2507 = vmatpush1.xpose.msra.mxu0 0.0
        %2508 = vmatprep.subr.mxu0 0.0
        %2509 = vmatpush1.xpose.msra.mxu0 0.0
        %2510 = vmatprep.subr.mxu0 0.0
        %2511 = vmatpush1.xpose.msra.mxu0 0.0
        %2512 = vmatprep.subr.mxu0 0.0
        %2513 = vmatpush1.xpose.msra.mxu0 0.0
        %2514 = vmatprep.subr.mxu0 0.0
        %2515 = vmatpush1.xpose.msra.mxu0 0.0
        %2516 = vmatprep.subr.mxu0 0.0
        %2517 = vmatpush1.xpose.msra.mxu0 0.0
        %2518 = vmatprep.subr.mxu0 0.0
        %2519 = vmatpush1.xpose.msra.mxu0 0.0
        %2520 = vmatprep.subr.mxu0 0.0
        %2521 = vmatpush1.xpose.msra.mxu0 0.0
        %2522 = vmatprep.subr.mxu0 0.0
        %2523 = vmatpush1.xpose.msra.mxu0 0.0
        %2524 = vmatprep.subr.mxu0 0.0
        %2525 = vmatpush1.xpose.msra.mxu0 0.0
        %2526 = vmatprep.mubr.f32.mxu0 0.0
        %2527 = vmatmul.mubr.f32.gmra.mrb[0].mxu0 %v2454
        %v2528 = vpop.f32.mrb[0].mxu0
        %v2529 = vadd.f32 0.0, %v2528
        %v2530 = vpop.f32.mrb[0].mxu0
        %2531 = vdwg.mxu0
        %v2532 = vld [vmem:[#allocation3] sm:$0xff]
        %v2533 = vsel %vm2452, %v2529, -inf
        %2534 = vmax.xlane.f32.xlu0 %v2533
        %v2535 = vpop.xlane.xlu0 %2534
        %v2536 = vmax.f32 %v2532, %v2535
        %v2537 = vsub.f32 %v2532, %v2536
        %v2538 = vmul.f32 %v2537, 1.442695
        %v2539 = vpow.pop %v2538
        %2541 = vset.pattern.permute.xlu0 0
        %2542 = vperm.xlu0 %2541, %v2536
        %v2543 = vpop.permute.xlu0 %2542
        %v2545 = vsub.f32 %v2529, %v2543
        %v2546 = vmul.f32 %v2545, 1.442695
        %v2547 = vpow.pop %v2546
        %v2548 = vld [vmem:[#allocation4] sm:$0xff]
        %v2549 = vmul.f32 %v2539, %v2548
        %v2550 = vsel %vm2452, %v2547, 0.0
        %2551 = vadd.xlane.f32.xlu0 %v2550
        %v2552 = vpop.xlane.xlu0 %2551
        %v2553 = vadd.f32 %v2549, %v2552
        %vm2554 = vcmask 7168
        %2555 = vst.msk [vmem:[#allocation4] sm:$0xff] %vm2554, %v2553
        %v2556 = vld [vmem:[#allocation5] sm:$0xff]
        %2558 = vset.pattern.permute.xlu0 0
        %2559 = vperm.xlu0 %2558, %v2539
        %v2560 = vpop.permute.xlu0 %2559
        %v2562 = vmul.f32 %v2560, %v2556
        %v2564 = vsel %vm2452, %v2547, 0
        %2566 = vmatprep.subr.mxu0 0.0
        %2567 = vmatpush1.msra.mxu0 %v2443
        %2568 = vmatprep.subr.mxu0 0.0
        %2569 = vmatpush1.msra.mxu0 %v2448
        %2570 = vmatprep.subr.mxu0 0.0
        %2571 = vmatpush1.msra.mxu0 0.0
        %2572 = vmatprep.subr.mxu0 0.0
        %2573 = vmatpush1.msra.mxu0 0.0
        %2574 = vmatprep.subr.mxu0 0.0
        %2575 = vmatpush1.msra.mxu0 0.0
        %2576 = vmatprep.subr.mxu0 0.0
        %2577 = vmatpush1.msra.mxu0 0.0
        %2578 = vmatprep.subr.mxu0 0.0
        %2579 = vmatpush1.msra.mxu0 0.0
        %2580 = vmatprep.subr.mxu0 0.0
        %2581 = vmatpush1.msra.mxu0 0.0
        %2582 = vmatprep.subr.mxu0 0.0
        %2583 = vmatpush1.msra.mxu0 0.0
        %2584 = vmatprep.subr.mxu0 0.0
        %2585 = vmatpush1.msra.mxu0 0.0
        %2586 = vmatprep.subr.mxu0 0.0
        %2587 = vmatpush1.msra.mxu0 0.0
        %2588 = vmatprep.subr.mxu0 0.0
        %2589 = vmatpush1.msra.mxu0 0.0
        %2590 = vmatprep.subr.mxu0 0.0
        %2591 = vmatpush1.msra.mxu0 0.0
        %2592 = vmatprep.subr.mxu0 0.0
        %2593 = vmatpush1.msra.mxu0 0.0
        %2594 = vmatprep.subr.mxu0 0.0
        %2595 = vmatpush1.msra.mxu0 0.0
        %2596 = vmatprep.subr.mxu0 0.0
        %2597 = vmatpush1.msra.mxu0 0.0
        %2598 = vmatprep.subr.mxu0 0.0
        %2599 = vmatpush1.msra.mxu0 0.0
        %2600 = vmatprep.subr.mxu0 0.0
        %2601 = vmatpush1.msra.mxu0 0.0
        %2602 = vmatprep.subr.mxu0 0.0
        %2603 = vmatpush1.msra.mxu0 0.0
        %2604 = vmatprep.subr.mxu0 0.0
        %2605 = vmatpush1.msra.mxu0 0.0
        %2606 = vmatprep.subr.mxu0 0.0
        %2607 = vmatpush1.msra.mxu0 0.0
        %2608 = vmatprep.subr.mxu0 0.0
        %2609 = vmatpush1.msra.mxu0 0.0
        %2610 = vmatprep.subr.mxu0 0.0
        %2611 = vmatpush1.msra.mxu0 0.0
        %2612 = vmatprep.subr.mxu0 0.0
        %2613 = vmatpush1.msra.mxu0 0.0
        %2614 = vmatprep.subr.mxu0 0.0
        %2615 = vmatpush1.msra.mxu0 0.0
        %2616 = vmatprep.subr.mxu0 0.0
        %2617 = vmatpush1.msra.mxu0 0.0
        %2618 = vmatprep.subr.mxu0 0.0
        %2619 = vmatpush1.msra.mxu0 0.0
        %2620 = vmatprep.subr.mxu0 0.0
        %2621 = vmatpush1.msra.mxu0 0.0
        %2622 = vmatprep.subr.mxu0 0.0
        %2623 = vmatpush1.msra.mxu0 0.0
        %2624 = vmatprep.subr.mxu0 0.0
        %2625 = vmatpush1.msra.mxu0 0.0
        %2626 = vmatprep.subr.mxu0 0.0
        %2627 = vmatpush1.msra.mxu0 0.0
        %2628 = vmatprep.subr.mxu0 0.0
        %2629 = vmatpush1.msra.mxu0 0.0
        %2630 = vmatprep.mubr.f32.mxu0 0.0
        %2631 = vmatmul.mubr.f32.gmra.mrb[0].mxu0 %v2564
        %v2632 = vpop.f32.mrb[0].mxu0
        %v2633 = vadd.f32 0.0, %v2632
        %v2634 = vpop.f32.mrb[0].mxu0
        %2635 = vdwg.mxu0
        %v2636 = vadd.f32 %v2562, %v2633
        %2637 = vst.msk [vmem:[#allocation5] sm:$0xff] %vm2452, %v2636
        %2638 = vst.msk [vmem:[#allocation3] sm:$0xff] %vm2554, %v2536
        %s2639 = scalar_lea.vmem [#allocation18], 32
        %v2640 = vld [vmem:[%s2639] sm:$0xff]
        %v2641 = vld [vmem:[%s2639 + $0x8] sm:$0xff]
        %v2642 = vld [vmem:[%s2639 + $0x10] sm:$0xff]
        %v2643 = vld [vmem:[%s2639 + $0x18] sm:$0xff]
        %2644 = vmatprep.subr.mxu0 0.0
        %2645 = vmatpush1.msra.mxu0 %v2640
        %2646 = vmatprep.subr.mxu0 0.0
        %2647 = vmatpush1.msra.mxu0 %v2641
        %2648 = vmatprep.subr.mxu0 0.0
        %2649 = vmatpush1.msra.mxu0 %v2642
        %2650 = vmatprep.subr.mxu0 0.0
        %2651 = vmatpush1.msra.mxu0 %v2643
        %2652 = vmatprep.subr.mxu0 0.0
        %2653 = vmatpush1.msra.mxu0 0.0
        %2654 = vmatprep.subr.mxu0 0.0
        %2655 = vmatpush1.msra.mxu0 0.0
        %2656 = vmatprep.subr.mxu0 0.0
        %2657 = vmatpush1.msra.mxu0 0.0
        %2658 = vmatprep.subr.mxu0 0.0
        %2659 = vmatpush1.msra.mxu0 0.0
        %2660 = vmatprep.subr.mxu0 0.0
        %2661 = vmatpush1.msra.mxu0 0.0
        %2662 = vmatprep.subr.mxu0 0.0
        %2663 = vmatpush1.msra.mxu0 0.0
        %2664 = vmatprep.subr.mxu0 0.0
        %2665 = vmatpush1.msra.mxu0 0.0
        %2666 = vmatprep.subr.mxu0 0.0
        %2667 = vmatpush1.msra.mxu0 0.0
        %2668 = vmatprep.subr.mxu0 0.0
        %2669 = vmatpush1.msra.mxu0 0.0
        %2670 = vmatprep.subr.mxu0 0.0
        %2671 = vmatpush1.msra.mxu0 0.0
        %2672 = vmatprep.subr.mxu0 0.0
        %2673 = vmatpush1.msra.mxu0 0.0
        %2674 = vmatprep.subr.mxu0 0.0
        %2675 = vmatpush1.msra.mxu0 0.0
        %2676 = vmatprep.subr.mxu0 0.0
        %2677 = vmatpush1.msra.mxu0 0.0
        %2678 = vmatprep.subr.mxu0 0.0
        %2679 = vmatpush1.msra.mxu0 0.0
        %2680 = vmatprep.subr.mxu0 0.0
        %2681 = vmatpush1.msra.mxu0 0.0
        %2682 = vmatprep.subr.mxu0 0.0
        %2683 = vmatpush1.msra.mxu0 0.0
        %2684 = vmatprep.subr.mxu0 0.0
        %2685 = vmatpush1.msra.mxu0 0.0
        %2686 = vmatprep.subr.mxu0 0.0
        %2687 = vmatpush1.msra.mxu0 0.0
        %2688 = vmatprep.subr.mxu0 0.0
        %2689 = vmatpush1.msra.mxu0 0.0
        %2690 = vmatprep.subr.mxu0 0.0
        %2691 = vmatpush1.msra.mxu0 0.0
        %2692 = vmatprep.subr.mxu0 0.0
        %2693 = vmatpush1.msra.mxu0 0.0
        %2694 = vmatprep.subr.mxu0 0.0
        %2695 = vmatpush1.msra.mxu0 0.0
        %2696 = vmatprep.subr.mxu0 0.0
        %2697 = vmatpush1.msra.mxu0 0.0
        %2698 = vmatprep.subr.mxu0 0.0
        %2699 = vmatpush1.msra.mxu0 0.0
        %2700 = vmatprep.subr.mxu0 0.0
        %2701 = vmatpush1.msra.mxu0 0.0
        %2702 = vmatprep.subr.mxu0 0.0
        %2703 = vmatpush1.msra.mxu0 0.0
        %2704 = vmatprep.subr.mxu0 0.0
        %2705 = vmatpush1.msra.mxu0 0.0
        %2706 = vmatprep.subr.mxu0 0.0
        %2707 = vmatpush1.msra.mxu0 0.0
        %2708 = vmatprep.mubr.f32.mxu0 0.0
        %2709 = vmatmul.mubr.f32.gmra.mrb[0].mxu0 %v2292
        %v2710 = vpop.f32.mrb[0].mxu0
        %v2711 = vadd.f32 0.0, %v2710
        %v2712 = vpop.f32.mrb[0].mxu0
        %2713 = vmatprep.mubr.f32.mxu0 0.0
        %2714 = vmatmul.mubr.f32.gmra.mrb[0].mxu0 %v2295
        %v2715 = vpop.f32.mrb[0].mxu0
        %v2716 = vadd.f32 0.0, %v2715
        %v2717 = vpop.f32.mrb[0].mxu0
        %2718 = vdwg.mxu0
        %s2719 = scalar_lea.vmem [#allocation20], 32
        %v2720 = vld [vmem:[%s2719] sm:$0xff]
        %v2721 = vld [vmem:[%s2719 + $0x8] sm:$0xff]
        %v2722 = vld [vmem:[%s2719 + $0x10] sm:$0xff]
        %v2723 = vld [vmem:[%s2719 + $0x18] sm:$0xff]
        %2724 = vmatprep.subr.mxu0 0.0
        %2725 = vmatpush1.msra.mxu0 %v2720
        %2726 = vmatprep.subr.mxu0 0.0
        %2727 = vmatpush1.msra.mxu0 %v2721
        %2728 = vmatprep.subr.mxu0 0.0
        %2729 = vmatpush1.msra.mxu0 %v2722
        %2730 = vmatprep.subr.mxu0 0.0
        %2731 = vmatpush1.msra.mxu0 %v2723
        %2732 = vmatprep.subr.mxu0 0.0
        %2733 = vmatpush1.msra.mxu0 0.0
        %2734 = vmatprep.subr.mxu0 0.0
        %2735 = vmatpush1.msra.mxu0 0.0
        %2736 = vmatprep.subr.mxu0 0.0
        %2737 = vmatpush1.msra.mxu0 0.0
        %2738 = vmatprep.subr.mxu0 0.0
        %2739 = vmatpush1.msra.mxu0 0.0
        %2740 = vmatprep.subr.mxu0 0.0
        %2741 = vmatpush1.msra.mxu0 0.0
        %2742 = vmatprep.subr.mxu0 0.0
        %2743 = vmatpush1.msra.mxu0 0.0
        %2744 = vmatprep.subr.mxu0 0.0
        %2745 = vmatpush1.msra.mxu0 0.0
        %2746 = vmatprep.subr.mxu0 0.0
        %2747 = vmatpush1.msra.mxu0 0.0
        %2748 = vmatprep.subr.mxu0 0.0
        %2749 = vmatpush1.msra.mxu0 0.0
        %2750 = vmatprep.subr.mxu0 0.0
        %2751 = vmatpush1.msra.mxu0 0.0
        %2752 = vmatprep.subr.mxu0 0.0
        %2753 = vmatpush1.msra.mxu0 0.0
        %2754 = vmatprep.subr.mxu0 0.0
        %2755 = vmatpush1.msra.mxu0 0.0
        %2756 = vmatprep.subr.mxu0 0.0
        %2757 = vmatpush1.msra.mxu0 0.0
        %2758 = vmatprep.subr.mxu0 0.0
        %2759 = vmatpush1.msra.mxu0 0.0
        %2760 = vmatprep.subr.mxu0 0.0
        %2761 = vmatpush1.msra.mxu0 0.0
        %2762 = vmatprep.subr.mxu0 0.0
        %2763 = vmatpush1.msra.mxu0 0.0
        %2764 = vmatprep.subr.mxu0 0.0
        %2765 = vmatpush1.msra.mxu0 0.0
        %2766 = vmatprep.subr.mxu0 0.0
        %2767 = vmatpush1.msra.mxu0 0.0
        %2768 = vmatprep.subr.mxu0 0.0
        %2769 = vmatpush1.msra.mxu0 0.0
        %2770 = vmatprep.subr.mxu0 0.0
        %2771 = vmatpush1.msra.mxu0 0.0
        %2772 = vmatprep.subr.mxu0 0.0
        %2773 = vmatpush1.msra.mxu0 0.0
        %2774 = vmatprep.subr.mxu0 0.0
        %2775 = vmatpush1.msra.mxu0 0.0
        %2776 = vmatprep.subr.mxu0 0.0
        %2777 = vmatpush1.msra.mxu0 0.0
        %2778 = vmatprep.subr.mxu0 0.0
        %2779 = vmatpush1.msra.mxu0 0.0
        %2780 = vmatprep.subr.mxu0 0.0
        %2781 = vmatpush1.msra.mxu0 0.0
        %2782 = vmatprep.subr.mxu0 0.0
        %2783 = vmatpush1.msra.mxu0 0.0
        %2784 = vmatprep.subr.mxu0 0.0
        %2785 = vmatpush1.msra.mxu0 0.0
        %2786 = vmatprep.subr.mxu0 0.0
        %2787 = vmatpush1.msra.mxu0 0.0
        %2788 = vmatprep.mubr.f32.mxu0 0.0
        %2789 = vmatmul.mubr.f32.gmra.mrb[0].mxu0 %v2292
        %v2790 = vpop.f32.mrb[0].mxu0
        %v2791 = vadd.f32 0.0, %v2790
        %v2792 = vpop.f32.mrb[0].mxu0
        %2793 = vmatprep.mubr.f32.mxu0 0.0
        %2794 = vmatmul.mubr.f32.gmra.mrb[0].mxu0 %v2295
        %v2795 = vpop.f32.mrb[0].mxu0
        %v2796 = vadd.f32 0.0, %v2795
        %v2797 = vpop.f32.mrb[0].mxu0
        %2798 = vdwg.mxu0
        %s2799 = scalar_lea.vmem [#allocation2], 8
        %v2800 = vld [vmem:[%s2799] sm:$0xff]
        %v2802 = vsel %vm2452, %v2800, 0
        %v2805 = vsel %vm2452, %v2711, 0
        %v2808 = vsel %vm2452, %v2716, 0
        %2810 = vmatprep.subr.mxu0 0.0
        %2811 = vmatpush1.xpose.msra.mxu0 %v2805
        %2812 = vmatprep.subr.mxu0 0.0
        %2813 = vmatpush1.xpose.msra.mxu0 %v2808
        %2814 = vmatprep.subr.mxu0 0.0
        %2815 = vmatpush1.xpose.msra.mxu0 0.0
        %2816 = vmatprep.subr.mxu0 0.0
        %2817 = vmatpush1.xpose.msra.mxu0 0.0
        %2818 = vmatprep.subr.mxu0 0.0
        %2819 = vmatpush1.xpose.msra.mxu0 0.0
        %2820 = vmatprep.subr.mxu0 0.0
        %2821 = vmatpush1.xpose.msra.mxu0 0.0
        %2822 = vmatprep.subr.mxu0 0.0
        %2823 = vmatpush1.xpose.msra.mxu0 0.0
        %2824 = vmatprep.subr.mxu0 0.0
        %2825 = vmatpush1.xpose.msra.mxu0 0.0
        %2826 = vmatprep.subr.mxu0 0.0
        %2827 = vmatpush1.xpose.msra.mxu0 0.0
        %2828 = vmatprep.subr.mxu0 0.0
        %2829 = vmatpush1.xpose.msra.mxu0 0.0
        %2830 = vmatprep.subr.mxu0 0.0
        %2831 = vmatpush1.xpose.msra.mxu0 0.0
        %2832 = vmatprep.subr.mxu0 0.0
        %2833 = vmatpush1.xpose.msra.mxu0 0.0
        %2834 = vmatprep.subr.mxu0 0.0
        %2835 = vmatpush1.xpose.msra.mxu0 0.0
        %2836 = vmatprep.subr.mxu0 0.0
        %2837 = vmatpush1.xpose.msra.mxu0 0.0
        %2838 = vmatprep.subr.mxu0 0.0
        %2839 = vmatpush1.xpose.msra.mxu0 0.0
        %2840 = vmatprep.subr.mxu0 0.0
        %2841 = vmatpush1.xpose.msra.mxu0 0.0
        %2842 = vmatprep.subr.mxu0 0.0
        %2843 = vmatpush1.xpose.msra.mxu0 0.0
        %2844 = vmatprep.subr.mxu0 0.0
        %2845 = vmatpush1.xpose.msra.mxu0 0.0
        %2846 = vmatprep.subr.mxu0 0.0
        %2847 = vmatpush1.xpose.msra.mxu0 0.0
        %2848 = vmatprep.subr.mxu0 0.0
        %2849 = vmatpush1.xpose.msra.mxu0 0.0
        %2850 = vmatprep.subr.mxu0 0.0
        %2851 = vmatpush1.xpose.msra.mxu0 0.0
        %2852 = vmatprep.subr.mxu0 0.0
        %2853 = vmatpush1.xpose.msra.mxu0 0.0
        %2854 = vmatprep.subr.mxu0 0.0
        %2855 = vmatpush1.xpose.msra.mxu0 0.0
        %2856 = vmatprep.subr.mxu0 0.0
        %2857 = vmatpush1.xpose.msra.mxu0 0.0
        %2858 = vmatprep.subr.mxu0 0.0
        %2859 = vmatpush1.xpose.msra.mxu0 0.0
        %2860 = vmatprep.subr.mxu0 0.0
        %2861 = vmatpush1.xpose.msra.mxu0 0.0
        %2862 = vmatprep.subr.mxu0 0.0
        %2863 = vmatpush1.xpose.msra.mxu0 0.0
        %2864 = vmatprep.subr.mxu0 0.0
        %2865 = vmatpush1.xpose.msra.mxu0 0.0
        %2866 = vmatprep.subr.mxu0 0.0
        %2867 = vmatpush1.xpose.msra.mxu0 0.0
        %2868 = vmatprep.subr.mxu0 0.0
        %2869 = vmatpush1.xpose.msra.mxu0 0.0
        %2870 = vmatprep.subr.mxu0 0.0
        %2871 = vmatpush1.xpose.msra.mxu0 0.0
        %2872 = vmatprep.subr.mxu0 0.0
        %2873 = vmatpush1.xpose.msra.mxu0 0.0
        %2874 = vmatprep.mubr.f32.mxu0 0.0
        %2875 = vmatmul.mubr.f32.gmra.mrb[0].mxu0 %v2802
        %v2876 = vpop.f32.mrb[0].mxu0
        %v2877 = vadd.f32 0.0, %v2876
        %v2878 = vpop.f32.mrb[0].mxu0
        %2879 = vdwg.mxu0
        %s2880 = scalar_lea.vmem [#allocation3], 8
        %v2881 = vld [vmem:[%s2880] sm:$0xff]
        %v2882 = vsel %vm2452, %v2877, -inf
        %2883 = vmax.xlane.f32.xlu0 %v2882
        %v2884 = vpop.xlane.xlu0 %2883
        %v2885 = vmax.f32 %v2881, %v2884
        %v2886 = vsub.f32 %v2881, %v2885
        %v2887 = vmul.f32 %v2886, 1.442695
        %v2888 = vpow.pop %v2887
        %2890 = vset.pattern.permute.xlu0 0
        %2891 = vperm.xlu0 %2890, %v2885
        %v2892 = vpop.permute.xlu0 %2891
        %v2894 = vsub.f32 %v2877, %v2892
        %v2895 = vmul.f32 %v2894, 1.442695
        %v2896 = vpow.pop %v2895
        %s2897 = scalar_lea.vmem [#allocation4], 8
        %v2898 = vld [vmem:[%s2897] sm:$0xff]
        %v2899 = vmul.f32 %v2888, %v2898
        %v2900 = vsel %vm2452, %v2896, 0.0
        %2901 = vadd.xlane.f32.xlu0 %v2900
        %v2902 = vpop.xlane.xlu0 %2901
        %v2903 = vadd.f32 %v2899, %v2902
        %2904 = vst.msk [vmem:[%s2897] sm:$0xff] %vm2554, %v2903
        %s2905 = scalar_lea.vmem [#allocation5], 8
        %v2906 = vld [vmem:[%s2905] sm:$0xff]
        %2908 = vset.pattern.permute.xlu0 0
        %2909 = vperm.xlu0 %2908, %v2888
        %v2910 = vpop.permute.xlu0 %2909
        %v2912 = vmul.f32 %v2910, %v2906
        %v2914 = vsel %vm2452, %v2896, 0
        %2916 = vmatprep.subr.mxu0 0.0
        %2917 = vmatpush1.msra.mxu0 %v2791
        %2918 = vmatprep.subr.mxu0 0.0
        %2919 = vmatpush1.msra.mxu0 %v2796
        %2920 = vmatprep.subr.mxu0 0.0
        %2921 = vmatpush1.msra.mxu0 0.0
        %2922 = vmatprep.subr.mxu0 0.0
        %2923 = vmatpush1.msra.mxu0 0.0
        %2924 = vmatprep.subr.mxu0 0.0
        %2925 = vmatpush1.msra.mxu0 0.0
        %2926 = vmatprep.subr.mxu0 0.0
        %2927 = vmatpush1.msra.mxu0 0.0
        %2928 = vmatprep.subr.mxu0 0.0
        %2929 = vmatpush1.msra.mxu0 0.0
        %2930 = vmatprep.subr.mxu0 0.0
        %2931 = vmatpush1.msra.mxu0 0.0
        %2932 = vmatprep.subr.mxu0 0.0
        %2933 = vmatpush1.msra.mxu0 0.0
        %2934 = vmatprep.subr.mxu0 0.0
        %2935 = vmatpush1.msra.mxu0 0.0
        %2936 = vmatprep.subr.mxu0 0.0
        %2937 = vmatpush1.msra.mxu0 0.0
        %2938 = vmatprep.subr.mxu0 0.0
        %2939 = vmatpush1.msra.mxu0 0.0
        %2940 = vmatprep.subr.mxu0 0.0
        %2941 = vmatpush1.msra.mxu0 0.0
        %2942 = vmatprep.subr.mxu0 0.0
        %2943 = vmatpush1.msra.mxu0 0.0
        %2944 = vmatprep.subr.mxu0 0.0
        %2945 = vmatpush1.msra.mxu0 0.0
        %2946 = vmatprep.subr.mxu0 0.0
        %2947 = vmatpush1.msra.mxu0 0.0
        %2948 = vmatprep.subr.mxu0 0.0
        %2949 = vmatpush1.msra.mxu0 0.0
        %2950 = vmatprep.subr.mxu0 0.0
        %2951 = vmatpush1.msra.mxu0 0.0
        %2952 = vmatprep.subr.mxu0 0.0
        %2953 = vmatpush1.msra.mxu0 0.0
        %2954 = vmatprep.subr.mxu0 0.0
        %2955 = vmatpush1.msra.mxu0 0.0
        %2956 = vmatprep.subr.mxu0 0.0
        %2957 = vmatpush1.msra.mxu0 0.0
        %2958 = vmatprep.subr.mxu0 0.0
        %2959 = vmatpush1.msra.mxu0 0.0
        %2960 = vmatprep.subr.mxu0 0.0
        %2961 = vmatpush1.msra.mxu0 0.0
        %2962 = vmatprep.subr.mxu0 0.0
        %2963 = vmatpush1.msra.mxu0 0.0
        %2964 = vmatprep.subr.mxu0 0.0
        %2965 = vmatpush1.msra.mxu0 0.0
        %2966 = vmatprep.subr.mxu0 0.0
        %2967 = vmatpush1.msra.mxu0 0.0
        %2968 = vmatprep.subr.mxu0 0.0
        %2969 = vmatpush1.msra.mxu0 0.0
        %2970 = vmatprep.subr.mxu0 0.0
        %2971 = vmatpush1.msra.mxu0 0.0
        %2972 = vmatprep.subr.mxu0 0.0
        %2973 = vmatpush1.msra.mxu0 0.0
        %2974 = vmatprep.subr.mxu0 0.0
        %2975 = vmatpush1.msra.mxu0 0.0
        %2976 = vmatprep.subr.mxu0 0.0
        %2977 = vmatpush1.msra.mxu0 0.0
        %2978 = vmatprep.subr.mxu0 0.0
        %2979 = vmatpush1.msra.mxu0 0.0
        %2980 = vmatprep.mubr.f32.mxu0 0.0
        %2981 = vmatmul.mubr.f32.gmra.mrb[0].mxu0 %v2914
        %v2982 = vpop.f32.mrb[0].mxu0
        %v2983 = vadd.f32 0.0, %v2982
        %v2984 = vpop.f32.mrb[0].mxu0
        %2985 = vdwg.mxu0
        %v2986 = vadd.f32 %v2912, %v2983
        %2987 = vst.msk [vmem:[%s2905] sm:$0xff] %vm2452, %v2986
        %2988 = vst.msk [vmem:[%s2880] sm:$0xff] %vm2554, %v2885
        %s2989 = scalar_lea.vmem [#allocation18], 64
        %v2990 = vld [vmem:[%s2989] sm:$0xff]
        %v2991 = vld [vmem:[%s2989 + $0x8] sm:$0xff]
        %v2992 = vld [vmem:[%s2989 + $0x10] sm:$0xff]
        %v2993 = vld [vmem:[%s2989 + $0x18] sm:$0xff]
        %2994 = vmatprep.subr.mxu0 0.0
        %2995 = vmatpush1.msra.mxu0 %v2990
        %2996 = vmatprep.subr.mxu0 0.0
        %2997 = vmatpush1.msra.mxu0 %v2991
        %2998 = vmatprep.subr.mxu0 0.0
        %2999 = vmatpush1.msra.mxu0 %v2992
        %3000 = vmatprep.subr.mxu0 0.0
        %3001 = vmatpush1.msra.mxu0 %v2993
        %3002 = vmatprep.subr.mxu0 0.0
        %3003 = vmatpush1.msra.mxu0 0.0
        %3004 = vmatprep.subr.mxu0 0.0
        %3005 = vmatpush1.msra.mxu0 0.0
        %3006 = vmatprep.subr.mxu0 0.0
        %3007 = vmatpush1.msra.mxu0 0.0
        %3008 = vmatprep.subr.mxu0 0.0
        %3009 = vmatpush1.msra.mxu0 0.0
        %3010 = vmatprep.subr.mxu0 0.0
        %3011 = vmatpush1.msra.mxu0 0.0
        %3012 = vmatprep.subr.mxu0 0.0
        %3013 = vmatpush1.msra.mxu0 0.0
        %3014 = vmatprep.subr.mxu0 0.0
        %3015 = vmatpush1.msra.mxu0 0.0
        %3016 = vmatprep.subr.mxu0 0.0
        %3017 = vmatpush1.msra.mxu0 0.0
        %3018 = vmatprep.subr.mxu0 0.0
        %3019 = vmatpush1.msra.mxu0 0.0
        %3020 = vmatprep.subr.mxu0 0.0
        %3021 = vmatpush1.msra.mxu0 0.0
        %3022 = vmatprep.subr.mxu0 0.0
        %3023 = vmatpush1.msra.mxu0 0.0
        %3024 = vmatprep.subr.mxu0 0.0
        %3025 = vmatpush1.msra.mxu0 0.0
        %3026 = vmatprep.subr.mxu0 0.0
        %3027 = vmatpush1.msra.mxu0 0.0
        %3028 = vmatprep.subr.mxu0 0.0
        %3029 = vmatpush1.msra.mxu0 0.0
        %3030 = vmatprep.subr.mxu0 0.0
        %3031 = vmatpush1.msra.mxu0 0.0
        %3032 = vmatprep.subr.mxu0 0.0
        %3033 = vmatpush1.msra.mxu0 0.0
        %3034 = vmatprep.subr.mxu0 0.0
        %3035 = vmatpush1.msra.mxu0 0.0
        %3036 = vmatprep.subr.mxu0 0.0
        %3037 = vmatpush1.msra.mxu0 0.0
        %3038 = vmatprep.subr.mxu0 0.0
        %3039 = vmatpush1.msra.mxu0 0.0
        %3040 = vmatprep.subr.mxu0 0.0
        %3041 = vmatpush1.msra.mxu0 0.0
        %3042 = vmatprep.subr.mxu0 0.0
        %3043 = vmatpush1.msra.mxu0 0.0
        %3044 = vmatprep.subr.mxu0 0.0
        %3045 = vmatpush1.msra.mxu0 0.0
        %3046 = vmatprep.subr.mxu0 0.0
        %3047 = vmatpush1.msra.mxu0 0.0
        %3048 = vmatprep.subr.mxu0 0.0
        %3049 = vmatpush1.msra.mxu0 0.0
        %3050 = vmatprep.subr.mxu0 0.0
        %3051 = vmatpush1.msra.mxu0 0.0
        %3052 = vmatprep.subr.mxu0 0.0
        %3053 = vmatpush1.msra.mxu0 0.0
        %3054 = vmatprep.subr.mxu0 0.0
        %3055 = vmatpush1.msra.mxu0 0.0
        %3056 = vmatprep.subr.mxu0 0.0
        %3057 = vmatpush1.msra.mxu0 0.0
        %3058 = vmatprep.mubr.f32.mxu0 0.0
        %3059 = vmatmul.mubr.f32.gmra.mrb[0].mxu0 %v2292
        %v3060 = vpop.f32.mrb[0].mxu0
        %v3061 = vadd.f32 0.0, %v3060
        %v3062 = vpop.f32.mrb[0].mxu0
        %3063 = vmatprep.mubr.f32.mxu0 0.0
        %3064 = vmatmul.mubr.f32.gmra.mrb[0].mxu0 %v2295
        %v3065 = vpop.f32.mrb[0].mxu0
        %v3066 = vadd.f32 0.0, %v3065
        %v3067 = vpop.f32.mrb[0].mxu0
        %3068 = vdwg.mxu0
        %s3069 = scalar_lea.vmem [#allocation20], 64
        %v3070 = vld [vmem:[%s3069] sm:$0xff]
        %v3071 = vld [vmem:[%s3069 + $0x8] sm:$0xff]
        %v3072 = vld [vmem:[%s3069 + $0x10] sm:$0xff]
        %v3073 = vld [vmem:[%s3069 + $0x18] sm:$0xff]
        %3074 = vmatprep.subr.mxu0 0.0
        %3075 = vmatpush1.msra.mxu0 %v3070
        %3076 = vmatprep.subr.mxu0 0.0
        %3077 = vmatpush1.msra.mxu0 %v3071
        %3078 = vmatprep.subr.mxu0 0.0
        %3079 = vmatpush1.msra.mxu0 %v3072
        %3080 = vmatprep.subr.mxu0 0.0
        %3081 = vmatpush1.msra.mxu0 %v3073
        %3082 = vmatprep.subr.mxu0 0.0
        %3083 = vmatpush1.msra.mxu0 0.0
        %3084 = vmatprep.subr.mxu0 0.0
        %3085 = vmatpush1.msra.mxu0 0.0
        %3086 = vmatprep.subr.mxu0 0.0
        %3087 = vmatpush1.msra.mxu0 0.0
        %3088 = vmatprep.subr.mxu0 0.0
        %3089 = vmatpush1.msra.mxu0 0.0
        %3090 = vmatprep.subr.mxu0 0.0
        %3091 = vmatpush1.msra.mxu0 0.0
        %3092 = vmatprep.subr.mxu0 0.0
        %3093 = vmatpush1.msra.mxu0 0.0
        %3094 = vmatprep.subr.mxu0 0.0
        %3095 = vmatpush1.msra.mxu0 0.0
        %3096 = vmatprep.subr.mxu0 0.0
        %3097 = vmatpush1.msra.mxu0 0.0
        %3098 = vmatprep.subr.mxu0 0.0
        %3099 = vmatpush1.msra.mxu0 0.0
        %3100 = vmatprep.subr.mxu0 0.0
        %3101 = vmatpush1.msra.mxu0 0.0
        %3102 = vmatprep.subr.mxu0 0.0
        %3103 = vmatpush1.msra.mxu0 0.0
        %3104 = vmatprep.subr.mxu0 0.0
        %3105 = vmatpush1.msra.mxu0 0.0
        %3106 = vmatprep.subr.mxu0 0.0
        %3107 = vmatpush1.msra.mxu0 0.0
        %3108 = vmatprep.subr.mxu0 0.0
        %3109 = vmatpush1.msra.mxu0 0.0
        %3110 = vmatprep.subr.mxu0 0.0
        %3111 = vmatpush1.msra.mxu0 0.0
        %3112 = vmatprep.subr.mxu0 0.0
        %3113 = vmatpush1.msra.mxu0 0.0
        %3114 = vmatprep.subr.mxu0 0.0
        %3115 = vmatpush1.msra.mxu0 0.0
        %3116 = vmatprep.subr.mxu0 0.0
        %3117 = vmatpush1.msra.mxu0 0.0
        %3118 = vmatprep.subr.mxu0 0.0
        %3119 = vmatpush1.msra.mxu0 0.0
        %3120 = vmatprep.subr.mxu0 0.0
        %3121 = vmatpush1.msra.mxu0 0.0
        %3122 = vmatprep.subr.mxu0 0.0
        %3123 = vmatpush1.msra.mxu0 0.0
        %3124 = vmatprep.subr.mxu0 0.0
        %3125 = vmatpush1.msra.mxu0 0.0
        %3126 = vmatprep.subr.mxu0 0.0
        %3127 = vmatpush1.msra.mxu0 0.0
        %3128 = vmatprep.subr.mxu0 0.0
        %3129 = vmatpush1.msra.mxu0 0.0
        %3130 = vmatprep.subr.mxu0 0.0
        %3131 = vmatpush1.msra.mxu0 0.0
        %3132 = vmatprep.subr.mxu0 0.0
        %3133 = vmatpush1.msra.mxu0 0.0
        %3134 = vmatprep.subr.mxu0 0.0
        %3135 = vmatpush1.msra.mxu0 0.0
        %3136 = vmatprep.subr.mxu0 0.0
        %3137 = vmatpush1.msra.mxu0 0.0
        %3138 = vmatprep.mubr.f32.mxu0 0.0
        %3139 = vmatmul.mubr.f32.gmra.mrb[0].mxu0 %v2292
        %v3140 = vpop.f32.mrb[0].mxu0
        %v3141 = vadd.f32 0.0, %v3140
        %v3142 = vpop.f32.mrb[0].mxu0
        %3143 = vmatprep.mubr.f32.mxu0 0.0
        %3144 = vmatmul.mubr.f32.gmra.mrb[0].mxu0 %v2295
        %v3145 = vpop.f32.mrb[0].mxu0
        %v3146 = vadd.f32 0.0, %v3145
        %v3147 = vpop.f32.mrb[0].mxu0
        %3148 = vdwg.mxu0
        %s3149 = scalar_lea.vmem [#allocation2], 16
        %v3150 = vld [vmem:[%s3149] sm:$0xff]
        %v3152 = vsel %vm2452, %v3150, 0
        %v3155 = vsel %vm2452, %v3061, 0
        %v3158 = vsel %vm2452, %v3066, 0
        %3160 = vmatprep.subr.mxu0 0.0
        %3161 = vmatpush1.xpose.msra.mxu0 %v3155
        %3162 = vmatprep.subr.mxu0 0.0
        %3163 = vmatpush1.xpose.msra.mxu0 %v3158
        %3164 = vmatprep.subr.mxu0 0.0
        %3165 = vmatpush1.xpose.msra.mxu0 0.0
        %3166 = vmatprep.subr.mxu0 0.0
        %3167 = vmatpush1.xpose.msra.mxu0 0.0
        %3168 = vmatprep.subr.mxu0 0.0
        %3169 = vmatpush1.xpose.msra.mxu0 0.0
        %3170 = vmatprep.subr.mxu0 0.0
        %3171 = vmatpush1.xpose.msra.mxu0 0.0
        %3172 = vmatprep.subr.mxu0 0.0
        %3173 = vmatpush1.xpose.msra.mxu0 0.0
        %3174 = vmatprep.subr.mxu0 0.0
        %3175 = vmatpush1.xpose.msra.mxu0 0.0
        %3176 = vmatprep.subr.mxu0 0.0
        %3177 = vmatpush1.xpose.msra.mxu0 0.0
        %3178 = vmatprep.subr.mxu0 0.0
        %3179 = vmatpush1.xpose.msra.mxu0 0.0
        %3180 = vmatprep.subr.mxu0 0.0
        %3181 = vmatpush1.xpose.msra.mxu0 0.0
        %3182 = vmatprep.subr.mxu0 0.0
        %3183 = vmatpush1.xpose.msra.mxu0 0.0
        %3184 = vmatprep.subr.mxu0 0.0
        %3185 = vmatpush1.xpose.msra.mxu0 0.0
        %3186 = vmatprep.subr.mxu0 0.0
        %3187 = vmatpush1.xpose.msra.mxu0 0.0
        %3188 = vmatprep.subr.mxu0 0.0
        %3189 = vmatpush1.xpose.msra.mxu0 0.0
        %3190 = vmatprep.subr.mxu0 0.0
        %3191 = vmatpush1.xpose.msra.mxu0 0.0
        %3192 = vmatprep.subr.mxu0 0.0
        %3193 = vmatpush1.xpose.msra.mxu0 0.0
        %3194 = vmatprep.subr.mxu0 0.0
        %3195 = vmatpush1.xpose.msra.mxu0 0.0
        %3196 = vmatprep.subr.mxu0 0.0
        %3197 = vmatpush1.xpose.msra.mxu0 0.0
        %3198 = vmatprep.subr.mxu0 0.0
        %3199 = vmatpush1.xpose.msra.mxu0 0.0
        %3200 = vmatprep.subr.mxu0 0.0
        %3201 = vmatpush1.xpose.msra.mxu0 0.0
        %3202 = vmatprep.subr.mxu0 0.0
        %3203 = vmatpush1.xpose.msra.mxu0 0.0
        %3204 = vmatprep.subr.mxu0 0.0
        %3205 = vmatpush1.xpose.msra.mxu0 0.0
        %3206 = vmatprep.subr.mxu0 0.0
        %3207 = vmatpush1.xpose.msra.mxu0 0.0
        %3208 = vmatprep.subr.mxu0 0.0
        %3209 = vmatpush1.xpose.msra.mxu0 0.0
        %3210 = vmatprep.subr.mxu0 0.0
        %3211 = vmatpush1.xpose.msra.mxu0 0.0
        %3212 = vmatprep.subr.mxu0 0.0
        %3213 = vmatpush1.xpose.msra.mxu0 0.0
        %3214 = vmatprep.subr.mxu0 0.0
        %3215 = vmatpush1.xpose.msra.mxu0 0.0
        %3216 = vmatprep.subr.mxu0 0.0
        %3217 = vmatpush1.xpose.msra.mxu0 0.0
        %3218 = vmatprep.subr.mxu0 0.0
        %3219 = vmatpush1.xpose.msra.mxu0 0.0
        %3220 = vmatprep.subr.mxu0 0.0
        %3221 = vmatpush1.xpose.msra.mxu0 0.0
        %3222 = vmatprep.subr.mxu0 0.0
        %3223 = vmatpush1.xpose.msra.mxu0 0.0
        %3224 = vmatprep.mubr.f32.mxu0 0.0
        %3225 = vmatmul.mubr.f32.gmra.mrb[0].mxu0 %v3152
        %v3226 = vpop.f32.mrb[0].mxu0
        %v3227 = vadd.f32 0.0, %v3226
        %v3228 = vpop.f32.mrb[0].mxu0
        %3229 = vdwg.mxu0
        %s3230 = scalar_lea.vmem [#allocation3], 16
        %v3231 = vld [vmem:[%s3230] sm:$0xff]
        %v3232 = vsel %vm2452, %v3227, -inf
        %3233 = vmax.xlane.f32.xlu0 %v3232
        %v3234 = vpop.xlane.xlu0 %3233
        %v3235 = vmax.f32 %v3231, %v3234
        %v3236 = vsub.f32 %v3231, %v3235
        %v3237 = vmul.f32 %v3236, 1.442695
        %v3238 = vpow.pop %v3237
        %3240 = vset.pattern.permute.xlu0 0
        %3241 = vperm.xlu0 %3240, %v3235
        %v3242 = vpop.permute.xlu0 %3241
        %v3244 = vsub.f32 %v3227, %v3242
        %v3245 = vmul.f32 %v3244, 1.442695
        %v3246 = vpow.pop %v3245
        %s3247 = scalar_lea.vmem [#allocation4], 16
        %v3248 = vld [vmem:[%s3247] sm:$0xff]
        %v3249 = vmul.f32 %v3238, %v3248
        %v3250 = vsel %vm2452, %v3246, 0.0
        %3251 = vadd.xlane.f32.xlu0 %v3250
        %v3252 = vpop.xlane.xlu0 %3251
        %v3253 = vadd.f32 %v3249, %v3252
        %3254 = vst.msk [vmem:[%s3247] sm:$0xff] %vm2554, %v3253
        %s3255 = scalar_lea.vmem [#allocation5], 16
        %v3256 = vld [vmem:[%s3255] sm:$0xff]
        %3258 = vset.pattern.permute.xlu0 0
        %3259 = vperm.xlu0 %3258, %v3238
        %v3260 = vpop.permute.xlu0 %3259
        %v3262 = vmul.f32 %v3260, %v3256
        %v3264 = vsel %vm2452, %v3246, 0
        %3266 = vmatprep.subr.mxu0 0.0
        %3267 = vmatpush1.msra.mxu0 %v3141
        %3268 = vmatprep.subr.mxu0 0.0
        %3269 = vmatpush1.msra.mxu0 %v3146
        %3270 = vmatprep.subr.mxu0 0.0
        %3271 = vmatpush1.msra.mxu0 0.0
        %3272 = vmatprep.subr.mxu0 0.0
        %3273 = vmatpush1.msra.mxu0 0.0
        %3274 = vmatprep.subr.mxu0 0.0
        %3275 = vmatpush1.msra.mxu0 0.0
        %3276 = vmatprep.subr.mxu0 0.0
        %3277 = vmatpush1.msra.mxu0 0.0
        %3278 = vmatprep.subr.mxu0 0.0
        %3279 = vmatpush1.msra.mxu0 0.0
        %3280 = vmatprep.subr.mxu0 0.0
        %3281 = vmatpush1.msra.mxu0 0.0
        %3282 = vmatprep.subr.mxu0 0.0
        %3283 = vmatpush1.msra.mxu0 0.0
        %3284 = vmatprep.subr.mxu0 0.0
        %3285 = vmatpush1.msra.mxu0 0.0
        %3286 = vmatprep.subr.mxu0 0.0
        %3287 = vmatpush1.msra.mxu0 0.0
        %3288 = vmatprep.subr.mxu0 0.0
        %3289 = vmatpush1.msra.mxu0 0.0
        %3290 = vmatprep.subr.mxu0 0.0
        %3291 = vmatpush1.msra.mxu0 0.0
        %3292 = vmatprep.subr.mxu0 0.0
        %3293 = vmatpush1.msra.mxu0 0.0
        %3294 = vmatprep.subr.mxu0 0.0
        %3295 = vmatpush1.msra.mxu0 0.0
        %3296 = vmatprep.subr.mxu0 0.0
        %3297 = vmatpush1.msra.mxu0 0.0
        %3298 = vmatprep.subr.mxu0 0.0
        %3299 = vmatpush1.msra.mxu0 0.0
        %3300 = vmatprep.subr.mxu0 0.0
        %3301 = vmatpush1.msra.mxu0 0.0
        %3302 = vmatprep.subr.mxu0 0.0
        %3303 = vmatpush1.msra.mxu0 0.0
        %3304 = vmatprep.subr.mxu0 0.0
        %3305 = vmatpush1.msra.mxu0 0.0
        %3306 = vmatprep.subr.mxu0 0.0
        %3307 = vmatpush1.msra.mxu0 0.0
        %3308 = vmatprep.subr.mxu0 0.0
        %3309 = vmatpush1.msra.mxu0 0.0
        %3310 = vmatprep.subr.mxu0 0.0
        %3311 = vmatpush1.msra.mxu0 0.0
        %3312 = vmatprep.subr.mxu0 0.0
        %3313 = vmatpush1.msra.mxu0 0.0
        %3314 = vmatprep.subr.mxu0 0.0
        %3315 = vmatpush1.msra.mxu0 0.0
        %3316 = vmatprep.subr.mxu0 0.0
        %3317 = vmatpush1.msra.mxu0 0.0
        %3318 = vmatprep.subr.mxu0 0.0
        %3319 = vmatpush1.msra.mxu0 0.0
        %3320 = vmatprep.subr.mxu0 0.0
        %3321 = vmatpush1.msra.mxu0 0.0
        %3322 = vmatprep.subr.mxu0 0.0
        %3323 = vmatpush1.msra.mxu0 0.0
        %3324 = vmatprep.subr.mxu0 0.0
        %3325 = vmatpush1.msra.mxu0 0.0
        %3326 = vmatprep.subr.mxu0 0.0
        %3327 = vmatpush1.msra.mxu0 0.0
        %3328 = vmatprep.subr.mxu0 0.0
        %3329 = vmatpush1.msra.mxu0 0.0
        %3330 = vmatprep.mubr.f32.mxu0 0.0
        %3331 = vmatmul.mubr.f32.gmra.mrb[0].mxu0 %v3264
        %v3332 = vpop.f32.mrb[0].mxu0
        %v3333 = vadd.f32 0.0, %v3332
        %v3334 = vpop.f32.mrb[0].mxu0
        %3335 = vdwg.mxu0
        %v3336 = vadd.f32 %v3262, %v3333
        %3337 = vst.msk [vmem:[%s3255] sm:$0xff] %vm2452, %v3336
        %3338 = vst.msk [vmem:[%s3230] sm:$0xff] %vm2554, %v3235
        %s3339 = scalar_lea.vmem [#allocation18], 96
        %v3340 = vld [vmem:[%s3339] sm:$0xff]
        %v3341 = vld [vmem:[%s3339 + $0x8] sm:$0xff]
        %v3342 = vld [vmem:[%s3339 + $0x10] sm:$0xff]
        %v3343 = vld [vmem:[%s3339 + $0x18] sm:$0xff]
        %3344 = vmatprep.subr.mxu0 0.0
        %3345 = vmatpush1.msra.mxu0 %v3340
        %3346 = vmatprep.subr.mxu0 0.0
        %3347 = vmatpush1.msra.mxu0 %v3341
        %3348 = vmatprep.subr.mxu0 0.0
        %3349 = vmatpush1.msra.mxu0 %v3342
        %3350 = vmatprep.subr.mxu0 0.0
        %3351 = vmatpush1.msra.mxu0 %v3343
        %3352 = vmatprep.subr.mxu0 0.0
        %3353 = vmatpush1.msra.mxu0 0.0
        %3354 = vmatprep.subr.mxu0 0.0
        %3355 = vmatpush1.msra.mxu0 0.0
        %3356 = vmatprep.subr.mxu0 0.0
        %3357 = vmatpush1.msra.mxu0 0.0
        %3358 = vmatprep.subr.mxu0 0.0
        %3359 = vmatpush1.msra.mxu0 0.0
        %3360 = vmatprep.subr.mxu0 0.0
        %3361 = vmatpush1.msra.mxu0 0.0
        %3362 = vmatprep.subr.mxu0 0.0
        %3363 = vmatpush1.msra.mxu0 0.0
        %3364 = vmatprep.subr.mxu0 0.0
        %3365 = vmatpush1.msra.mxu0 0.0
        %3366 = vmatprep.subr.mxu0 0.0
        %3367 = vmatpush1.msra.mxu0 0.0
        %3368 = vmatprep.subr.mxu0 0.0
        %3369 = vmatpush1.msra.mxu0 0.0
        %3370 = vmatprep.subr.mxu0 0.0
        %3371 = vmatpush1.msra.mxu0 0.0
        %3372 = vmatprep.subr.mxu0 0.0
        %3373 = vmatpush1.msra.mxu0 0.0
        %3374 = vmatprep.subr.mxu0 0.0
        %3375 = vmatpush1.msra.mxu0 0.0
        %3376 = vmatprep.subr.mxu0 0.0
        %3377 = vmatpush1.msra.mxu0 0.0
        %3378 = vmatprep.subr.mxu0 0.0
        %3379 = vmatpush1.msra.mxu0 0.0
        %3380 = vmatprep.subr.mxu0 0.0
        %3381 = vmatpush1.msra.mxu0 0.0
        %3382 = vmatprep.subr.mxu0 0.0
        %3383 = vmatpush1.msra.mxu0 0.0
        %3384 = vmatprep.subr.mxu0 0.0
        %3385 = vmatpush1.msra.mxu0 0.0
        %3386 = vmatprep.subr.mxu0 0.0
        %3387 = vmatpush1.msra.mxu0 0.0
        %3388 = vmatprep.subr.mxu0 0.0
        %3389 = vmatpush1.msra.mxu0 0.0
        %3390 = vmatprep.subr.mxu0 0.0
        %3391 = vmatpush1.msra.mxu0 0.0
        %3392 = vmatprep.subr.mxu0 0.0
        %3393 = vmatpush1.msra.mxu0 0.0
        %3394 = vmatprep.subr.mxu0 0.0
        %3395 = vmatpush1.msra.mxu0 0.0
        %3396 = vmatprep.subr.mxu0 0.0
        %3397 = vmatpush1.msra.mxu0 0.0
        %3398 = vmatprep.subr.mxu0 0.0
        %3399 = vmatpush1.msra.mxu0 0.0
        %3400 = vmatprep.subr.mxu0 0.0
        %3401 = vmatpush1.msra.mxu0 0.0
        %3402 = vmatprep.subr.mxu0 0.0
        %3403 = vmatpush1.msra.mxu0 0.0
        %3404 = vmatprep.subr.mxu0 0.0
        %3405 = vmatpush1.msra.mxu0 0.0
        %3406 = vmatprep.subr.mxu0 0.0
        %3407 = vmatpush1.msra.mxu0 0.0
        %3408 = vmatprep.mubr.f32.mxu0 0.0
        %3409 = vmatmul.mubr.f32.gmra.mrb[0].mxu0 %v2292
        %v3410 = vpop.f32.mrb[0].mxu0
        %v3411 = vadd.f32 0.0, %v3410
        %v3412 = vpop.f32.mrb[0].mxu0
        %3413 = vmatprep.mubr.f32.mxu0 0.0
        %3414 = vmatmul.mubr.f32.gmra.mrb[0].mxu0 %v2295
        %v3415 = vpop.f32.mrb[0].mxu0
        %v3416 = vadd.f32 0.0, %v3415
        %v3417 = vpop.f32.mrb[0].mxu0
        %3418 = vdwg.mxu0
        %s3419 = scalar_lea.vmem [#allocation20], 96
        %v3420 = vld [vmem:[%s3419] sm:$0xff]
        %v3421 = vld [vmem:[%s3419 + $0x8] sm:$0xff]
        %v3422 = vld [vmem:[%s3419 + $0x10] sm:$0xff]
        %v3423 = vld [vmem:[%s3419 + $0x18] sm:$0xff]
        %3424 = vmatprep.subr.mxu0 0.0
        %3425 = vmatpush1.msra.mxu0 %v3420
        %3426 = vmatprep.subr.mxu0 0.0
        %3427 = vmatpush1.msra.mxu0 %v3421
        %3428 = vmatprep.subr.mxu0 0.0
        %3429 = vmatpush1.msra.mxu0 %v3422
        %3430 = vmatprep.subr.mxu0 0.0
        %3431 = vmatpush1.msra.mxu0 %v3423
        %3432 = vmatprep.subr.mxu0 0.0
        %3433 = vmatpush1.msra.mxu0 0.0
        %3434 = vmatprep.subr.mxu0 0.0
        %3435 = vmatpush1.msra.mxu0 0.0
        %3436 = vmatprep.subr.mxu0 0.0
        %3437 = vmatpush1.msra.mxu0 0.0
        %3438 = vmatprep.subr.mxu0 0.0
        %3439 = vmatpush1.msra.mxu0 0.0
        %3440 = vmatprep.subr.mxu0 0.0
        %3441 = vmatpush1.msra.mxu0 0.0
        %3442 = vmatprep.subr.mxu0 0.0
        %3443 = vmatpush1.msra.mxu0 0.0
        %3444 = vmatprep.subr.mxu0 0.0
        %3445 = vmatpush1.msra.mxu0 0.0
        %3446 = vmatprep.subr.mxu0 0.0
        %3447 = vmatpush1.msra.mxu0 0.0
        %3448 = vmatprep.subr.mxu0 0.0
        %3449 = vmatpush1.msra.mxu0 0.0
        %3450 = vmatprep.subr.mxu0 0.0
        %3451 = vmatpush1.msra.mxu0 0.0
        %3452 = vmatprep.subr.mxu0 0.0
        %3453 = vmatpush1.msra.mxu0 0.0
        %3454 = vmatprep.subr.mxu0 0.0
        %3455 = vmatpush1.msra.mxu0 0.0
        %3456 = vmatprep.subr.mxu0 0.0
        %3457 = vmatpush1.msra.mxu0 0.0
        %3458 = vmatprep.subr.mxu0 0.0
        %3459 = vmatpush1.msra.mxu0 0.0
        %3460 = vmatprep.subr.mxu0 0.0
        %3461 = vmatpush1.msra.mxu0 0.0
        %3462 = vmatprep.subr.mxu0 0.0
        %3463 = vmatpush1.msra.mxu0 0.0
        %3464 = vmatprep.subr.mxu0 0.0
        %3465 = vmatpush1.msra.mxu0 0.0
        %3466 = vmatprep.subr.mxu0 0.0
        %3467 = vmatpush1.msra.mxu0 0.0
        %3468 = vmatprep.subr.mxu0 0.0
        %3469 = vmatpush1.msra.mxu0 0.0
        %3470 = vmatprep.subr.mxu0 0.0
        %3471 = vmatpush1.msra.mxu0 0.0
        %3472 = vmatprep.subr.mxu0 0.0
        %3473 = vmatpush1.msra.mxu0 0.0
        %3474 = vmatprep.subr.mxu0 0.0
        %3475 = vmatpush1.msra.mxu0 0.0
        %3476 = vmatprep.subr.mxu0 0.0
        %3477 = vmatpush1.msra.mxu0 0.0
        %3478 = vmatprep.subr.mxu0 0.0
        %3479 = vmatpush1.msra.mxu0 0.0
        %3480 = vmatprep.subr.mxu0 0.0
        %3481 = vmatpush1.msra.mxu0 0.0
        %3482 = vmatprep.subr.mxu0 0.0
        %3483 = vmatpush1.msra.mxu0 0.0
        %3484 = vmatprep.subr.mxu0 0.0
        %3485 = vmatpush1.msra.mxu0 0.0
        %3486 = vmatprep.subr.mxu0 0.0
        %3487 = vmatpush1.msra.mxu0 0.0
        %3488 = vmatprep.mubr.f32.mxu0 0.0
        %3489 = vmatmul.mubr.f32.gmra.mrb[0].mxu0 %v2292
        %v3490 = vpop.f32.mrb[0].mxu0
        %v3491 = vadd.f32 0.0, %v3490
        %v3492 = vpop.f32.mrb[0].mxu0
        %3493 = vmatprep.mubr.f32.mxu0 0.0
        %3494 = vmatmul.mubr.f32.gmra.mrb[0].mxu0 %v2295
        %v3495 = vpop.f32.mrb[0].mxu0
        %v3496 = vadd.f32 0.0, %v3495
        %v3497 = vpop.f32.mrb[0].mxu0
        %3498 = vdwg.mxu0
        %s3499 = scalar_lea.vmem [#allocation2], 24
        %v3500 = vld [vmem:[%s3499] sm:$0xff]
        %v3502 = vsel %vm2452, %v3500, 0
        %v3505 = vsel %vm2452, %v3411, 0
        %v3508 = vsel %vm2452, %v3416, 0
        %3510 = vmatprep.subr.mxu0 0.0
        %3511 = vmatpush1.xpose.msra.mxu0 %v3505
        %3512 = vmatprep.subr.mxu0 0.0
        %3513 = vmatpush1.xpose.msra.mxu0 %v3508
        %3514 = vmatprep.subr.mxu0 0.0
        %3515 = vmatpush1.xpose.msra.mxu0 0.0
        %3516 = vmatprep.subr.mxu0 0.0
        %3517 = vmatpush1.xpose.msra.mxu0 0.0
        %3518 = vmatprep.subr.mxu0 0.0
        %3519 = vmatpush1.xpose.msra.mxu0 0.0
        %3520 = vmatprep.subr.mxu0 0.0
        %3521 = vmatpush1.xpose.msra.mxu0 0.0
        %3522 = vmatprep.subr.mxu0 0.0
        %3523 = vmatpush1.xpose.msra.mxu0 0.0
        %3524 = vmatprep.subr.mxu0 0.0
        %3525 = vmatpush1.xpose.msra.mxu0 0.0
        %3526 = vmatprep.subr.mxu0 0.0
        %3527 = vmatpush1.xpose.msra.mxu0 0.0
        %3528 = vmatprep.subr.mxu0 0.0
        %3529 = vmatpush1.xpose.msra.mxu0 0.0
        %3530 = vmatprep.subr.mxu0 0.0
        %3531 = vmatpush1.xpose.msra.mxu0 0.0
        %3532 = vmatprep.subr.mxu0 0.0
        %3533 = vmatpush1.xpose.msra.mxu0 0.0
        %3534 = vmatprep.subr.mxu0 0.0
        %3535 = vmatpush1.xpose.msra.mxu0 0.0
        %3536 = vmatprep.subr.mxu0 0.0
        %3537 = vmatpush1.xpose.msra.mxu0 0.0
        %3538 = vmatprep.subr.mxu0 0.0
        %3539 = vmatpush1.xpose.msra.mxu0 0.0
        %3540 = vmatprep.subr.mxu0 0.0
        %3541 = vmatpush1.xpose.msra.mxu0 0.0
        %3542 = vmatprep.subr.mxu0 0.0
        %3543 = vmatpush1.xpose.msra.mxu0 0.0
        %3544 = vmatprep.subr.mxu0 0.0
        %3545 = vmatpush1.xpose.msra.mxu0 0.0
        %3546 = vmatprep.subr.mxu0 0.0
        %3547 = vmatpush1.xpose.msra.mxu0 0.0
        %3548 = vmatprep.subr.mxu0 0.0
        %3549 = vmatpush1.xpose.msra.mxu0 0.0
        %3550 = vmatprep.subr.mxu0 0.0
        %3551 = vmatpush1.xpose.msra.mxu0 0.0
        %3552 = vmatprep.subr.mxu0 0.0
        %3553 = vmatpush1.xpose.msra.mxu0 0.0
        %3554 = vmatprep.subr.mxu0 0.0
        %3555 = vmatpush1.xpose.msra.mxu0 0.0
        %3556 = vmatprep.subr.mxu0 0.0
        %3557 = vmatpush1.xpose.msra.mxu0 0.0
        %3558 = vmatprep.subr.mxu0 0.0
        %3559 = vmatpush1.xpose.msra.mxu0 0.0
        %3560 = vmatprep.subr.mxu0 0.0
        %3561 = vmatpush1.xpose.msra.mxu0 0.0
        %3562 = vmatprep.subr.mxu0 0.0
        %3563 = vmatpush1.xpose.msra.mxu0 0.0
        %3564 = vmatprep.subr.mxu0 0.0
        %3565 = vmatpush1.xpose.msra.mxu0 0.0
        %3566 = vmatprep.subr.mxu0 0.0
        %3567 = vmatpush1.xpose.msra.mxu0 0.0
        %3568 = vmatprep.subr.mxu0 0.0
        %3569 = vmatpush1.xpose.msra.mxu0 0.0
        %3570 = vmatprep.subr.mxu0 0.0
        %3571 = vmatpush1.xpose.msra.mxu0 0.0
        %3572 = vmatprep.subr.mxu0 0.0
        %3573 = vmatpush1.xpose.msra.mxu0 0.0
        %3574 = vmatprep.mubr.f32.mxu0 0.0
        %3575 = vmatmul.mubr.f32.gmra.mrb[0].mxu0 %v3502
        %v3576 = vpop.f32.mrb[0].mxu0
        %v3577 = vadd.f32 0.0, %v3576
        %v3578 = vpop.f32.mrb[0].mxu0
        %3579 = vdwg.mxu0
        %s3580 = scalar_lea.vmem [#allocation3], 24
        %v3581 = vld [vmem:[%s3580] sm:$0xff]
        %v3582 = vsel %vm2452, %v3577, -inf
        %3583 = vmax.xlane.f32.xlu0 %v3582
        %v3584 = vpop.xlane.xlu0 %3583
        %v3585 = vmax.f32 %v3581, %v3584
        %v3586 = vsub.f32 %v3581, %v3585
        %v3587 = vmul.f32 %v3586, 1.442695
        %v3588 = vpow.pop %v3587
        %3590 = vset.pattern.permute.xlu0 0
        %3591 = vperm.xlu0 %3590, %v3585
        %v3592 = vpop.permute.xlu0 %3591
        %v3594 = vsub.f32 %v3577, %v3592
        %v3595 = vmul.f32 %v3594, 1.442695
        %v3596 = vpow.pop %v3595
        %s3597 = scalar_lea.vmem [#allocation4], 24
        %v3598 = vld [vmem:[%s3597] sm:$0xff]
        %v3599 = vmul.f32 %v3588, %v3598
        %v3600 = vsel %vm2452, %v3596, 0.0
        %3601 = vadd.xlane.f32.xlu0 %v3600
        %v3602 = vpop.xlane.xlu0 %3601
        %v3603 = vadd.f32 %v3599, %v3602
        %3604 = vst.msk [vmem:[%s3597] sm:$0xff] %vm2554, %v3603
        %s3605 = scalar_lea.vmem [#allocation5], 24
        %v3606 = vld [vmem:[%s3605] sm:$0xff]
        %3608 = vset.pattern.permute.xlu0 0
        %3609 = vperm.xlu0 %3608, %v3588
        %v3610 = vpop.permute.xlu0 %3609
        %v3612 = vmul.f32 %v3610, %v3606
        %v3614 = vsel %vm2452, %v3596, 0
        %3616 = vmatprep.subr.mxu0 0.0
        %3617 = vmatpush1.msra.mxu0 %v3491
        %3618 = vmatprep.subr.mxu0 0.0
        %3619 = vmatpush1.msra.mxu0 %v3496
        %3620 = vmatprep.subr.mxu0 0.0
        %3621 = vmatpush1.msra.mxu0 0.0
        %3622 = vmatprep.subr.mxu0 0.0
        %3623 = vmatpush1.msra.mxu0 0.0
        %3624 = vmatprep.subr.mxu0 0.0
        %3625 = vmatpush1.msra.mxu0 0.0
        %3626 = vmatprep.subr.mxu0 0.0
        %3627 = vmatpush1.msra.mxu0 0.0
        %3628 = vmatprep.subr.mxu0 0.0
        %3629 = vmatpush1.msra.mxu0 0.0
        %3630 = vmatprep.subr.mxu0 0.0
        %3631 = vmatpush1.msra.mxu0 0.0
        %3632 = vmatprep.subr.mxu0 0.0
        %3633 = vmatpush1.msra.mxu0 0.0
        %3634 = vmatprep.subr.mxu0 0.0
        %3635 = vmatpush1.msra.mxu0 0.0
        %3636 = vmatprep.subr.mxu0 0.0
        %3637 = vmatpush1.msra.mxu0 0.0
        %3638 = vmatprep.subr.mxu0 0.0
        %3639 = vmatpush1.msra.mxu0 0.0
        %3640 = vmatprep.subr.mxu0 0.0
        %3641 = vmatpush1.msra.mxu0 0.0
        %3642 = vmatprep.subr.mxu0 0.0
        %3643 = vmatpush1.msra.mxu0 0.0
        %3644 = vmatprep.subr.mxu0 0.0
        %3645 = vmatpush1.msra.mxu0 0.0
        %3646 = vmatprep.subr.mxu0 0.0
        %3647 = vmatpush1.msra.mxu0 0.0
        %3648 = vmatprep.subr.mxu0 0.0
        %3649 = vmatpush1.msra.mxu0 0.0
        %3650 = vmatprep.subr.mxu0 0.0
        %3651 = vmatpush1.msra.mxu0 0.0
        %3652 = vmatprep.subr.mxu0 0.0
        %3653 = vmatpush1.msra.mxu0 0.0
        %3654 = vmatprep.subr.mxu0 0.0
        %3655 = vmatpush1.msra.mxu0 0.0
        %3656 = vmatprep.subr.mxu0 0.0
        %3657 = vmatpush1.msra.mxu0 0.0
        %3658 = vmatprep.subr.mxu0 0.0
        %3659 = vmatpush1.msra.mxu0 0.0
        %3660 = vmatprep.subr.mxu0 0.0
        %3661 = vmatpush1.msra.mxu0 0.0
        %3662 = vmatprep.subr.mxu0 0.0
        %3663 = vmatpush1.msra.mxu0 0.0
        %3664 = vmatprep.subr.mxu0 0.0
        %3665 = vmatpush1.msra.mxu0 0.0
        %3666 = vmatprep.subr.mxu0 0.0
        %3667 = vmatpush1.msra.mxu0 0.0
        %3668 = vmatprep.subr.mxu0 0.0
        %3669 = vmatpush1.msra.mxu0 0.0
        %3670 = vmatprep.subr.mxu0 0.0
        %3671 = vmatpush1.msra.mxu0 0.0
        %3672 = vmatprep.subr.mxu0 0.0
        %3673 = vmatpush1.msra.mxu0 0.0
        %3674 = vmatprep.subr.mxu0 0.0
        %3675 = vmatpush1.msra.mxu0 0.0
        %3676 = vmatprep.subr.mxu0 0.0
        %3677 = vmatpush1.msra.mxu0 0.0
        %3678 = vmatprep.subr.mxu0 0.0
        %3679 = vmatpush1.msra.mxu0 0.0
        %3680 = vmatprep.mubr.f32.mxu0 0.0
        %3681 = vmatmul.mubr.f32.gmra.mrb[0].mxu0 %v3614
        %v3682 = vpop.f32.mrb[0].mxu0
        %v3683 = vadd.f32 0.0, %v3682
        %v3684 = vpop.f32.mrb[0].mxu0
        %3685 = vdwg.mxu0
        %v3686 = vadd.f32 %v3612, %v3683
        %3687 = vst.msk [vmem:[%s3605] sm:$0xff] %vm2452, %v3686
        %3688 = vst.msk [vmem:[%s3580] sm:$0xff] %vm2554, %v3585
        // Predicated region
        $region105: #{tpu_custom_call.1} parent=59 // pred_check
          %p3689 = pneg %p540
        $region106: #{tpu_custom_call.1} parent=59 // pred_check_branch
          %3691 = sbr.rel (%p3689) target = $region108
        $region107: #{tpu_custom_call.1} parent=59 // pred_region
          %v3692 = vld [vmem:[#allocation4] sm:$0xff]
          %v3693 = vrcp.pop %v3692
          %v3694 = vld [vmem:[#allocation5] sm:$0xff]
          %3696 = vset.pattern.permute.xlu0 0
          %3697 = vperm.xlu0 %3696, %v3693
          %v3698 = vpop.permute.xlu0 %3697
          %v3700 = vmul.f32 %v3694, %v3698
          %v3701 = vld [vmem:[#allocation21] sm:$0xff]
          %v3702 = vld [vmem:[#allocation21 + $0x8] sm:$0xff]
          %v3703 = vld [vmem:[%s2897] sm:$0xff]
          %v3704 = vrcp.pop %v3703
          %v3705 = vld [vmem:[%s2905] sm:$0xff]
          %3707 = vset.pattern.permute.xlu0 0
          %3708 = vperm.xlu0 %3707, %v3704
          %v3709 = vpop.permute.xlu0 %3708
          %v3711 = vmul.f32 %v3705, %v3709
          %s3712 = scalar_lea.vmem [#allocation21], 16
          %v3713 = vld [vmem:[%s3712] sm:$0xff]
          %v3714 = vld [vmem:[%s3712 + $0x8] sm:$0xff]
          %v3716 = vsel %vm2452, %v3711, 0
          %3718 = vmatprep.subr.mxu0 0.0
          %3719 = vmatpush1.msra.mxu0 %v3713
          %3720 = vmatprep.subr.mxu0 0.0
          %3721 = vmatpush1.msra.mxu0 %v3714
          %3722 = vmatprep.subr.mxu0 0.0
          %3723 = vmatpush1.msra.mxu0 0.0
          %3724 = vmatprep.subr.mxu0 0.0
          %3725 = vmatpush1.msra.mxu0 0.0
          %3726 = vmatprep.subr.mxu0 0.0
          %3727 = vmatpush1.msra.mxu0 0.0
          %3728 = vmatprep.subr.mxu0 0.0
          %3729 = vmatpush1.msra.mxu0 0.0
          %3730 = vmatprep.subr.mxu0 0.0
          %3731 = vmatpush1.msra.mxu0 0.0
          %3732 = vmatprep.subr.mxu0 0.0
          %3733 = vmatpush1.msra.mxu0 0.0
          %3734 = vmatprep.subr.mxu0 0.0
          %3735 = vmatpush1.msra.mxu0 0.0
          %3736 = vmatprep.subr.mxu0 0.0
          %3737 = vmatpush1.msra.mxu0 0.0
          %3738 = vmatprep.subr.mxu0 0.0
          %3739 = vmatpush1.msra.mxu0 0.0
          %3740 = vmatprep.subr.mxu0 0.0
          %3741 = vmatpush1.msra.mxu0 0.0
          %3742 = vmatprep.subr.mxu0 0.0
          %3743 = vmatpush1.msra.mxu0 0.0
          %3744 = vmatprep.subr.mxu0 0.0
          %3745 = vmatpush1.msra.mxu0 0.0
          %3746 = vmatprep.subr.mxu0 0.0
          %3747 = vmatpush1.msra.mxu0 0.0
          %3748 = vmatprep.subr.mxu0 0.0
          %3749 = vmatpush1.msra.mxu0 0.0
          %3750 = vmatprep.subr.mxu0 0.0
          %3751 = vmatpush1.msra.mxu0 0.0
          %3752 = vmatprep.subr.mxu0 0.0
          %3753 = vmatpush1.msra.mxu0 0.0
          %3754 = vmatprep.subr.mxu0 0.0
          %3755 = vmatpush1.msra.mxu0 0.0
          %3756 = vmatprep.subr.mxu0 0.0
          %3757 = vmatpush1.msra.mxu0 0.0
          %3758 = vmatprep.subr.mxu0 0.0
          %3759 = vmatpush1.msra.mxu0 0.0
          %3760 = vmatprep.subr.mxu0 0.0
          %3761 = vmatpush1.msra.mxu0 0.0
          %3762 = vmatprep.subr.mxu0 0.0
          %3763 = vmatpush1.msra.mxu0 0.0
          %3764 = vmatprep.subr.mxu0 0.0
          %3765 = vmatpush1.msra.mxu0 0.0
          %3766 = vmatprep.subr.mxu0 0.0
          %3767 = vmatpush1.msra.mxu0 0.0
          %3768 = vmatprep.subr.mxu0 0.0
          %3769 = vmatpush1.msra.mxu0 0.0
          %3770 = vmatprep.subr.mxu0 0.0
          %3771 = vmatpush1.msra.mxu0 0.0
          %3772 = vmatprep.subr.mxu0 0.0
          %3773 = vmatpush1.msra.mxu0 0.0
          %3774 = vmatprep.subr.mxu0 0.0
          %3775 = vmatpush1.msra.mxu0 0.0
          %3776 = vmatprep.subr.mxu0 0.0
          %3777 = vmatpush1.msra.mxu0 0.0
          %3778 = vmatprep.subr.mxu0 0.0
          %3779 = vmatpush1.msra.mxu0 0.0
          %3780 = vmatprep.subr.mxu0 0.0
          %3781 = vmatpush1.msra.mxu0 0.0
          %3782 = vmatprep.mubr.f32.mxu0 0.0
          %3783 = vmatmul.mubr.f32.gmra.mrb[0].mxu0 %v3716
          %v3784 = vpop.f32.mrb[0].mxu0
          %v3785 = vadd.f32 0.0, %v3784
          %v3786 = vpop.f32.mrb[0].mxu0
          %3787 = vdwg.mxu0
          %v3789 = vsel %vm2452, %v3700, 0
          %3791 = vmatprep.subr.mxu0 0.0
          %3792 = vmatpush1.msra.mxu0 %v3701
          %3793 = vmatprep.subr.mxu0 0.0
          %3794 = vmatpush1.msra.mxu0 %v3702
          %3795 = vmatprep.subr.mxu0 0.0
          %3796 = vmatpush1.msra.mxu0 0.0
          %3797 = vmatprep.subr.mxu0 0.0
          %3798 = vmatpush1.msra.mxu0 0.0
          %3799 = vmatprep.subr.mxu0 0.0
          %3800 = vmatpush1.msra.mxu0 0.0
          %3801 = vmatprep.subr.mxu0 0.0
          %3802 = vmatpush1.msra.mxu0 0.0
          %3803 = vmatprep.subr.mxu0 0.0
          %3804 = vmatpush1.msra.mxu0 0.0
          %3805 = vmatprep.subr.mxu0 0.0
          %3806 = vmatpush1.msra.mxu0 0.0
          %3807 = vmatprep.subr.mxu0 0.0
          %3808 = vmatpush1.msra.mxu0 0.0
          %3809 = vmatprep.subr.mxu0 0.0
          %3810 = vmatpush1.msra.mxu0 0.0
          %3811 = vmatprep.subr.mxu0 0.0
          %3812 = vmatpush1.msra.mxu0 0.0
          %3813 = vmatprep.subr.mxu0 0.0
          %3814 = vmatpush1.msra.mxu0 0.0
          %3815 = vmatprep.subr.mxu0 0.0
          %3816 = vmatpush1.msra.mxu0 0.0
          %3817 = vmatprep.subr.mxu0 0.0
          %3818 = vmatpush1.msra.mxu0 0.0
          %3819 = vmatprep.subr.mxu0 0.0
          %3820 = vmatpush1.msra.mxu0 0.0
          %3821 = vmatprep.subr.mxu0 0.0
          %3822 = vmatpush1.msra.mxu0 0.0
          %3823 = vmatprep.subr.mxu0 0.0
          %3824 = vmatpush1.msra.mxu0 0.0
          %3825 = vmatprep.subr.mxu0 0.0
          %3826 = vmatpush1.msra.mxu0 0.0
          %3827 = vmatprep.subr.mxu0 0.0
          %3828 = vmatpush1.msra.mxu0 0.0
          %3829 = vmatprep.subr.mxu0 0.0
          %3830 = vmatpush1.msra.mxu0 0.0
          %3831 = vmatprep.subr.mxu0 0.0
          %3832 = vmatpush1.msra.mxu0 0.0
          %3833 = vmatprep.subr.mxu0 0.0
          %3834 = vmatpush1.msra.mxu0 0.0
          %3835 = vmatprep.subr.mxu0 0.0
          %3836 = vmatpush1.msra.mxu0 0.0
          %3837 = vmatprep.subr.mxu0 0.0
          %3838 = vmatpush1.msra.mxu0 0.0
          %3839 = vmatprep.subr.mxu0 0.0
          %3840 = vmatpush1.msra.mxu0 0.0
          %3841 = vmatprep.subr.mxu0 0.0
          %3842 = vmatpush1.msra.mxu0 0.0
          %3843 = vmatprep.subr.mxu0 0.0
          %3844 = vmatpush1.msra.mxu0 0.0
          %3845 = vmatprep.subr.mxu0 0.0
          %3846 = vmatpush1.msra.mxu0 0.0
          %3847 = vmatprep.subr.mxu0 0.0
          %3848 = vmatpush1.msra.mxu0 0.0
          %3849 = vmatprep.subr.mxu0 0.0
          %3850 = vmatpush1.msra.mxu0 0.0
          %3851 = vmatprep.subr.mxu0 0.0
          %3852 = vmatpush1.msra.mxu0 0.0
          %3853 = vmatprep.subr.mxu0 0.0
          %3854 = vmatpush1.msra.mxu0 0.0
          %3855 = vmatprep.mubr.f32.mxu0 0.0
          %3856 = vmatmul.mubr.f32.gmra.mrb[0].mxu0 %v3789
          %v3857 = vpop.f32.mrb[0].mxu0
          %v3858 = vadd.f32 %v3785, %v3857
          %v3859 = vpop.f32.mrb[0].mxu0
          %3860 = vdwg.mxu0
          %v3861 = vld [vmem:[%s3247] sm:$0xff]
          %v3862 = vrcp.pop %v3861
          %v3863 = vld [vmem:[%s3255] sm:$0xff]
          %3865 = vset.pattern.permute.xlu0 0
          %3866 = vperm.xlu0 %3865, %v3862
          %v3867 = vpop.permute.xlu0 %3866
          %v3869 = vmul.f32 %v3863, %v3867
          %s3870 = scalar_lea.vmem [#allocation21], 32
          %v3871 = vld [vmem:[%s3870] sm:$0xff]
          %v3872 = vld [vmem:[%s3870 + $0x8] sm:$0xff]
          %v3874 = vsel %vm2452, %v3869, 0
          %3876 = vmatprep.subr.mxu0 0.0
          %3877 = vmatpush1.msra.mxu0 %v3871
          %3878 = vmatprep.subr.mxu0 0.0
          %3879 = vmatpush1.msra.mxu0 %v3872
          %3880 = vmatprep.subr.mxu0 0.0
          %3881 = vmatpush1.msra.mxu0 0.0
          %3882 = vmatprep.subr.mxu0 0.0
          %3883 = vmatpush1.msra.mxu0 0.0
          %3884 = vmatprep.subr.mxu0 0.0
          %3885 = vmatpush1.msra.mxu0 0.0
          %3886 = vmatprep.subr.mxu0 0.0
          %3887 = vmatpush1.msra.mxu0 0.0
          %3888 = vmatprep.subr.mxu0 0.0
          %3889 = vmatpush1.msra.mxu0 0.0
          %3890 = vmatprep.subr.mxu0 0.0
          %3891 = vmatpush1.msra.mxu0 0.0
          %3892 = vmatprep.subr.mxu0 0.0
          %3893 = vmatpush1.msra.mxu0 0.0
          %3894 = vmatprep.subr.mxu0 0.0
          %3895 = vmatpush1.msra.mxu0 0.0
          %3896 = vmatprep.subr.mxu0 0.0
          %3897 = vmatpush1.msra.mxu0 0.0
          %3898 = vmatprep.subr.mxu0 0.0
          %3899 = vmatpush1.msra.mxu0 0.0
          %3900 = vmatprep.subr.mxu0 0.0
          %3901 = vmatpush1.msra.mxu0 0.0
          %3902 = vmatprep.subr.mxu0 0.0
          %3903 = vmatpush1.msra.mxu0 0.0
          %3904 = vmatprep.subr.mxu0 0.0
          %3905 = vmatpush1.msra.mxu0 0.0
          %3906 = vmatprep.subr.mxu0 0.0
          %3907 = vmatpush1.msra.mxu0 0.0
          %3908 = vmatprep.subr.mxu0 0.0
          %3909 = vmatpush1.msra.mxu0 0.0
          %3910 = vmatprep.subr.mxu0 0.0
          %3911 = vmatpush1.msra.mxu0 0.0
          %3912 = vmatprep.subr.mxu0 0.0
          %3913 = vmatpush1.msra.mxu0 0.0
          %3914 = vmatprep.subr.mxu0 0.0
          %3915 = vmatpush1.msra.mxu0 0.0
          %3916 = vmatprep.subr.mxu0 0.0
          %3917 = vmatpush1.msra.mxu0 0.0
          %3918 = vmatprep.subr.mxu0 0.0
          %3919 = vmatpush1.msra.mxu0 0.0
          %3920 = vmatprep.subr.mxu0 0.0
          %3921 = vmatpush1.msra.mxu0 0.0
          %3922 = vmatprep.subr.mxu0 0.0
          %3923 = vmatpush1.msra.mxu0 0.0
          %3924 = vmatprep.subr.mxu0 0.0
          %3925 = vmatpush1.msra.mxu0 0.0
          %3926 = vmatprep.subr.mxu0 0.0
          %3927 = vmatpush1.msra.mxu0 0.0
          %3928 = vmatprep.subr.mxu0 0.0
          %3929 = vmatpush1.msra.mxu0 0.0
          %3930 = vmatprep.subr.mxu0 0.0
          %3931 = vmatpush1.msra.mxu0 0.0
          %3932 = vmatprep.subr.mxu0 0.0
          %3933 = vmatpush1.msra.mxu0 0.0
          %3934 = vmatprep.subr.mxu0 0.0
          %3935 = vmatpush1.msra.mxu0 0.0
          %3936 = vmatprep.subr.mxu0 0.0
          %3937 = vmatpush1.msra.mxu0 0.0
          %3938 = vmatprep.subr.mxu0 0.0
          %3939 = vmatpush1.msra.mxu0 0.0
          %3940 = vmatprep.mubr.f32.mxu0 0.0
          %3941 = vmatmul.mubr.f32.gmra.mrb[0].mxu0 %v3874
          %v3942 = vpop.f32.mrb[0].mxu0
          %v3943 = vadd.f32 0.0, %v3942
          %v3944 = vpop.f32.mrb[0].mxu0
          %3945 = vdwg.mxu0
          %v3946 = vadd.f32 %v3858, %v3943
          %v3947 = vld [vmem:[%s3597] sm:$0xff]
          %v3948 = vrcp.pop %v3947
          %v3949 = vld [vmem:[%s3605] sm:$0xff]
          %3951 = vset.pattern.permute.xlu0 0
          %3952 = vperm.xlu0 %3951, %v3948
          %v3953 = vpop.permute.xlu0 %3952
          %v3955 = vmul.f32 %v3949, %v3953
          %s3956 = scalar_lea.vmem [#allocation21], 48
          %v3957 = vld [vmem:[%s3956] sm:$0xff]
          %v3958 = vld [vmem:[%s3956 + $0x8] sm:$0xff]
          %v3960 = vsel %vm2452, %v3955, 0
          %3962 = vmatprep.subr.mxu0 0.0
          %3963 = vmatpush1.msra.mxu0 %v3957
          %3964 = vmatprep.subr.mxu0 0.0
          %3965 = vmatpush1.msra.mxu0 %v3958
          %3966 = vmatprep.subr.mxu0 0.0
          %3967 = vmatpush1.msra.mxu0 0.0
          %3968 = vmatprep.subr.mxu0 0.0
          %3969 = vmatpush1.msra.mxu0 0.0
          %3970 = vmatprep.subr.mxu0 0.0
          %3971 = vmatpush1.msra.mxu0 0.0
          %3972 = vmatprep.subr.mxu0 0.0
          %3973 = vmatpush1.msra.mxu0 0.0
          %3974 = vmatprep.subr.mxu0 0.0
          %3975 = vmatpush1.msra.mxu0 0.0
          %3976 = vmatprep.subr.mxu0 0.0
          %3977 = vmatpush1.msra.mxu0 0.0
          %3978 = vmatprep.subr.mxu0 0.0
          %3979 = vmatpush1.msra.mxu0 0.0
          %3980 = vmatprep.subr.mxu0 0.0
          %3981 = vmatpush1.msra.mxu0 0.0
          %3982 = vmatprep.subr.mxu0 0.0
          %3983 = vmatpush1.msra.mxu0 0.0
          %3984 = vmatprep.subr.mxu0 0.0
          %3985 = vmatpush1.msra.mxu0 0.0
          %3986 = vmatprep.subr.mxu0 0.0
          %3987 = vmatpush1.msra.mxu0 0.0
          %3988 = vmatprep.subr.mxu0 0.0
          %3989 = vmatpush1.msra.mxu0 0.0
          %3990 = vmatprep.subr.mxu0 0.0
          %3991 = vmatpush1.msra.mxu0 0.0
          %3992 = vmatprep.subr.mxu0 0.0
          %3993 = vmatpush1.msra.mxu0 0.0
          %3994 = vmatprep.subr.mxu0 0.0
          %3995 = vmatpush1.msra.mxu0 0.0
          %3996 = vmatprep.subr.mxu0 0.0
          %3997 = vmatpush1.msra.mxu0 0.0
          %3998 = vmatprep.subr.mxu0 0.0
          %3999 = vmatpush1.msra.mxu0 0.0
          %4000 = vmatprep.subr.mxu0 0.0
          %4001 = vmatpush1.msra.mxu0 0.0
          %4002 = vmatprep.subr.mxu0 0.0
          %4003 = vmatpush1.msra.mxu0 0.0
          %4004 = vmatprep.subr.mxu0 0.0
          %4005 = vmatpush1.msra.mxu0 0.0
          %4006 = vmatprep.subr.mxu0 0.0
          %4007 = vmatpush1.msra.mxu0 0.0
          %4008 = vmatprep.subr.mxu0 0.0
          %4009 = vmatpush1.msra.mxu0 0.0
          %4010 = vmatprep.subr.mxu0 0.0
          %4011 = vmatpush1.msra.mxu0 0.0
          %4012 = vmatprep.subr.mxu0 0.0
          %4013 = vmatpush1.msra.mxu0 0.0
          %4014 = vmatprep.subr.mxu0 0.0
          %4015 = vmatpush1.msra.mxu0 0.0
          %4016 = vmatprep.subr.mxu0 0.0
          %4017 = vmatpush1.msra.mxu0 0.0
          %4018 = vmatprep.subr.mxu0 0.0
          %4019 = vmatpush1.msra.mxu0 0.0
          %4020 = vmatprep.subr.mxu0 0.0
          %4021 = vmatpush1.msra.mxu0 0.0
          %4022 = vmatprep.subr.mxu0 0.0
          %4023 = vmatpush1.msra.mxu0 0.0
          %4024 = vmatprep.subr.mxu0 0.0
          %4025 = vmatpush1.msra.mxu0 0.0
          %4026 = vmatprep.mubr.f32.mxu0 0.0
          %4027 = vmatmul.mubr.f32.gmra.mrb[0].mxu0 %v3960
          %v4028 = vpop.f32.mrb[0].mxu0
          %v4029 = vadd.f32 0.0, %v4028
          %v4030 = vpop.f32.mrb[0].mxu0
          %4031 = vdwg.mxu0
          %v4032 = vadd.f32 %v3946, %v4029
          %4033 = vst.msk [vmem:[%s538] sm:$0xff] %vm2243, %v4032
        $region108: #{tpu_custom_call.1} parent=59 // pred_fallthru
          _
        %s4034 = sand.u32 %s276, 1
        %s4035 = scalar_lea.sflag [#allocation8], %s4034
        %s4036 = sand.u32 %s276, 1
        %s4037 = smul.addr %s4036, 8
        %s4038 = scalar_lea.vmem [#allocation23], %s4037
        // Predicated region
        $region109: #{tpu_custom_call.1} parent=59 // pred_check
          %p4039 = pneg %p286
        $region110: #{tpu_custom_call.1} parent=59 // pred_check_branch
          %4041 = sbr.rel (%p4039) target = $region112
        $region111: #{tpu_custom_call.1} parent=59 // pred_region
          %s4043 = ssub.s32 128, 128
          %4044 = vsyncadd %s4035, %s4043
          %s4045 = smul.addr %s38, 128
          %s4046 = scalar_lea.hbm %s10, %s4045
          %s4048 = sshll.u32 %s4038, 4
          %s4049 = int_to_ptr.vmem [resolvable:$true] %s4048
          %4051 = dma.vmem_to_hbm [thread:$0]  %s4049, 128, %s4046, %s4035
        $region112: #{tpu_custom_call.1} parent=59 // pred_fallthru
          _
      $region60: #{tpu_custom_call.1} parent=5 // pred_fallthru
        _
      %p4052 = scmp.le.s32.totalorder 2, %s29
      // Predicated region
      $region113: #{tpu_custom_call.1} parent=5 // pred_check
        %p4053 = pneg %p4052
      $region114: #{tpu_custom_call.1} parent=5 // pred_check_branch
        %4055 = sbr.rel (%p4053) target = $region116
      $region115: #{tpu_custom_call.1} parent=5 // pred_region
        %s4056 = ssub.s32 %s29, 2
        // Predicated region
        $region117: #{tpu_custom_call.1} parent=115 // pred_check
          %p4057 = pneg %p292
        $region118: #{tpu_custom_call.1} parent=115 // pred_check_branch
          %4059 = sbr.rel (%p4057) target = $region120
        $region119: #{tpu_custom_call.1} parent=115 // pred_region
          %s4060 = sand.u32 %s277, 1
          %s4061 = scalar_lea.sflag [#allocation8], %s4060
          %s4062 = sand.u32 %s277, 1
          %s4063 = smul.addr %s4062, 8
          %s4064 = scalar_lea.vmem [#allocation23], %s4063
          %4065 = dma.done %s4061, 128
        $region120: #{tpu_custom_call.1} parent=115 // pred_fallthru
          _
      $region116: #{tpu_custom_call.1} parent=5 // pred_fallthru
        _
    $region6: #{tpu_custom_call.1} parent=1 // loop_footer
      %s33 = sadd.s32 1, %s29
    $region7: #{tpu_custom_call.1} parent=1 // loop_footer_branch
      %28 = sbr.rel target = $region3
    $region8: #{tpu_custom_call.1} parent=1 // loop_exit
      _
    %4066 = vsyncpa [#allocation7], 1
    %s4067 = scalar_lea.sflag [#allocation7], 1
    %4068 = vsyncpa %s4067, 1
    %4069 = vsyncpa [#allocation10], 1
    %s4070 = scalar_lea.sflag [#allocation10], 1
    %4071 = vsyncpa %s4070, 1
    %4072 = vsyncpa [#allocation13], 1
    %4073 = vsyncpa [#allocation16], 1
    %4074 = vsyncpa [#allocation19], 1
    %4075 = vsyncpa [#allocation22], 1
    %4076 = vsyncpa [#allocation8], 1
    %s4077 = scalar_lea.sflag [#allocation8], 1
    %4078 = vsyncpa %s4077, 1

</llo_original>
